<compile_context>
chip_gen: v5e
topology: v5e:2x2
jax: 0.10.0
libtpu: 0.0.40
codegen_flags: <defaults>
</compile_context>

<pallas_src>
import jax
import jax.numpy as jnp
from jax import lax
from jax.experimental import pallas as pl
from jax.experimental.pallas import tpu as pltpu

LN_EPS = 1e-5          # torch.nn.LayerNorm default
N_OUT = 140            # head width (true output width, stored directly)
PAD = 128              # physical lane width of blocks 2/3 intermediates


def _ln_relu(h, gamma, beta, true_width):
    """LayerNorm over the first `true_width` lanes of h (rest are exact zeros),
    followed by affine (gamma/beta zero-padded) and ReLU.  All f32.

    Padded lanes come out as exact zeros, so the concatenated head input is
    safe to multiply against zero weight rows (no NaN leakage)."""
    n = h.shape[-1]
    inv = 1.0 / float(true_width)
    mean = jnp.sum(h, axis=-1, keepdims=True) * inv          # zeros don't bias the sum
    d = h - mean
    if true_width != n:
        col = lax.broadcasted_iota(jnp.int32, h.shape, 1)
        d = jnp.where(col < true_width, d, 0.0)               # mask for variance & output
    var = jnp.sum(d * d, axis=-1, keepdims=True) * inv
    y = d * lax.rsqrt(var + LN_EPS)
    return jnp.maximum(y * gamma + beta, 0.0)


def cite_kernel(x_ref,
                w1_ref, w2_ref, w3_ref,   # fused block weights (blocks 2/3 zero-padded to 128 cols)
                wh_ref,                   # packed head weight (384, 140)
                vec_ref,                  # packed biases / gamma / beta / head bias (16, 140) f32
                out_ref):
    vecs = vec_ref[...]                                       # (16, 140) f32
    b1, g1, be1 = vecs[0:1, :PAD], vecs[1:2, :PAD], vecs[2:3, :PAD]
    b2, g2, be2 = vecs[3:4, :PAD], vecs[4:5, :PAD], vecs[5:6, :PAD]
    b3, g3, be3 = vecs[6:7, :PAD], vecs[7:8, :PAD], vecs[8:9, :PAD]
    bh = vecs[9:10, :]                                        # (1, 140)

    mm = w1_ref.dtype                                         # f32 or bf16 (MXU input dtype)

    # Block 1: (TB, F) @ (F, 128)
    h1 = jnp.dot(x_ref[...], w1_ref[...], preferred_element_type=jnp.float32) + b1
    x128 = _ln_relu(h1, g1, be1, 128)                         # (TB, 128)

    # Block 2 at padded width 128 (true width 32; lanes 32: are exact zeros)
    h2 = jnp.dot(x128.astype(mm), w2_ref[...], preferred_element_type=jnp.float32) + b2
    x32w = _ln_relu(h2, g2, be2, 32)                          # (TB, 128), lanes [32:) == 0

    # Block 3 at padded width 128 (true width 8)
    h3 = jnp.dot(x32w.astype(mm), w3_ref[...], preferred_element_type=jnp.float32) + b3
    x8w = _ln_relu(h3, g3, be3, 8)                            # (TB, 128), lanes [8:) == 0

    # Single head matmul: lane-aligned concat -> (TB, 384) @ (384, 140)
    cat = jnp.concatenate([x128, x32w, x8w], axis=-1)         # all pieces 128-aligned
    out = jnp.dot(cat.astype(mm), wh_ref[...], preferred_element_type=jnp.float32) + bh
    out_ref[...] = out.astype(out_ref.dtype)                  # (TB, 140) store


def fuse_and_pack_params(p, matmul_dtype=jnp.float32):
    """Offline fusion of each Linear->Linear pair + zero padding + packing."""
    f32 = jnp.float32
    w1 = p["w1"] @ p["w2"]                       # (F, 128)
    b1 = p["b1"] @ p["w2"] + p["b2"]             # (1, 128)
    w2 = p["w3"] @ p["w4"]                       # (128, 32)
    b2 = p["b3"] @ p["w4"] + p["b4"]             # (1, 32)
    w3 = p["w5"] @ p["w6"]                       # (32, 8)
    b3 = p["b5"] @ p["w6"] + p["b6"]             # (1, 8)

    # Blocks 2/3: pad output columns (and block-3 input rows) to 128 with zeros.
    w2p = jnp.zeros((128, 128), f32).at[:, :32].set(w2)
    w3p = jnp.zeros((128, 128), f32).at[:32, :8].set(w3)

    # Head weight packed for the (x128 | x32_pad128 | x8_pad128) concat layout.
    wh = jnp.zeros((3 * 128, N_OUT), f32)
    wh = wh.at[0:128].set(p["wh1"])              # rows matching x128
    wh = wh.at[128:160].set(p["wh2"])            # rows matching x32 (lanes 0:32 of slot 2)
    wh = wh.at[256:264].set(p["wh3"])            # rows matching x8  (lanes 0:8  of slot 3)

    # Pack the 10 small (1, N) vectors into one (16, 140) f32 array.  Rows are
    # naturally zero-padded, which is exactly the padding the kernel needs.
    rows = [b1, p["g1"], p["be1"],
            b2, p["g2"], p["be2"],
            b3, p["g3"], p["be3"],
            p["bh"]]
    vecs = jnp.zeros((16, N_OUT), f32)
    for i, r in enumerate(rows):
        vecs = vecs.at[i, : r.shape[1]].set(r[0].astype(f32))

    cast = lambda a: a.astype(matmul_dtype)
    return dict(w1=cast(w1), w2=cast(w2p), w3=cast(w3p), wh=cast(wh), vecs=vecs)


def _auto_batch_tile(B):
    """>=2 grid steps (v7x megacore), even grid when possible, tile <= 512,
    multiple of 8.  VMEM footprint at TB=512 is only a few MiB."""
    target_steps = max(2, 2 * ((B + 1023) // 1024))
    tb = -(-B // target_steps)          # ceil(B / target_steps)
    tb = -(-tb // 8) * 8                # round up to a multiple of 8
    return max(8, min(512, tb))


def cite_model_pallas(x, params, *, batch_tile=None, matmul_dtype=jnp.float32):
    """x: (B, feature_num) f32.  params: raw CiteModel params (see init_params)."""
    B, F = x.shape
    TB = batch_tile if batch_tile is not None else _auto_batch_tile(B)
    assert TB % 8 == 0
    grid = pl.cdiv(B, TB)   # ragged last block: OOB rows are garbage, writes masked

    fp = fuse_and_pack_params(params, matmul_dtype)
    weights = [fp["w1"], fp["w2"], fp["w3"], fp["wh"], fp["vecs"]]

    def full_spec(arr):
        # whole (small) parameter array resident in VMEM; constant block index
        # -> not re-fetched across grid steps.
        return pl.BlockSpec(arr.shape, lambda i: (0, 0))

    in_specs = [pl.BlockSpec((TB, F), lambda i: (i, 0))] + [full_spec(w) for w in weights]
    out_spec = pl.BlockSpec((TB, N_OUT), lambda i: (i, 0))

    x_in = x.astype(matmul_dtype)   # cast once in the wrapper (halves input DMA for bf16)

    return pl.pallas_call(
        cite_kernel,
        out_shape=jax.ShapeDtypeStruct((B, N_OUT), jnp.float32),
        grid_spec=pltpu.PrefetchScalarGridSpec(
            num_scalar_prefetch=0,
            grid=(grid,),
            in_specs=in_specs,
            out_specs=out_spec,
        ),
        compiler_params=pltpu.CompilerParams(
            dimension_semantics=("parallel",),
        ),
    )(x_in, *weights)


def init_params(key, feature_num):
    """Deterministic synthetic parameters matching CiteModel.__init__ shapes."""
    ks = jax.random.split(key, 16)
    s = lambda k, shape, scale: (jax.random.normal(k, shape, jnp.float32) * scale)

    def lin(k, fin, fout):
        kw, kb = jax.random.split(k)
        scale = 1.0 / jnp.sqrt(jnp.float32(fin))
        return s(kw, (fin, fout), scale), s(kb, (1, fout), scale)

    p = {}
    p["w1"], p["b1"] = lin(ks[0], feature_num, 256)
    p["w2"], p["b2"] = lin(ks[1], 256, 128)
    p["g1"], p["be1"] = jnp.ones((1, 128), jnp.float32), jnp.zeros((1, 128), jnp.float32)

    p["w3"], p["b3"] = lin(ks[2], 128, 64)
    p["w4"], p["b4"] = lin(ks[3], 64, 32)
    p["g2"], p["be2"] = jnp.ones((1, 32), jnp.float32), jnp.zeros((1, 32), jnp.float32)

    p["w5"], p["b5"] = lin(ks[4], 32, 16)
    p["w6"], p["b6"] = lin(ks[5], 16, 8)
    p["g3"], p["be3"] = jnp.ones((1, 8), jnp.float32), jnp.zeros((1, 8), jnp.float32)

    wh, bh = lin(ks[6], 128 + 32 + 8, 140)
    p["wh1"], p["wh2"], p["wh3"] = wh[:128], wh[128:160], wh[160:168]
    p["bh"] = bh
    return p


def cite_model_ref(x, p):
    """Pure-JAX reference: exact (unfused) CiteModel forward in f32."""
    def block(x, wa, ba, wb, bb, g, be):
        h = x @ wa + ba
        h = h @ wb + bb
        m = jnp.mean(h, axis=-1, keepdims=True)
        v = jnp.mean((h - m) ** 2, axis=-1, keepdims=True)
        h = (h - m) / jnp.sqrt(v + LN_EPS) * g + be
        return jnp.maximum(h, 0.0)

    x256 = block(x, p["w1"], p["b1"], p["w2"], p["b2"], p["g1"], p["be1"])
    x64 = block(x256, p["w3"], p["b3"], p["w4"], p["b4"], p["g2"], p["be2"])
    x8 = block(x64, p["w5"], p["b5"], p["w6"], p["b6"], p["g3"], p["be3"])
    cat = jnp.concatenate([x256, x64, x8], axis=1)
    wh = jnp.concatenate([p["wh1"], p["wh2"], p["wh3"]], axis=0)
    return cat @ wh + p["bh"]


if __name__ == "__main__":
    key = jax.random.PRNGKey(0)
    k_x, k_p, k_x2 = jax.random.split(key, 3)

    B, feature_num = 512, 32
    x = jax.random.normal(k_x, (B, feature_num), jnp.float32)
    params = init_params(k_p, feature_num)
    ref = cite_model_ref(x, params)

    # f32 MXU path (auto tile: TB=256, grid=2 parallel steps).
    out = jax.block_until_ready(cite_model_pallas(x, params))
    assert out.shape == (B, N_OUT), out.shape
    max_err = float(jnp.max(jnp.abs(out - ref)))
    assert jnp.allclose(out, ref, atol=2e-3, rtol=2e-3), max_err

    # Ragged batch (B % TB != 0): no jnp.pad of x, partial last block masked on writeback.
    B2 = 300
    x2 = jax.random.normal(k_x2, (B2, feature_num), jnp.float32)
    ref2 = cite_model_ref(x2, params)
    out2 = jax.block_until_ready(cite_model_pallas(x2, params))
    assert out2.shape == (B2, N_OUT), out2.shape
    assert jnp.allclose(out2, ref2, atol=2e-3, rtol=2e-3), \
        float(jnp.max(jnp.abs(out2 - ref2)))

    # bf16-MXU path (recommended on v6e / v7x): bf16 matmul inputs, f32 accumulation,
    # f32 LayerNorm.  Loose tolerance vs the f32 reference (bf16 weight quantization).
    out_bf16 = jax.block_until_ready(
        cite_model_pallas(x, params, matmul_dtype=jnp.bfloat16))
    assert out_bf16.shape == (B, N_OUT), out_bf16.shape
    assert jnp.allclose(out_bf16, ref, atol=1e-1, rtol=1e-1), \
        float(jnp.max(jnp.abs(out_bf16 - ref)))

    print("KERNEL_OK")
</pallas_src>

<mosaic_0001>
module attributes {stable_mosaic.version = 11 : i64} {
  func.func @cite_kernel(%arg0: i32, %arg1: memref<256x32xf32, #tpu.memory_space<vmem>>, %arg2: memref<32x128xf32, #tpu.memory_space<vmem>>, %arg3: memref<128x128xf32, #tpu.memory_space<vmem>>, %arg4: memref<128x128xf32, #tpu.memory_space<vmem>>, %arg5: memref<384x140xf32, #tpu.memory_space<vmem>>, %arg6: memref<16x140xf32, #tpu.memory_space<vmem>>, %arg7: memref<256x140xf32, #tpu.memory_space<vmem>>) attributes {dimension_semantics = [#tpu.dimension_semantics<parallel>], iteration_bounds = array<i64: 2>, scalar_prefetch = 0 : i64, scratch_operands = 0 : i64, tpu.core_type = #tpu.core_type<tc>, window_params = [{transform_indices = @transform_0, window_bounds = array<i64: 256, 32>}, {pipeline_mode = #tpu.pipeline_mode<synchronous>, transform_indices = @transform_1, window_bounds = array<i64: 32, 128>}, {pipeline_mode = #tpu.pipeline_mode<synchronous>, transform_indices = @transform_2, window_bounds = array<i64: 128, 128>}, {pipeline_mode = #tpu.pipeline_mode<synchronous>, transform_indices = @transform_3, window_bounds = array<i64: 128, 128>}, {pipeline_mode = #tpu.pipeline_mode<synchronous>, transform_indices = @transform_4, window_bounds = array<i64: 384, 140>}, {pipeline_mode = #tpu.pipeline_mode<synchronous>, transform_indices = @transform_5, window_bounds = array<i64: 16, 140>}, {transform_indices = @transform_6, window_bounds = array<i64: 256, 140>}]} {
    %c0 = arith.constant 0 : index
    %c0_0 = arith.constant 0 : index
    %0 = vector.load %arg6[%c0, %c0_0] : memref<16x140xf32, #tpu.memory_space<vmem>>, vector<16x140xf32>
    %1 = vector.extract_strided_slice %0 {offsets = [0, 0], sizes = [1, 128], strides = [1, 1]} : vector<16x140xf32> to vector<1x128xf32>
    %2 = vector.extract_strided_slice %0 {offsets = [1, 0], sizes = [1, 128], strides = [1, 1]} : vector<16x140xf32> to vector<1x128xf32>
    %3 = vector.extract_strided_slice %0 {offsets = [2, 0], sizes = [1, 128], strides = [1, 1]} : vector<16x140xf32> to vector<1x128xf32>
    %4 = vector.extract_strided_slice %0 {offsets = [3, 0], sizes = [1, 128], strides = [1, 1]} : vector<16x140xf32> to vector<1x128xf32>
    %5 = vector.extract_strided_slice %0 {offsets = [4, 0], sizes = [1, 128], strides = [1, 1]} : vector<16x140xf32> to vector<1x128xf32>
    %6 = vector.extract_strided_slice %0 {offsets = [5, 0], sizes = [1, 128], strides = [1, 1]} : vector<16x140xf32> to vector<1x128xf32>
    %7 = vector.extract_strided_slice %0 {offsets = [6, 0], sizes = [1, 128], strides = [1, 1]} : vector<16x140xf32> to vector<1x128xf32>
    %8 = vector.extract_strided_slice %0 {offsets = [7, 0], sizes = [1, 128], strides = [1, 1]} : vector<16x140xf32> to vector<1x128xf32>
    %9 = vector.extract_strided_slice %0 {offsets = [8, 0], sizes = [1, 128], strides = [1, 1]} : vector<16x140xf32> to vector<1x128xf32>
    %10 = vector.extract_strided_slice %0 {offsets = [9, 0], sizes = [1, 140], strides = [1, 1]} : vector<16x140xf32> to vector<1x140xf32>
    %c0_1 = arith.constant 0 : index
    %c0_2 = arith.constant 0 : index
    %11 = vector.load %arg1[%c0_1, %c0_2] : memref<256x32xf32, #tpu.memory_space<vmem>>, vector<256x32xf32>
    %c0_3 = arith.constant 0 : index
    %c0_4 = arith.constant 0 : index
    %12 = vector.load %arg2[%c0_3, %c0_4] : memref<32x128xf32, #tpu.memory_space<vmem>>, vector<32x128xf32>
    %cst = arith.constant dense<0.000000e+00> : vector<256x128xf32>
    %13 = tpu.matmul %11, %12, %cst {dimension_numbers = #tpu.dot_dimension_numbers<[1], [0], [0], [1], [0, 0, 1, 1], [], []>} : vector<256x32xf32>, vector<32x128xf32>, vector<256x128xf32> -> vector<256x128xf32>
    %14 = vector.broadcast %1 : vector<1x128xf32> to vector<256x128xf32>
    %15 = arith.addf %13, %14 : vector<256x128xf32>
    %cst_5 = arith.constant dense<0.000000e+00> : vector<256xf32>
    %16 = vector.multi_reduction <add>, %15, %cst_5 [1] : vector<256x128xf32> to vector<256xf32>
    %17 = vector.shape_cast %16 : vector<256xf32> to vector<256x1xf32>
    %cst_6 = arith.constant 7.812500e-03 : f32
    %18 = vector.broadcast %cst_6 : f32 to vector<256x1xf32>
    %19 = arith.mulf %17, %18 : vector<256x1xf32>
    %20 = vector.broadcast %19 : vector<256x1xf32> to vector<256x128xf32>
    %21 = arith.subf %15, %20 : vector<256x128xf32>
    %22 = arith.mulf %21, %21 : vector<256x128xf32>
    %cst_7 = arith.constant dense<0.000000e+00> : vector<256xf32>
    %23 = vector.multi_reduction <add>, %22, %cst_7 [1] : vector<256x128xf32> to vector<256xf32>
    %24 = vector.shape_cast %23 : vector<256xf32> to vector<256x1xf32>
    %cst_8 = arith.constant 7.812500e-03 : f32
    %25 = vector.broadcast %cst_8 : f32 to vector<256x1xf32>
    %26 = arith.mulf %24, %25 : vector<256x1xf32>
    %cst_9 = arith.constant 9.99999974E-6 : f32
    %27 = vector.broadcast %cst_9 : f32 to vector<256x1xf32>
    %28 = arith.addf %26, %27 : vector<256x1xf32>
    %29 = math.rsqrt %28 : vector<256x1xf32>
    %30 = vector.broadcast %29 : vector<256x1xf32> to vector<256x128xf32>
    %31 = arith.mulf %21, %30 : vector<256x128xf32>
    %32 = vector.broadcast %2 : vector<1x128xf32> to vector<256x128xf32>
    %33 = arith.mulf %31, %32 : vector<256x128xf32>
    %34 = vector.broadcast %3 : vector<1x128xf32> to vector<256x128xf32>
    %35 = arith.addf %33, %34 : vector<256x128xf32>
    %cst_10 = arith.constant 0.000000e+00 : f32
    %36 = vector.broadcast %cst_10 : f32 to vector<256x128xf32>
    %37 = arith.maximumf %35, %36 : vector<256x128xf32>
    %c0_11 = arith.constant 0 : index
    %c0_12 = arith.constant 0 : index
    %38 = vector.load %arg3[%c0_11, %c0_12] : memref<128x128xf32, #tpu.memory_space<vmem>>, vector<128x128xf32>
    %cst_13 = arith.constant dense<0.000000e+00> : vector<256x128xf32>
    %39 = tpu.matmul %37, %38, %cst_13 {dimension_numbers = #tpu.dot_dimension_numbers<[1], [0], [0], [1], [0, 0, 1, 1], [], []>} : vector<256x128xf32>, vector<128x128xf32>, vector<256x128xf32> -> vector<256x128xf32>
    %40 = vector.broadcast %4 : vector<1x128xf32> to vector<256x128xf32>
    %41 = arith.addf %39, %40 : vector<256x128xf32>
    %cst_14 = arith.constant dense<0.000000e+00> : vector<256xf32>
    %42 = vector.multi_reduction <add>, %41, %cst_14 [1] : vector<256x128xf32> to vector<256xf32>
    %43 = vector.shape_cast %42 : vector<256xf32> to vector<256x1xf32>
    %cst_15 = arith.constant 3.125000e-02 : f32
    %44 = vector.broadcast %cst_15 : f32 to vector<256x1xf32>
    %45 = arith.mulf %43, %44 : vector<256x1xf32>
    %46 = vector.broadcast %45 : vector<256x1xf32> to vector<256x128xf32>
    %47 = arith.subf %41, %46 : vector<256x128xf32>
    %48 = tpu.iota {dimensions = array<i32: 1>} : vector<256x128xi32>
    %c32_i32 = arith.constant 32 : i32
    %49 = vector.broadcast %c32_i32 : i32 to vector<256x128xi32>
    %50 = arith.cmpi slt, %48, %49 : vector<256x128xi32>
    %cst_16 = arith.constant 0.000000e+00 : f32
    %51 = vector.broadcast %cst_16 : f32 to vector<256x128xf32>
    %52 = arith.select %50, %47, %51 : vector<256x128xi1>, vector<256x128xf32>
    %53 = arith.mulf %52, %52 : vector<256x128xf32>
    %cst_17 = arith.constant dense<0.000000e+00> : vector<256xf32>
    %54 = vector.multi_reduction <add>, %53, %cst_17 [1] : vector<256x128xf32> to vector<256xf32>
    %55 = vector.shape_cast %54 : vector<256xf32> to vector<256x1xf32>
    %cst_18 = arith.constant 3.125000e-02 : f32
    %56 = vector.broadcast %cst_18 : f32 to vector<256x1xf32>
    %57 = arith.mulf %55, %56 : vector<256x1xf32>
    %cst_19 = arith.constant 9.99999974E-6 : f32
    %58 = vector.broadcast %cst_19 : f32 to vector<256x1xf32>
    %59 = arith.addf %57, %58 : vector<256x1xf32>
    %60 = math.rsqrt %59 : vector<256x1xf32>
    %61 = vector.broadcast %60 : vector<256x1xf32> to vector<256x128xf32>
    %62 = arith.mulf %52, %61 : vector<256x128xf32>
    %63 = vector.broadcast %5 : vector<1x128xf32> to vector<256x128xf32>
    %64 = arith.mulf %62, %63 : vector<256x128xf32>
    %65 = vector.broadcast %6 : vector<1x128xf32> to vector<256x128xf32>
    %66 = arith.addf %64, %65 : vector<256x128xf32>
    %cst_20 = arith.constant 0.000000e+00 : f32
    %67 = vector.broadcast %cst_20 : f32 to vector<256x128xf32>
    %68 = arith.maximumf %66, %67 : vector<256x128xf32>
    %c0_21 = arith.constant 0 : index
    %c0_22 = arith.constant 0 : index
    %69 = vector.load %arg4[%c0_21, %c0_22] : memref<128x128xf32, #tpu.memory_space<vmem>>, vector<128x128xf32>
    %cst_23 = arith.constant dense<0.000000e+00> : vector<256x128xf32>
    %70 = tpu.matmul %68, %69, %cst_23 {dimension_numbers = #tpu.dot_dimension_numbers<[1], [0], [0], [1], [0, 0, 1, 1], [], []>} : vector<256x128xf32>, vector<128x128xf32>, vector<256x128xf32> -> vector<256x128xf32>
    %71 = vector.broadcast %7 : vector<1x128xf32> to vector<256x128xf32>
    %72 = arith.addf %70, %71 : vector<256x128xf32>
    %cst_24 = arith.constant dense<0.000000e+00> : vector<256xf32>
    %73 = vector.multi_reduction <add>, %72, %cst_24 [1] : vector<256x128xf32> to vector<256xf32>
    %74 = vector.shape_cast %73 : vector<256xf32> to vector<256x1xf32>
    %cst_25 = arith.constant 1.250000e-01 : f32
    %75 = vector.broadcast %cst_25 : f32 to vector<256x1xf32>
    %76 = arith.mulf %74, %75 : vector<256x1xf32>
    %77 = vector.broadcast %76 : vector<256x1xf32> to vector<256x128xf32>
    %78 = arith.subf %72, %77 : vector<256x128xf32>
    %79 = tpu.iota {dimensions = array<i32: 1>} : vector<256x128xi32>
    %c8_i32 = arith.constant 8 : i32
    %80 = vector.broadcast %c8_i32 : i32 to vector<256x128xi32>
    %81 = arith.cmpi slt, %79, %80 : vector<256x128xi32>
    %cst_26 = arith.constant 0.000000e+00 : f32
    %82 = vector.broadcast %cst_26 : f32 to vector<256x128xf32>
    %83 = arith.select %81, %78, %82 : vector<256x128xi1>, vector<256x128xf32>
    %84 = arith.mulf %83, %83 : vector<256x128xf32>
    %cst_27 = arith.constant dense<0.000000e+00> : vector<256xf32>
    %85 = vector.multi_reduction <add>, %84, %cst_27 [1] : vector<256x128xf32> to vector<256xf32>
    %86 = vector.shape_cast %85 : vector<256xf32> to vector<256x1xf32>
    %cst_28 = arith.constant 1.250000e-01 : f32
    %87 = vector.broadcast %cst_28 : f32 to vector<256x1xf32>
    %88 = arith.mulf %86, %87 : vector<256x1xf32>
    %cst_29 = arith.constant 9.99999974E-6 : f32
    %89 = vector.broadcast %cst_29 : f32 to vector<256x1xf32>
    %90 = arith.addf %88, %89 : vector<256x1xf32>
    %91 = math.rsqrt %90 : vector<256x1xf32>
    %92 = vector.broadcast %91 : vector<256x1xf32> to vector<256x128xf32>
    %93 = arith.mulf %83, %92 : vector<256x128xf32>
    %94 = vector.broadcast %8 : vector<1x128xf32> to vector<256x128xf32>
    %95 = arith.mulf %93, %94 : vector<256x128xf32>
    %96 = vector.broadcast %9 : vector<1x128xf32> to vector<256x128xf32>
    %97 = arith.addf %95, %96 : vector<256x128xf32>
    %cst_30 = arith.constant 0.000000e+00 : f32
    %98 = vector.broadcast %cst_30 : f32 to vector<256x128xf32>
    %99 = arith.maximumf %97, %98 : vector<256x128xf32>
    %100 = tpu.concatenate %37, %68, %99 in 1 : vector<256x128xf32>, vector<256x128xf32>, vector<256x128xf32> -> vector<256x384xf32>
    %c0_31 = arith.constant 0 : index
    %c0_32 = arith.constant 0 : index
    %101 = vector.load %arg5[%c0_31, %c0_32] : memref<384x140xf32, #tpu.memory_space<vmem>>, vector<384x140xf32>
    %cst_33 = arith.constant dense<0.000000e+00> : vector<256x140xf32>
    %102 = tpu.matmul %100, %101, %cst_33 {dimension_numbers = #tpu.dot_dimension_numbers<[1], [0], [0], [1], [0, 0, 1, 1], [], []>} : vector<256x384xf32>, vector<384x140xf32>, vector<256x140xf32> -> vector<256x140xf32>
    %103 = vector.broadcast %10 : vector<1x140xf32> to vector<256x140xf32>
    %104 = arith.addf %102, %103 : vector<256x140xf32>
    %c0_34 = arith.constant 0 : index
    %c0_35 = arith.constant 0 : index
    %105 = vector.load %arg7[%c0_34, %c0_35] : memref<256x140xf32, #tpu.memory_space<vmem>>, vector<256x140xf32>
    tpu.vector_store %arg7[%c0_34, %c0_35], %104 {strides = array<i32>} : memref<256x140xf32, #tpu.memory_space<vmem>>, vector<256x140xf32>,
    return
  }
  func.func @transform_0(%arg0: i32) -> (i32, i32) {
    %c0_i32 = arith.constant 0 : i32
    %c0_i32_0 = arith.constant 0 : i32
    return %arg0, %c0_i32 : i32, i32
  }
  func.func @transform_1(%arg0: i32) -> (i32, i32) {
    %c0_i32 = arith.constant 0 : i32
    %c0_i32_0 = arith.constant 0 : i32
    %c0_i32_1 = arith.constant 0 : i32
    return %c0_i32, %c0_i32_0 : i32, i32
  }
  func.func @transform_2(%arg0: i32) -> (i32, i32) {
    %c0_i32 = arith.constant 0 : i32
    %c0_i32_0 = arith.constant 0 : i32
    %c0_i32_1 = arith.constant 0 : i32
    return %c0_i32, %c0_i32_0 : i32, i32
  }
  func.func @transform_3(%arg0: i32) -> (i32, i32) {
    %c0_i32 = arith.constant 0 : i32
    %c0_i32_0 = arith.constant 0 : i32
    %c0_i32_1 = arith.constant 0 : i32
    return %c0_i32, %c0_i32_0 : i32, i32
  }
  func.func @transform_4(%arg0: i32) -> (i32, i32) {
    %c0_i32 = arith.constant 0 : i32
    %c0_i32_0 = arith.constant 0 : i32
    %c0_i32_1 = arith.constant 0 : i32
    return %c0_i32, %c0_i32_0 : i32, i32
  }
  func.func @transform_5(%arg0: i32) -> (i32, i32) {
    %c0_i32 = arith.constant 0 : i32
    %c0_i32_0 = arith.constant 0 : i32
    %c0_i32_1 = arith.constant 0 : i32
    return %c0_i32, %c0_i32_0 : i32, i32
  }
  func.func @transform_6(%arg0: i32) -> (i32, i32) {
    %c0_i32 = arith.constant 0 : i32
    %c0_i32_0 = arith.constant 0 : i32
    return %arg0, %c0_i32 : i32, i32
  }
}

</mosaic_0001>

<llo_original>
// kernel: tpu_custom_call.1
$region0: #{tpu_custom_call.1}
  #allocation0 [shape = 'u32[]', space=smem, size = 0x4, offset = 0x4, fixed_abs, tag = 'smem constant byte address 0x4 - core index']
  #allocation1 [shape = 'u32[72,128]{1,0:T(1,128)}', space=vmem, size = 0x9000, scoped, tag = 'internal scratch']
  %s0 = inlined_call_operand.vmem [shape: f32[512,32], index: 0, kind: input, shape index: {}]
  %s1 = inlined_call_operand.vmem [shape: f32[32,128], index: 1, kind: input, shape index: {}]
  %s2 = inlined_call_operand.vmem [shape: f32[128,128], index: 2, kind: input, shape index: {}]
  %s3 = inlined_call_operand.vmem [shape: f32[128,128], index: 3, kind: input, shape index: {}]
  %s4 = inlined_call_operand.vmem [shape: f32[384,140], index: 4, kind: input, shape index: {}]
  %s5 = inlined_call_operand.vmem [shape: f32[16,140], index: 5, kind: input, shape index: {}]
  %s6 = inlined_call_operand.vmem [shape: f32[512,140], index: 6, kind: output, shape index: {}]
  %s7 = sld [smem:[#allocation0]]
  $region57: #{tpu_custom_call.1} parent=0
    _
  %s9 = ssub.s32 1, %s7
  %s10 = scalar_select 0, %s9, %s7
  loop: start=0, step=1, limit=4
  $region2: #{tpu_custom_call.1} parent=0 // loop_pre_header
    _
  $region3: #{tpu_custom_call.1} parent=0 // loop_header
    %s12 = sphi 0, %s16
    %p13 = scmp.ge.s32.totalorder %s12, 4
    %s22 = sphi 0, %s24
    %s25 = sphi 0, %s22
    %s26 = sphi 0, %s25
    %s42 = sphi 0, %s26
    %s46 = sphi 0, %s46
    %s48 = sphi 0, %s46
    %s49 = sphi 0, %s48
    %s63 = sphi 0, %s49
    %s67 = sphi 0, %s67
    %s69 = sphi 0, %s67
    %s70 = sphi 0, %s69
    %s84 = sphi 0, %s70
    %s88 = sphi 0, %s88
    %s90 = sphi 0, %s88
    %s91 = sphi 0, %s90
    %s105 = sphi 0, %s91
    %s109 = sphi 0, %s109
    %s111 = sphi 0, %s109
    %s112 = sphi 0, %s111
    %s126 = sphi 0, %s112
    %s130 = sphi 0, %s130
    %s132 = sphi 0, %s130
    %s133 = sphi 0, %s132
    %s147 = sphi 0, %s133
    %s153 = sphi 0, %s155
    %s156 = sphi 0, %s153
    %s157 = sphi 0, %s156
    %s173 = sphi 0, %s157
  $region4: #{tpu_custom_call.1} parent=0 // loop_header_branch
    %15 = sbr.rel (%p13) target = $region8
  $region5: #{tpu_custom_call.1} parent=0 // loop_body
    %s17 = ssub.s32 %s12, 1
    %s18 = ssub.s32 %s12, 2
    %s19 = sadd.s32 %s12, 1
    %s20 = ssub.s32 %s12, %s19
    %p21 = scmp.eq.s32.totalorder %s20, 0
    %s23 = sadd.s32 %s22, 1
    %s24 = scalar_select %p21, %s22, %s23
    %p27 = pneg %p21
    %p28 = scmp.eq.s32.totalorder %s12, 1
    %p29 = por %p27, %p28
    %p30 = scmp.ne.s32.totalorder %s22, %s25
    %p31 = scmp.eq.s32.totalorder %s12, 0
    %p32 = por %p30, %p31
    %p33 = scmp.ne.s32.totalorder %s22, %s25
    %p34 = scmp.eq.s32.totalorder %s17, 1
    %p35 = por %p33, %p34
    %p36 = scmp.ne.s32.totalorder %s25, %s26
    %p37 = scmp.eq.s32.totalorder %s17, 0
    %p38 = por %p36, %p37
    %p39 = scmp.ne.s32.totalorder %s25, %s26
    %p40 = scmp.eq.s32.totalorder %s18, 1
    %p41 = por %p39, %p40
    %p43 = scmp.ne.s32.totalorder %s26, %s42
    %p44 = scmp.eq.s32.totalorder %s18, 0
    %p45 = por %p43, %p44
    %s47 = sadd.s32 %s46, 1
    %p50 = scmp.eq.s32.totalorder %s12, 1
    %p51 = scmp.ne.s32.totalorder %s46, %s48
    %p52 = scmp.eq.s32.totalorder %s12, 0
    %p53 = por %p51, %p52
    %p54 = scmp.ne.s32.totalorder %s46, %s48
    %p55 = scmp.eq.s32.totalorder %s17, 1
    %p56 = por %p54, %p55
    %p57 = scmp.ne.s32.totalorder %s48, %s49
    %p58 = scmp.eq.s32.totalorder %s17, 0
    %p59 = por %p57, %p58
    %p60 = scmp.ne.s32.totalorder %s48, %s49
    %p61 = scmp.eq.s32.totalorder %s18, 1
    %p62 = por %p60, %p61
    %p64 = scmp.ne.s32.totalorder %s49, %s63
    %p65 = scmp.eq.s32.totalorder %s18, 0
    %p66 = por %p64, %p65
    %s68 = sadd.s32 %s67, 1
    %p71 = scmp.eq.s32.totalorder %s12, 1
    %p72 = scmp.ne.s32.totalorder %s67, %s69
    %p73 = scmp.eq.s32.totalorder %s12, 0
    %p74 = por %p72, %p73
    %p75 = scmp.ne.s32.totalorder %s67, %s69
    %p76 = scmp.eq.s32.totalorder %s17, 1
    %p77 = por %p75, %p76
    %p78 = scmp.ne.s32.totalorder %s69, %s70
    %p79 = scmp.eq.s32.totalorder %s17, 0
    %p80 = por %p78, %p79
    %p81 = scmp.ne.s32.totalorder %s69, %s70
    %p82 = scmp.eq.s32.totalorder %s18, 1
    %p83 = por %p81, %p82
    %p85 = scmp.ne.s32.totalorder %s70, %s84
    %p86 = scmp.eq.s32.totalorder %s18, 0
    %p87 = por %p85, %p86
    %s89 = sadd.s32 %s88, 1
    %p92 = scmp.eq.s32.totalorder %s12, 1
    %p93 = scmp.ne.s32.totalorder %s88, %s90
    %p94 = scmp.eq.s32.totalorder %s12, 0
    %p95 = por %p93, %p94
    %p96 = scmp.ne.s32.totalorder %s88, %s90
    %p97 = scmp.eq.s32.totalorder %s17, 1
    %p98 = por %p96, %p97
    %p99 = scmp.ne.s32.totalorder %s90, %s91
    %p100 = scmp.eq.s32.totalorder %s17, 0
    %p101 = por %p99, %p100
    %p102 = scmp.ne.s32.totalorder %s90, %s91
    %p103 = scmp.eq.s32.totalorder %s18, 1
    %p104 = por %p102, %p103
    %p106 = scmp.ne.s32.totalorder %s91, %s105
    %p107 = scmp.eq.s32.totalorder %s18, 0
    %p108 = por %p106, %p107
    %s110 = sadd.s32 %s109, 1
    %p113 = scmp.eq.s32.totalorder %s12, 1
    %p114 = scmp.ne.s32.totalorder %s109, %s111
    %p115 = scmp.eq.s32.totalorder %s12, 0
    %p116 = por %p114, %p115
    %p117 = scmp.ne.s32.totalorder %s109, %s111
    %p118 = scmp.eq.s32.totalorder %s17, 1
    %p119 = por %p117, %p118
    %p120 = scmp.ne.s32.totalorder %s111, %s112
    %p121 = scmp.eq.s32.totalorder %s17, 0
    %p122 = por %p120, %p121
    %p123 = scmp.ne.s32.totalorder %s111, %s112
    %p124 = scmp.eq.s32.totalorder %s18, 1
    %p125 = por %p123, %p124
    %p127 = scmp.ne.s32.totalorder %s112, %s126
    %p128 = scmp.eq.s32.totalorder %s18, 0
    %p129 = por %p127, %p128
    %s131 = sadd.s32 %s130, 1
    %p134 = scmp.eq.s32.totalorder %s12, 1
    %p135 = scmp.ne.s32.totalorder %s130, %s132
    %p136 = scmp.eq.s32.totalorder %s12, 0
    %p137 = por %p135, %p136
    %p138 = scmp.ne.s32.totalorder %s130, %s132
    %p139 = scmp.eq.s32.totalorder %s17, 1
    %p140 = por %p138, %p139
    %p141 = scmp.ne.s32.totalorder %s132, %s133
    %p142 = scmp.eq.s32.totalorder %s17, 0
    %p143 = por %p141, %p142
    %p144 = scmp.ne.s32.totalorder %s132, %s133
    %p145 = scmp.eq.s32.totalorder %s18, 1
    %p146 = por %p144, %p145
    %p148 = scmp.ne.s32.totalorder %s133, %s147
    %p149 = scmp.eq.s32.totalorder %s18, 0
    %p150 = por %p148, %p149
    %s151 = ssub.s32 %s12, %s19
    %p152 = scmp.eq.s32.totalorder %s151, 0
    %s154 = sadd.s32 %s153, 1
    %s155 = scalar_select %p152, %s153, %s154
    %p158 = pneg %p152
    %p159 = scmp.eq.s32.totalorder %s12, 1
    %p160 = por %p158, %p159
    %p161 = scmp.ne.s32.totalorder %s153, %s156
    %p162 = scmp.eq.s32.totalorder %s12, 0
    %p163 = por %p161, %p162
    %p164 = scmp.ne.s32.totalorder %s153, %s156
    %p165 = scmp.eq.s32.totalorder %s17, 1
    %p166 = por %p164, %p165
    %p167 = scmp.ne.s32.totalorder %s156, %s157
    %p168 = scmp.eq.s32.totalorder %s17, 0
    %p169 = por %p167, %p168
    %p170 = scmp.ne.s32.totalorder %s156, %s157
    %p171 = scmp.eq.s32.totalorder %s18, 1
    %p172 = por %p170, %p171
    %p174 = scmp.ne.s32.totalorder %s157, %s173
    %p175 = scmp.eq.s32.totalorder %s18, 0
    %p176 = por %p174, %p175
    %p177 = scmp.le.s32.totalorder 1, %s12
    %p178 = scmp.lt.s32.totalorder %s12, 3
    %p179 = pnand %p177, %p178
    %p180 = pneg %p179
    // Predicated region
    $region9: #{tpu_custom_call.1} parent=5 // pred_check
      _
    $region10: #{tpu_custom_call.1} parent=5 // pred_check_branch
      %182 = sbr.rel (%p179) target = $region12
    $region11: #{tpu_custom_call.1} parent=5 // pred_region
      %s183 = ssub.s32 %s12, 1
      // Predicated region
      $region13: #{tpu_custom_call.1} parent=11 // pred_check
        %p184 = pneg %p59
      $region14: #{tpu_custom_call.1} parent=11 // pred_check_branch
        %186 = sbr.rel (%p184) target = $region16
      $region15: #{tpu_custom_call.1} parent=11 // pred_region
        _
      $region16: #{tpu_custom_call.1} parent=11 // pred_fallthru
        _
      // Predicated region
      $region17: #{tpu_custom_call.1} parent=11 // pred_check
        %p187 = pneg %p80
      $region18: #{tpu_custom_call.1} parent=11 // pred_check_branch
        %189 = sbr.rel (%p187) target = $region20
      $region19: #{tpu_custom_call.1} parent=11 // pred_region
        _
      $region20: #{tpu_custom_call.1} parent=11 // pred_fallthru
        _
      // Predicated region
      $region21: #{tpu_custom_call.1} parent=11 // pred_check
        %p190 = pneg %p101
      $region22: #{tpu_custom_call.1} parent=11 // pred_check_branch
        %192 = sbr.rel (%p190) target = $region24
      $region23: #{tpu_custom_call.1} parent=11 // pred_region
        _
      $region24: #{tpu_custom_call.1} parent=11 // pred_fallthru
        _
      // Predicated region
      $region25: #{tpu_custom_call.1} parent=11 // pred_check
        %p193 = pneg %p122
      $region26: #{tpu_custom_call.1} parent=11 // pred_check_branch
        %195 = sbr.rel (%p193) target = $region28
      $region27: #{tpu_custom_call.1} parent=11 // pred_region
        _
      $region28: #{tpu_custom_call.1} parent=11 // pred_fallthru
        _
      // Predicated region
      $region29: #{tpu_custom_call.1} parent=11 // pred_check
        %p196 = pneg %p143
      $region30: #{tpu_custom_call.1} parent=11 // pred_check_branch
        %198 = sbr.rel (%p196) target = $region32
      $region31: #{tpu_custom_call.1} parent=11 // pred_region
        _
      $region32: #{tpu_custom_call.1} parent=11 // pred_fallthru
        _
    $region12: #{tpu_custom_call.1} parent=5 // pred_fallthru
      _
    %p199 = scmp.lt.s32.totalorder %s12, 2
    // Predicated region
    $region33: #{tpu_custom_call.1} parent=5 // pred_check
      %p200 = pneg %p199
    $region34: #{tpu_custom_call.1} parent=5 // pred_check_branch
      %202 = sbr.rel (%p200) target = $region36
    $region35: #{tpu_custom_call.1} parent=5 // pred_region
      // Predicated region
      $region37: #{tpu_custom_call.1} parent=35 // pred_check
        %p203 = pneg %p32
      $region38: #{tpu_custom_call.1} parent=35 // pred_check_branch
        %205 = sbr.rel (%p203) target = $region40
      $region39: #{tpu_custom_call.1} parent=35 // pred_region
        %s206 = smul.u32 32, %s12
        %p207 = scmp.lt.s32.totalorder %s206, 63
        %s208 = scalar_select %p207, %s206, 63
        %s209 = smul.addr %s208, 8
        %s210 = scalar_lea.vmem %s0, %s209
        %s211 = smul.u32 32, %s12
      $region40: #{tpu_custom_call.1} parent=35 // pred_fallthru
        _
    $region36: #{tpu_custom_call.1} parent=5 // pred_fallthru
      _
    %p212 = scmp.le.s32.totalorder 1, %s12
    %p213 = scmp.lt.s32.totalorder %s12, 3
    %p214 = pnand %p212, %p213
    %p215 = pneg %p214
    // Predicated region
    $region41: #{tpu_custom_call.1} parent=5 // pred_check
      _
    $region42: #{tpu_custom_call.1} parent=5 // pred_check_branch
      %217 = sbr.rel (%p214) target = $region44
    $region43: #{tpu_custom_call.1} parent=5 // pred_region
      %s218 = ssub.s32 %s12, 1
      %s219 = smul.u32 32, %s17
      %p220 = scmp.lt.s32.totalorder %s219, 63
      %s221 = scalar_select %p220, %s219, 63
      %s222 = smul.addr %s221, 8
      %s223 = scalar_lea.vmem %s0, %s222
      %p224 = pneg %p38
      %p225 = pneg %p35
      %p226 = pneg %p59
      %p227 = pneg %p56
      %p228 = pneg %p80
      %p229 = pneg %p77
      %p230 = pneg %p101
      %p231 = pneg %p98
      %p232 = pneg %p122
      %p233 = pneg %p119
      %p234 = pneg %p143
      %p235 = pneg %p140
      %p236 = pneg %p169
      %p237 = pneg %p166
      %s238 = smul.u32 32, %s17
      %p239 = scmp.lt.s32.totalorder %s238, 63
      %s240 = scalar_select %p239, %s238, 63
      %s241 = smul.addr %s240, 2
      %s242 = smul.addr %s241, 8
      %s243 = scalar_lea.vmem %s6, %s242
      %s244 = smul.u32 32, %s17
      %p245 = scmp.lt.s32.totalorder %s244, 63
      %s246 = scalar_select %p245, %s244, 63
      %s247 = smul.addr %s246, 8
      %s248 = scalar_lea.vmem %s0, %s247
      %s249 = smul.u32 32, %s17
      %s250 = smul.u32 32, %s17
      %p251 = scmp.lt.s32.totalorder %s250, 63
      %s252 = scalar_select %p251, %s250, 63
      %s253 = smul.addr %s252, 2
      %s254 = smul.addr %s253, 8
      %s255 = scalar_lea.vmem %s6, %s254
      %s256 = smul.u32 32, %s17
      %v257 = vld [vmem:[%s5] sm:$0xff]
      %v258 = vld [vmem:[%s5 + $0x10] sm:$0xff]
      %v259 = vld [vmem:[%s5 + $0x18] sm:$0xff]
      %v260 = vld [vmem:[%s248] sm:$0xff]
      %v261 = vld [vmem:[%s248 + $0x8] sm:$0xff]
      %v262 = vld [vmem:[%s248 + $0x10] sm:$0xff]
      %v263 = vld [vmem:[%s248 + $0x18] sm:$0xff]
      %v264 = vld [vmem:[%s248 + $0x20] sm:$0xff]
      %v265 = vld [vmem:[%s248 + $0x28] sm:$0xff]
      %v266 = vld [vmem:[%s248 + $0x30] sm:$0xff]
      %v267 = vld [vmem:[%s248 + $0x38] sm:$0xff]
      %v268 = vld [vmem:[%s248 + $0x40] sm:$0xff]
      %v269 = vld [vmem:[%s248 + $0x48] sm:$0xff]
      %v270 = vld [vmem:[%s248 + $0x50] sm:$0xff]
      %v271 = vld [vmem:[%s248 + $0x58] sm:$0xff]
      %v272 = vld [vmem:[%s248 + $0x60] sm:$0xff]
      %v273 = vld [vmem:[%s248 + $0x68] sm:$0xff]
      %v274 = vld [vmem:[%s248 + $0x70] sm:$0xff]
      %v275 = vld [vmem:[%s248 + $0x78] sm:$0xff]
      %v276 = vld [vmem:[%s248 + $0x80] sm:$0xff]
      %v277 = vld [vmem:[%s248 + $0x88] sm:$0xff]
      %v278 = vld [vmem:[%s248 + $0x90] sm:$0xff]
      %v279 = vld [vmem:[%s248 + $0x98] sm:$0xff]
      %v280 = vld [vmem:[%s248 + $0xa0] sm:$0xff]
      %v281 = vld [vmem:[%s248 + $0xa8] sm:$0xff]
      %v282 = vld [vmem:[%s248 + $0xb0] sm:$0xff]
      %v283 = vld [vmem:[%s248 + $0xb8] sm:$0xff]
      %v284 = vld [vmem:[%s248 + $0xc0] sm:$0xff]
      %v285 = vld [vmem:[%s248 + $0xc8] sm:$0xff]
      %v286 = vld [vmem:[%s248 + $0xd0] sm:$0xff]
      %v287 = vld [vmem:[%s248 + $0xd8] sm:$0xff]
      %v288 = vld [vmem:[%s248 + $0xe0] sm:$0xff]
      %v289 = vld [vmem:[%s248 + $0xe8] sm:$0xff]
      %v290 = vld [vmem:[%s248 + $0xf0] sm:$0xff]
      %v291 = vld [vmem:[%s248 + $0xf8] sm:$0xff]
      %v292 = vld [vmem:[%s1] sm:$0xff]
      %v293 = vld [vmem:[%s1 + $0x8] sm:$0xff]
      %v294 = vld [vmem:[%s1 + $0x10] sm:$0xff]
      %v295 = vld [vmem:[%s1 + $0x18] sm:$0xff]
      %v296 = vperm.slane %v257, 0
      %vm297 = vcmask 261120
      %v299 = vsel %vm297, %v260, 0
      %v302 = vsel %vm297, %v261, 0
      %v305 = vsel %vm297, %v262, 0
      %v308 = vsel %vm297, %v263, 0
      %v311 = vsel %vm297, %v264, 0
      %v314 = vsel %vm297, %v265, 0
      %v317 = vsel %vm297, %v266, 0
      %v320 = vsel %vm297, %v267, 0
      %v323 = vsel %vm297, %v268, 0
      %v326 = vsel %vm297, %v269, 0
      %v329 = vsel %vm297, %v270, 0
      %v332 = vsel %vm297, %v271, 0
      %v335 = vsel %vm297, %v272, 0
      %v338 = vsel %vm297, %v273, 0
      %v341 = vsel %vm297, %v274, 0
      %v344 = vsel %vm297, %v275, 0
      %v347 = vsel %vm297, %v276, 0
      %v350 = vsel %vm297, %v277, 0
      %v353 = vsel %vm297, %v278, 0
      %v356 = vsel %vm297, %v279, 0
      %v359 = vsel %vm297, %v280, 0
      %v362 = vsel %vm297, %v281, 0
      %v365 = vsel %vm297, %v282, 0
      %v368 = vsel %vm297, %v283, 0
      %v371 = vsel %vm297, %v284, 0
      %v374 = vsel %vm297, %v285, 0
      %v377 = vsel %vm297, %v286, 0
      %v380 = vsel %vm297, %v287, 0
      %v383 = vsel %vm297, %v288, 0
      %v386 = vsel %vm297, %v289, 0
      %v389 = vsel %vm297, %v290, 0
      %v392 = vsel %vm297, %v291, 0
      %394 = vmatpush.msra.mxu0 0.0
      %395 = vmatpush.msra.mxu0 0.0
      %396 = vmatpush.msra.mxu0 0.0
      %397 = vmatpush.msra.mxu0 0.0
      %398 = vmatpush.msra.mxu0 0.0
      %399 = vmatpush.msra.mxu0 0.0
      %400 = vmatpush.msra.mxu0 0.0
      %401 = vmatpush.msra.mxu0 0.0
      %402 = vmatpush.msra.mxu0 0.0
      %403 = vmatpush.msra.mxu0 0.0
      %404 = vmatpush.msra.mxu0 0.0
      %405 = vmatpush.msra.mxu0 0.0
      %406 = vmatpush.msra.mxu0 %v295
      %407 = vmatpush.msra.mxu0 %v294
      %408 = vmatpush.msra.mxu0 %v293
      %409 = vmatpush.msra.mxu0 %v292
      %410 = vmatmul.f32.gmra.mxu0 %v299
      %v411 = vpop.f32.mrf.mxu0
      %v412 = vadd.f32 %v296, %v411
      %413 = vmatmul.f32.gmra.mxu0 %v302
      %v414 = vpop.f32.mrf.mxu0
      %v415 = vadd.f32 %v296, %v414
      %416 = vmatmul.f32.gmra.mxu0 %v305
      %v417 = vpop.f32.mrf.mxu0
      %v418 = vadd.f32 %v296, %v417
      %419 = vmatmul.f32.gmra.mxu0 %v308
      %v420 = vpop.f32.mrf.mxu0
      %v421 = vadd.f32 %v296, %v420
      %422 = vmatmul.f32.gmra.mxu0 %v311
      %v423 = vpop.f32.mrf.mxu0
      %v424 = vadd.f32 %v296, %v423
      %425 = vmatmul.f32.gmra.mxu0 %v314
      %v426 = vpop.f32.mrf.mxu0
      %v427 = vadd.f32 %v296, %v426
      %428 = vmatmul.f32.gmra.mxu0 %v317
      %v429 = vpop.f32.mrf.mxu0
      %v430 = vadd.f32 %v296, %v429
      %431 = vmatmul.f32.gmra.mxu0 %v320
      %v432 = vpop.f32.mrf.mxu0
      %v433 = vadd.f32 %v296, %v432
      %434 = vmatmul.f32.gmra.mxu0 %v323
      %v435 = vpop.f32.mrf.mxu0
      %v436 = vadd.f32 %v296, %v435
      %437 = vmatmul.f32.gmra.mxu0 %v326
      %v438 = vpop.f32.mrf.mxu0
      %v439 = vadd.f32 %v296, %v438
      %440 = vmatmul.f32.gmra.mxu0 %v329
      %v441 = vpop.f32.mrf.mxu0
      %v442 = vadd.f32 %v296, %v441
      %443 = vmatmul.f32.gmra.mxu0 %v332
      %v444 = vpop.f32.mrf.mxu0
      %v445 = vadd.f32 %v296, %v444
      %446 = vmatmul.f32.gmra.mxu0 %v335
      %v447 = vpop.f32.mrf.mxu0
      %v448 = vadd.f32 %v296, %v447
      %449 = vmatmul.f32.gmra.mxu0 %v338
      %v450 = vpop.f32.mrf.mxu0
      %v451 = vadd.f32 %v296, %v450
      %452 = vmatmul.f32.gmra.mxu0 %v341
      %v453 = vpop.f32.mrf.mxu0
      %v454 = vadd.f32 %v296, %v453
      %455 = vmatmul.f32.gmra.mxu0 %v344
      %v456 = vpop.f32.mrf.mxu0
      %v457 = vadd.f32 %v296, %v456
      %458 = vmatmul.f32.gmra.mxu0 %v347
      %v459 = vpop.f32.mrf.mxu0
      %v460 = vadd.f32 %v296, %v459
      %461 = vmatmul.f32.gmra.mxu0 %v350
      %v462 = vpop.f32.mrf.mxu0
      %v463 = vadd.f32 %v296, %v462
      %464 = vmatmul.f32.gmra.mxu0 %v353
      %v465 = vpop.f32.mrf.mxu0
      %v466 = vadd.f32 %v296, %v465
      %467 = vmatmul.f32.gmra.mxu0 %v356
      %v468 = vpop.f32.mrf.mxu0
      %v469 = vadd.f32 %v296, %v468
      %470 = vmatmul.f32.gmra.mxu0 %v359
      %v471 = vpop.f32.mrf.mxu0
      %v472 = vadd.f32 %v296, %v471
      %473 = vmatmul.f32.gmra.mxu0 %v362
      %v474 = vpop.f32.mrf.mxu0
      %v475 = vadd.f32 %v296, %v474
      %476 = vmatmul.f32.gmra.mxu0 %v365
      %v477 = vpop.f32.mrf.mxu0
      %v478 = vadd.f32 %v296, %v477
      %479 = vmatmul.f32.gmra.mxu0 %v368
      %v480 = vpop.f32.mrf.mxu0
      %v481 = vadd.f32 %v296, %v480
      %482 = vmatmul.f32.gmra.mxu0 %v371
      %v483 = vpop.f32.mrf.mxu0
      %v484 = vadd.f32 %v296, %v483
      %485 = vmatmul.f32.gmra.mxu0 %v374
      %v486 = vpop.f32.mrf.mxu0
      %v487 = vadd.f32 %v296, %v486
      %488 = vmatmul.f32.gmra.mxu0 %v377
      %v489 = vpop.f32.mrf.mxu0
      %v490 = vadd.f32 %v296, %v489
      %491 = vmatmul.f32.gmra.mxu0 %v380
      %v492 = vpop.f32.mrf.mxu0
      %v493 = vadd.f32 %v296, %v492
      %494 = vmatmul.f32.gmra.mxu0 %v383
      %v495 = vpop.f32.mrf.mxu0
      %v496 = vadd.f32 %v296, %v495
      %497 = vmatmul.f32.gmra.mxu0 %v386
      %v498 = vpop.f32.mrf.mxu0
      %v499 = vadd.f32 %v296, %v498
      %500 = vmatmul.f32.gmra.mxu0 %v389
      %v501 = vpop.f32.mrf.mxu0
      %v502 = vadd.f32 %v296, %v501
      %503 = vmatmul.f32.gmra.mxu0 %v392
      %v504 = vpop.f32.mrf.mxu0
      %v505 = vadd.f32 %v296, %v504
      %506 = vdwg.mxu0
      %507 = vadd.xlane.f32.xlu0 %v412
      %v508 = vpop.xlane.xlu0 %507
      %509 = vadd.xlane.f32.xlu0 %v415
      %v510 = vpop.xlane.xlu0 %509
      %511 = vadd.xlane.f32.xlu0 %v418
      %v512 = vpop.xlane.xlu0 %511
      %513 = vadd.xlane.f32.xlu0 %v421
      %v514 = vpop.xlane.xlu0 %513
      %515 = vadd.xlane.f32.xlu0 %v424
      %v516 = vpop.xlane.xlu0 %515
      %517 = vadd.xlane.f32.xlu0 %v427
      %v518 = vpop.xlane.xlu0 %517
      %519 = vadd.xlane.f32.xlu0 %v430
      %v520 = vpop.xlane.xlu0 %519
      %521 = vadd.xlane.f32.xlu0 %v433
      %v522 = vpop.xlane.xlu0 %521
      %523 = vadd.xlane.f32.xlu0 %v436
      %v524 = vpop.xlane.xlu0 %523
      %525 = vadd.xlane.f32.xlu0 %v439
      %v526 = vpop.xlane.xlu0 %525
      %527 = vadd.xlane.f32.xlu0 %v442
      %v528 = vpop.xlane.xlu0 %527
      %529 = vadd.xlane.f32.xlu0 %v445
      %v530 = vpop.xlane.xlu0 %529
      %531 = vadd.xlane.f32.xlu0 %v448
      %v532 = vpop.xlane.xlu0 %531
      %533 = vadd.xlane.f32.xlu0 %v451
      %v534 = vpop.xlane.xlu0 %533
      %535 = vadd.xlane.f32.xlu0 %v454
      %v536 = vpop.xlane.xlu0 %535
      %537 = vadd.xlane.f32.xlu0 %v457
      %v538 = vpop.xlane.xlu0 %537
      %539 = vadd.xlane.f32.xlu0 %v460
      %v540 = vpop.xlane.xlu0 %539
      %541 = vadd.xlane.f32.xlu0 %v463
      %v542 = vpop.xlane.xlu0 %541
      %543 = vadd.xlane.f32.xlu0 %v466
      %v544 = vpop.xlane.xlu0 %543
      %545 = vadd.xlane.f32.xlu0 %v469
      %v546 = vpop.xlane.xlu0 %545
      %547 = vadd.xlane.f32.xlu0 %v472
      %v548 = vpop.xlane.xlu0 %547
      %549 = vadd.xlane.f32.xlu0 %v475
      %v550 = vpop.xlane.xlu0 %549
      %551 = vadd.xlane.f32.xlu0 %v478
      %v552 = vpop.xlane.xlu0 %551
      %553 = vadd.xlane.f32.xlu0 %v481
      %v554 = vpop.xlane.xlu0 %553
      %555 = vadd.xlane.f32.xlu0 %v484
      %v556 = vpop.xlane.xlu0 %555
      %557 = vadd.xlane.f32.xlu0 %v487
      %v558 = vpop.xlane.xlu0 %557
      %559 = vadd.xlane.f32.xlu0 %v490
      %v560 = vpop.xlane.xlu0 %559
      %561 = vadd.xlane.f32.xlu0 %v493
      %v562 = vpop.xlane.xlu0 %561
      %563 = vadd.xlane.f32.xlu0 %v496
      %v564 = vpop.xlane.xlu0 %563
      %565 = vadd.xlane.f32.xlu0 %v499
      %v566 = vpop.xlane.xlu0 %565
      %567 = vadd.xlane.f32.xlu0 %v502
      %v568 = vpop.xlane.xlu0 %567
      %569 = vadd.xlane.f32.xlu0 %v505
      %v570 = vpop.xlane.xlu0 %569
      %v571 = vmul.f32 %v508, 0.0078125
      %v572 = vmul.f32 %v510, 0.0078125
      %v573 = vmul.f32 %v512, 0.0078125
      %v574 = vmul.f32 %v514, 0.0078125
      %v575 = vmul.f32 %v516, 0.0078125
      %v576 = vmul.f32 %v518, 0.0078125
      %v577 = vmul.f32 %v520, 0.0078125
      %v578 = vmul.f32 %v522, 0.0078125
      %v579 = vmul.f32 %v524, 0.0078125
      %v580 = vmul.f32 %v526, 0.0078125
      %v581 = vmul.f32 %v528, 0.0078125
      %v582 = vmul.f32 %v530, 0.0078125
      %v583 = vmul.f32 %v532, 0.0078125
      %v584 = vmul.f32 %v534, 0.0078125
      %v585 = vmul.f32 %v536, 0.0078125
      %v586 = vmul.f32 %v538, 0.0078125
      %v587 = vmul.f32 %v540, 0.0078125
      %v588 = vmul.f32 %v542, 0.0078125
      %v589 = vmul.f32 %v544, 0.0078125
      %v590 = vmul.f32 %v546, 0.0078125
      %v591 = vmul.f32 %v548, 0.0078125
      %v592 = vmul.f32 %v550, 0.0078125
      %v593 = vmul.f32 %v552, 0.0078125
      %v594 = vmul.f32 %v554, 0.0078125
      %v595 = vmul.f32 %v556, 0.0078125
      %v596 = vmul.f32 %v558, 0.0078125
      %v597 = vmul.f32 %v560, 0.0078125
      %v598 = vmul.f32 %v562, 0.0078125
      %v599 = vmul.f32 %v564, 0.0078125
      %v600 = vmul.f32 %v566, 0.0078125
      %v601 = vmul.f32 %v568, 0.0078125
      %v602 = vmul.f32 %v570, 0.0078125
      %v603 = vsub.f32 %v412, %v571
      %v604 = vsub.f32 %v415, %v572
      %v605 = vsub.f32 %v418, %v573
      %v606 = vsub.f32 %v421, %v574
      %v607 = vsub.f32 %v424, %v575
      %v608 = vsub.f32 %v427, %v576
      %v609 = vsub.f32 %v430, %v577
      %v610 = vsub.f32 %v433, %v578
      %v611 = vsub.f32 %v436, %v579
      %v612 = vsub.f32 %v439, %v580
      %v613 = vsub.f32 %v442, %v581
      %v614 = vsub.f32 %v445, %v582
      %v615 = vsub.f32 %v448, %v583
      %v616 = vsub.f32 %v451, %v584
      %v617 = vsub.f32 %v454, %v585
      %v618 = vsub.f32 %v457, %v586
      %v619 = vsub.f32 %v460, %v587
      %v620 = vsub.f32 %v463, %v588
      %v621 = vsub.f32 %v466, %v589
      %v622 = vsub.f32 %v469, %v590
      %v623 = vsub.f32 %v472, %v591
      %v624 = vsub.f32 %v475, %v592
      %v625 = vsub.f32 %v478, %v593
      %v626 = vsub.f32 %v481, %v594
      %v627 = vsub.f32 %v484, %v595
      %v628 = vsub.f32 %v487, %v596
      %v629 = vsub.f32 %v490, %v597
      %v630 = vsub.f32 %v493, %v598
      %v631 = vsub.f32 %v496, %v599
      %v632 = vsub.f32 %v499, %v600
      %v633 = vsub.f32 %v502, %v601
      %v634 = vsub.f32 %v505, %v602
      %v635 = vmul.f32 %v603, %v603
      %v636 = vmul.f32 %v604, %v604
      %v637 = vmul.f32 %v605, %v605
      %v638 = vmul.f32 %v606, %v606
      %v639 = vmul.f32 %v607, %v607
      %v640 = vmul.f32 %v608, %v608
      %v641 = vmul.f32 %v609, %v609
      %v642 = vmul.f32 %v610, %v610
      %v643 = vmul.f32 %v611, %v611
      %v644 = vmul.f32 %v612, %v612
      %v645 = vmul.f32 %v613, %v613
      %v646 = vmul.f32 %v614, %v614
      %v647 = vmul.f32 %v615, %v615
      %v648 = vmul.f32 %v616, %v616
      %v649 = vmul.f32 %v617, %v617
      %v650 = vmul.f32 %v618, %v618
      %v651 = vmul.f32 %v619, %v619
      %v652 = vmul.f32 %v620, %v620
      %v653 = vmul.f32 %v621, %v621
      %v654 = vmul.f32 %v622, %v622
      %v655 = vmul.f32 %v623, %v623
      %v656 = vmul.f32 %v624, %v624
      %v657 = vmul.f32 %v625, %v625
      %v658 = vmul.f32 %v626, %v626
      %v659 = vmul.f32 %v627, %v627
      %v660 = vmul.f32 %v628, %v628
      %v661 = vmul.f32 %v629, %v629
      %v662 = vmul.f32 %v630, %v630
      %v663 = vmul.f32 %v631, %v631
      %v664 = vmul.f32 %v632, %v632
      %v665 = vmul.f32 %v633, %v633
      %v666 = vmul.f32 %v634, %v634
      %667 = vadd.xlane.f32.xlu0 %v635
      %v668 = vpop.xlane.xlu0 %667
      %669 = vadd.xlane.f32.xlu0 %v636
      %v670 = vpop.xlane.xlu0 %669
      %671 = vadd.xlane.f32.xlu0 %v637
      %v672 = vpop.xlane.xlu0 %671
      %673 = vadd.xlane.f32.xlu0 %v638
      %v674 = vpop.xlane.xlu0 %673
      %675 = vadd.xlane.f32.xlu0 %v639
      %v676 = vpop.xlane.xlu0 %675
      %677 = vadd.xlane.f32.xlu0 %v640
      %v678 = vpop.xlane.xlu0 %677
      %679 = vadd.xlane.f32.xlu0 %v641
      %v680 = vpop.xlane.xlu0 %679
      %681 = vadd.xlane.f32.xlu0 %v642
      %v682 = vpop.xlane.xlu0 %681
      %683 = vadd.xlane.f32.xlu0 %v643
      %v684 = vpop.xlane.xlu0 %683
      %685 = vadd.xlane.f32.xlu0 %v644
      %v686 = vpop.xlane.xlu0 %685
      %687 = vadd.xlane.f32.xlu0 %v645
      %v688 = vpop.xlane.xlu0 %687
      %689 = vadd.xlane.f32.xlu0 %v646
      %v690 = vpop.xlane.xlu0 %689
      %691 = vadd.xlane.f32.xlu0 %v647
      %v692 = vpop.xlane.xlu0 %691
      %693 = vadd.xlane.f32.xlu0 %v648
      %v694 = vpop.xlane.xlu0 %693
      %695 = vadd.xlane.f32.xlu0 %v649
      %v696 = vpop.xlane.xlu0 %695
      %697 = vadd.xlane.f32.xlu0 %v650
      %v698 = vpop.xlane.xlu0 %697
      %699 = vadd.xlane.f32.xlu0 %v651
      %v700 = vpop.xlane.xlu0 %699
      %701 = vadd.xlane.f32.xlu0 %v652
      %v702 = vpop.xlane.xlu0 %701
      %703 = vadd.xlane.f32.xlu0 %v653
      %v704 = vpop.xlane.xlu0 %703
      %705 = vadd.xlane.f32.xlu0 %v654
      %v706 = vpop.xlane.xlu0 %705
      %707 = vadd.xlane.f32.xlu0 %v655
      %v708 = vpop.xlane.xlu0 %707
      %709 = vadd.xlane.f32.xlu0 %v656
      %v710 = vpop.xlane.xlu0 %709
      %711 = vadd.xlane.f32.xlu0 %v657
      %v712 = vpop.xlane.xlu0 %711
      %713 = vadd.xlane.f32.xlu0 %v658
      %v714 = vpop.xlane.xlu0 %713
      %715 = vadd.xlane.f32.xlu0 %v659
      %v716 = vpop.xlane.xlu0 %715
      %717 = vadd.xlane.f32.xlu0 %v660
      %v718 = vpop.xlane.xlu0 %717
      %719 = vadd.xlane.f32.xlu0 %v661
      %v720 = vpop.xlane.xlu0 %719
      %721 = vadd.xlane.f32.xlu0 %v662
      %v722 = vpop.xlane.xlu0 %721
      %723 = vadd.xlane.f32.xlu0 %v663
      %v724 = vpop.xlane.xlu0 %723
      %725 = vadd.xlane.f32.xlu0 %v664
      %v726 = vpop.xlane.xlu0 %725
      %727 = vadd.xlane.f32.xlu0 %v665
      %v728 = vpop.xlane.xlu0 %727
      %729 = vadd.xlane.f32.xlu0 %v666
      %v730 = vpop.xlane.xlu0 %729
      %v731 = vmul.f32 %v668, 0.0078125
      %v732 = vmul.f32 %v670, 0.0078125
      %v733 = vmul.f32 %v672, 0.0078125
      %v734 = vmul.f32 %v674, 0.0078125
      %v735 = vmul.f32 %v676, 0.0078125
      %v736 = vmul.f32 %v678, 0.0078125
      %v737 = vmul.f32 %v680, 0.0078125
      %v738 = vmul.f32 %v682, 0.0078125
      %v739 = vmul.f32 %v684, 0.0078125
      %v740 = vmul.f32 %v686, 0.0078125
      %v741 = vmul.f32 %v688, 0.0078125
      %v742 = vmul.f32 %v690, 0.0078125
      %v743 = vmul.f32 %v692, 0.0078125
      %v744 = vmul.f32 %v694, 0.0078125
      %v745 = vmul.f32 %v696, 0.0078125
      %v746 = vmul.f32 %v698, 0.0078125
      %v747 = vmul.f32 %v700, 0.0078125
      %v748 = vmul.f32 %v702, 0.0078125
      %v749 = vmul.f32 %v704, 0.0078125
      %v750 = vmul.f32 %v706, 0.0078125
      %v751 = vmul.f32 %v708, 0.0078125
      %v752 = vmul.f32 %v710, 0.0078125
      %v753 = vmul.f32 %v712, 0.0078125
      %v754 = vmul.f32 %v714, 0.0078125
      %v755 = vmul.f32 %v716, 0.0078125
      %v756 = vmul.f32 %v718, 0.0078125
      %v757 = vmul.f32 %v720, 0.0078125
      %v758 = vmul.f32 %v722, 0.0078125
      %v759 = vmul.f32 %v724, 0.0078125
      %v760 = vmul.f32 %v726, 0.0078125
      %v761 = vmul.f32 %v728, 0.0078125
      %v762 = vmul.f32 %v730, 0.0078125
      %v763 = vadd.f32 %v731, 1e-05
      %v764 = vadd.f32 %v732, 1e-05
      %v765 = vadd.f32 %v733, 1e-05
      %v766 = vadd.f32 %v734, 1e-05
      %v767 = vadd.f32 %v735, 1e-05
      %v768 = vadd.f32 %v736, 1e-05
      %v769 = vadd.f32 %v737, 1e-05
      %v770 = vadd.f32 %v738, 1e-05
      %v771 = vadd.f32 %v739, 1e-05
      %v772 = vadd.f32 %v740, 1e-05
      %v773 = vadd.f32 %v741, 1e-05
      %v774 = vadd.f32 %v742, 1e-05
      %v775 = vadd.f32 %v743, 1e-05
      %v776 = vadd.f32 %v744, 1e-05
      %v777 = vadd.f32 %v745, 1e-05
      %v778 = vadd.f32 %v746, 1e-05
      %v779 = vadd.f32 %v747, 1e-05
      %v780 = vadd.f32 %v748, 1e-05
      %v781 = vadd.f32 %v749, 1e-05
      %v782 = vadd.f32 %v750, 1e-05
      %v783 = vadd.f32 %v751, 1e-05
      %v784 = vadd.f32 %v752, 1e-05
      %v785 = vadd.f32 %v753, 1e-05
      %v786 = vadd.f32 %v754, 1e-05
      %v787 = vadd.f32 %v755, 1e-05
      %v788 = vadd.f32 %v756, 1e-05
      %v789 = vadd.f32 %v757, 1e-05
      %v790 = vadd.f32 %v758, 1e-05
      %v791 = vadd.f32 %v759, 1e-05
      %v792 = vadd.f32 %v760, 1e-05
      %v793 = vadd.f32 %v761, 1e-05
      %v794 = vadd.f32 %v762, 1e-05
      %v795 = vrsqrt.pop %v763
      %v796 = vmul.f32 %v795, %v763
      %v797 = vmul.f32 %v796, %v795
      %v798 = vmul.f32 0.5, %v797
      %v799 = vsub.f32 1.5, %v798
      %v800 = vmul.f32 %v795, %v799
      %vm801 = vweird.f32 %v763
      %vm802 = vweird.f32 %v795
      %vm803 = vmor %vm801, %vm802
      %v804 = vsel %vm803, %v795, %v800
      %v805 = vrsqrt.pop %v764
      %v806 = vmul.f32 %v805, %v764
      %v807 = vmul.f32 %v806, %v805
      %v808 = vmul.f32 0.5, %v807
      %v809 = vsub.f32 1.5, %v808
      %v810 = vmul.f32 %v805, %v809
      %vm811 = vweird.f32 %v764
      %vm812 = vweird.f32 %v805
      %vm813 = vmor %vm811, %vm812
      %v814 = vsel %vm813, %v805, %v810
      %v815 = vrsqrt.pop %v765
      %v816 = vmul.f32 %v815, %v765
      %v817 = vmul.f32 %v816, %v815
      %v818 = vmul.f32 0.5, %v817
      %v819 = vsub.f32 1.5, %v818
      %v820 = vmul.f32 %v815, %v819
      %vm821 = vweird.f32 %v765
      %vm822 = vweird.f32 %v815
      %vm823 = vmor %vm821, %vm822
      %v824 = vsel %vm823, %v815, %v820
      %v825 = vrsqrt.pop %v766
      %v826 = vmul.f32 %v825, %v766
      %v827 = vmul.f32 %v826, %v825
      %v828 = vmul.f32 0.5, %v827
      %v829 = vsub.f32 1.5, %v828
      %v830 = vmul.f32 %v825, %v829
      %vm831 = vweird.f32 %v766
      %vm832 = vweird.f32 %v825
      %vm833 = vmor %vm831, %vm832
      %v834 = vsel %vm833, %v825, %v830
      %v835 = vrsqrt.pop %v767
      %v836 = vmul.f32 %v835, %v767
      %v837 = vmul.f32 %v836, %v835
      %v838 = vmul.f32 0.5, %v837
      %v839 = vsub.f32 1.5, %v838
      %v840 = vmul.f32 %v835, %v839
      %vm841 = vweird.f32 %v767
      %vm842 = vweird.f32 %v835
      %vm843 = vmor %vm841, %vm842
      %v844 = vsel %vm843, %v835, %v840
      %v845 = vrsqrt.pop %v768
      %v846 = vmul.f32 %v845, %v768
      %v847 = vmul.f32 %v846, %v845
      %v848 = vmul.f32 0.5, %v847
      %v849 = vsub.f32 1.5, %v848
      %v850 = vmul.f32 %v845, %v849
      %vm851 = vweird.f32 %v768
      %vm852 = vweird.f32 %v845
      %vm853 = vmor %vm851, %vm852
      %v854 = vsel %vm853, %v845, %v850
      %v855 = vrsqrt.pop %v769
      %v856 = vmul.f32 %v855, %v769
      %v857 = vmul.f32 %v856, %v855
      %v858 = vmul.f32 0.5, %v857
      %v859 = vsub.f32 1.5, %v858
      %v860 = vmul.f32 %v855, %v859
      %vm861 = vweird.f32 %v769
      %vm862 = vweird.f32 %v855
      %vm863 = vmor %vm861, %vm862
      %v864 = vsel %vm863, %v855, %v860
      %v865 = vrsqrt.pop %v770
      %v866 = vmul.f32 %v865, %v770
      %v867 = vmul.f32 %v866, %v865
      %v868 = vmul.f32 0.5, %v867
      %v869 = vsub.f32 1.5, %v868
      %v870 = vmul.f32 %v865, %v869
      %vm871 = vweird.f32 %v770
      %vm872 = vweird.f32 %v865
      %vm873 = vmor %vm871, %vm872
      %v874 = vsel %vm873, %v865, %v870
      %v875 = vrsqrt.pop %v771
      %v876 = vmul.f32 %v875, %v771
      %v877 = vmul.f32 %v876, %v875
      %v878 = vmul.f32 0.5, %v877
      %v879 = vsub.f32 1.5, %v878
      %v880 = vmul.f32 %v875, %v879
      %vm881 = vweird.f32 %v771
      %vm882 = vweird.f32 %v875
      %vm883 = vmor %vm881, %vm882
      %v884 = vsel %vm883, %v875, %v880
      %v885 = vrsqrt.pop %v772
      %v886 = vmul.f32 %v885, %v772
      %v887 = vmul.f32 %v886, %v885
      %v888 = vmul.f32 0.5, %v887
      %v889 = vsub.f32 1.5, %v888
      %v890 = vmul.f32 %v885, %v889
      %vm891 = vweird.f32 %v772
      %vm892 = vweird.f32 %v885
      %vm893 = vmor %vm891, %vm892
      %v894 = vsel %vm893, %v885, %v890
      %v895 = vrsqrt.pop %v773
      %v896 = vmul.f32 %v895, %v773
      %v897 = vmul.f32 %v896, %v895
      %v898 = vmul.f32 0.5, %v897
      %v899 = vsub.f32 1.5, %v898
      %v900 = vmul.f32 %v895, %v899
      %vm901 = vweird.f32 %v773
      %vm902 = vweird.f32 %v895
      %vm903 = vmor %vm901, %vm902
      %v904 = vsel %vm903, %v895, %v900
      %v905 = vrsqrt.pop %v774
      %v906 = vmul.f32 %v905, %v774
      %v907 = vmul.f32 %v906, %v905
      %v908 = vmul.f32 0.5, %v907
      %v909 = vsub.f32 1.5, %v908
      %v910 = vmul.f32 %v905, %v909
      %vm911 = vweird.f32 %v774
      %vm912 = vweird.f32 %v905
      %vm913 = vmor %vm911, %vm912
      %v914 = vsel %vm913, %v905, %v910
      %v915 = vrsqrt.pop %v775
      %v916 = vmul.f32 %v915, %v775
      %v917 = vmul.f32 %v916, %v915
      %v918 = vmul.f32 0.5, %v917
      %v919 = vsub.f32 1.5, %v918
      %v920 = vmul.f32 %v915, %v919
      %vm921 = vweird.f32 %v775
      %vm922 = vweird.f32 %v915
      %vm923 = vmor %vm921, %vm922
      %v924 = vsel %vm923, %v915, %v920
      %v925 = vrsqrt.pop %v776
      %v926 = vmul.f32 %v925, %v776
      %v927 = vmul.f32 %v926, %v925
      %v928 = vmul.f32 0.5, %v927
      %v929 = vsub.f32 1.5, %v928
      %v930 = vmul.f32 %v925, %v929
      %vm931 = vweird.f32 %v776
      %vm932 = vweird.f32 %v925
      %vm933 = vmor %vm931, %vm932
      %v934 = vsel %vm933, %v925, %v930
      %v935 = vrsqrt.pop %v777
      %v936 = vmul.f32 %v935, %v777
      %v937 = vmul.f32 %v936, %v935
      %v938 = vmul.f32 0.5, %v937
      %v939 = vsub.f32 1.5, %v938
      %v940 = vmul.f32 %v935, %v939
      %vm941 = vweird.f32 %v777
      %vm942 = vweird.f32 %v935
      %vm943 = vmor %vm941, %vm942
      %v944 = vsel %vm943, %v935, %v940
      %v945 = vrsqrt.pop %v778
      %v946 = vmul.f32 %v945, %v778
      %v947 = vmul.f32 %v946, %v945
      %v948 = vmul.f32 0.5, %v947
      %v949 = vsub.f32 1.5, %v948
      %v950 = vmul.f32 %v945, %v949
      %vm951 = vweird.f32 %v778
      %vm952 = vweird.f32 %v945
      %vm953 = vmor %vm951, %vm952
      %v954 = vsel %vm953, %v945, %v950
      %v955 = vrsqrt.pop %v779
      %v956 = vmul.f32 %v955, %v779
      %v957 = vmul.f32 %v956, %v955
      %v958 = vmul.f32 0.5, %v957
      %v959 = vsub.f32 1.5, %v958
      %v960 = vmul.f32 %v955, %v959
      %vm961 = vweird.f32 %v779
      %vm962 = vweird.f32 %v955
      %vm963 = vmor %vm961, %vm962
      %v964 = vsel %vm963, %v955, %v960
      %v965 = vrsqrt.pop %v780
      %v966 = vmul.f32 %v965, %v780
      %v967 = vmul.f32 %v966, %v965
      %v968 = vmul.f32 0.5, %v967
      %v969 = vsub.f32 1.5, %v968
      %v970 = vmul.f32 %v965, %v969
      %vm971 = vweird.f32 %v780
      %vm972 = vweird.f32 %v965
      %vm973 = vmor %vm971, %vm972
      %v974 = vsel %vm973, %v965, %v970
      %v975 = vrsqrt.pop %v781
      %v976 = vmul.f32 %v975, %v781
      %v977 = vmul.f32 %v976, %v975
      %v978 = vmul.f32 0.5, %v977
      %v979 = vsub.f32 1.5, %v978
      %v980 = vmul.f32 %v975, %v979
      %vm981 = vweird.f32 %v781
      %vm982 = vweird.f32 %v975
      %vm983 = vmor %vm981, %vm982
      %v984 = vsel %vm983, %v975, %v980
      %v985 = vrsqrt.pop %v782
      %v986 = vmul.f32 %v985, %v782
      %v987 = vmul.f32 %v986, %v985
      %v988 = vmul.f32 0.5, %v987
      %v989 = vsub.f32 1.5, %v988
      %v990 = vmul.f32 %v985, %v989
      %vm991 = vweird.f32 %v782
      %vm992 = vweird.f32 %v985
      %vm993 = vmor %vm991, %vm992
      %v994 = vsel %vm993, %v985, %v990
      %v995 = vrsqrt.pop %v783
      %v996 = vmul.f32 %v995, %v783
      %v997 = vmul.f32 %v996, %v995
      %v998 = vmul.f32 0.5, %v997
      %v999 = vsub.f32 1.5, %v998
      %v1000 = vmul.f32 %v995, %v999
      %vm1001 = vweird.f32 %v783
      %vm1002 = vweird.f32 %v995
      %vm1003 = vmor %vm1001, %vm1002
      %v1004 = vsel %vm1003, %v995, %v1000
      %v1005 = vrsqrt.pop %v784
      %v1006 = vmul.f32 %v1005, %v784
      %v1007 = vmul.f32 %v1006, %v1005
      %v1008 = vmul.f32 0.5, %v1007
      %v1009 = vsub.f32 1.5, %v1008
      %v1010 = vmul.f32 %v1005, %v1009
      %vm1011 = vweird.f32 %v784
      %vm1012 = vweird.f32 %v1005
      %vm1013 = vmor %vm1011, %vm1012
      %v1014 = vsel %vm1013, %v1005, %v1010
      %v1015 = vrsqrt.pop %v785
      %v1016 = vmul.f32 %v1015, %v785
      %v1017 = vmul.f32 %v1016, %v1015
      %v1018 = vmul.f32 0.5, %v1017
      %v1019 = vsub.f32 1.5, %v1018
      %v1020 = vmul.f32 %v1015, %v1019
      %vm1021 = vweird.f32 %v785
      %vm1022 = vweird.f32 %v1015
      %vm1023 = vmor %vm1021, %vm1022
      %v1024 = vsel %vm1023, %v1015, %v1020
      %v1025 = vrsqrt.pop %v786
      %v1026 = vmul.f32 %v1025, %v786
      %v1027 = vmul.f32 %v1026, %v1025
      %v1028 = vmul.f32 0.5, %v1027
      %v1029 = vsub.f32 1.5, %v1028
      %v1030 = vmul.f32 %v1025, %v1029
      %vm1031 = vweird.f32 %v786
      %vm1032 = vweird.f32 %v1025
      %vm1033 = vmor %vm1031, %vm1032
      %v1034 = vsel %vm1033, %v1025, %v1030
      %v1035 = vrsqrt.pop %v787
      %v1036 = vmul.f32 %v1035, %v787
      %v1037 = vmul.f32 %v1036, %v1035
      %v1038 = vmul.f32 0.5, %v1037
      %v1039 = vsub.f32 1.5, %v1038
      %v1040 = vmul.f32 %v1035, %v1039
      %vm1041 = vweird.f32 %v787
      %vm1042 = vweird.f32 %v1035
      %vm1043 = vmor %vm1041, %vm1042
      %v1044 = vsel %vm1043, %v1035, %v1040
      %v1045 = vrsqrt.pop %v788
      %v1046 = vmul.f32 %v1045, %v788
      %v1047 = vmul.f32 %v1046, %v1045
      %v1048 = vmul.f32 0.5, %v1047
      %v1049 = vsub.f32 1.5, %v1048
      %v1050 = vmul.f32 %v1045, %v1049
      %vm1051 = vweird.f32 %v788
      %vm1052 = vweird.f32 %v1045
      %vm1053 = vmor %vm1051, %vm1052
      %v1054 = vsel %vm1053, %v1045, %v1050
      %v1055 = vrsqrt.pop %v789
      %v1056 = vmul.f32 %v1055, %v789
      %v1057 = vmul.f32 %v1056, %v1055
      %v1058 = vmul.f32 0.5, %v1057
      %v1059 = vsub.f32 1.5, %v1058
      %v1060 = vmul.f32 %v1055, %v1059
      %vm1061 = vweird.f32 %v789
      %vm1062 = vweird.f32 %v1055
      %vm1063 = vmor %vm1061, %vm1062
      %v1064 = vsel %vm1063, %v1055, %v1060
      %v1065 = vrsqrt.pop %v790
      %v1066 = vmul.f32 %v1065, %v790
      %v1067 = vmul.f32 %v1066, %v1065
      %v1068 = vmul.f32 0.5, %v1067
      %v1069 = vsub.f32 1.5, %v1068
      %v1070 = vmul.f32 %v1065, %v1069
      %vm1071 = vweird.f32 %v790
      %vm1072 = vweird.f32 %v1065
      %vm1073 = vmor %vm1071, %vm1072
      %v1074 = vsel %vm1073, %v1065, %v1070
      %v1075 = vrsqrt.pop %v791
      %v1076 = vmul.f32 %v1075, %v791
      %v1077 = vmul.f32 %v1076, %v1075
      %v1078 = vmul.f32 0.5, %v1077
      %v1079 = vsub.f32 1.5, %v1078
      %v1080 = vmul.f32 %v1075, %v1079
      %vm1081 = vweird.f32 %v791
      %vm1082 = vweird.f32 %v1075
      %vm1083 = vmor %vm1081, %vm1082
      %v1084 = vsel %vm1083, %v1075, %v1080
      %v1085 = vrsqrt.pop %v792
      %v1086 = vmul.f32 %v1085, %v792
      %v1087 = vmul.f32 %v1086, %v1085
      %v1088 = vmul.f32 0.5, %v1087
      %v1089 = vsub.f32 1.5, %v1088
      %v1090 = vmul.f32 %v1085, %v1089
      %vm1091 = vweird.f32 %v792
      %vm1092 = vweird.f32 %v1085
      %vm1093 = vmor %vm1091, %vm1092
      %v1094 = vsel %vm1093, %v1085, %v1090
      %v1095 = vrsqrt.pop %v793
      %v1096 = vmul.f32 %v1095, %v793
      %v1097 = vmul.f32 %v1096, %v1095
      %v1098 = vmul.f32 0.5, %v1097
      %v1099 = vsub.f32 1.5, %v1098
      %v1100 = vmul.f32 %v1095, %v1099
      %vm1101 = vweird.f32 %v793
      %vm1102 = vweird.f32 %v1095
      %vm1103 = vmor %vm1101, %vm1102
      %v1104 = vsel %vm1103, %v1095, %v1100
      %v1105 = vrsqrt.pop %v794
      %v1106 = vmul.f32 %v1105, %v794
      %v1107 = vmul.f32 %v1106, %v1105
      %v1108 = vmul.f32 0.5, %v1107
      %v1109 = vsub.f32 1.5, %v1108
      %v1110 = vmul.f32 %v1105, %v1109
      %vm1111 = vweird.f32 %v794
      %vm1112 = vweird.f32 %v1105
      %vm1113 = vmor %vm1111, %vm1112
      %v1114 = vsel %vm1113, %v1105, %v1110
      %v1115 = vmul.f32 %v603, %v804
      %v1116 = vmul.f32 %v604, %v814
      %v1117 = vmul.f32 %v605, %v824
      %v1118 = vmul.f32 %v606, %v834
      %v1119 = vmul.f32 %v607, %v844
      %v1120 = vmul.f32 %v608, %v854
      %v1121 = vmul.f32 %v609, %v864
      %v1122 = vmul.f32 %v610, %v874
      %v1123 = vmul.f32 %v611, %v884
      %v1124 = vmul.f32 %v612, %v894
      %v1125 = vmul.f32 %v613, %v904
      %v1126 = vmul.f32 %v614, %v914
      %v1127 = vmul.f32 %v615, %v924
      %v1128 = vmul.f32 %v616, %v934
      %v1129 = vmul.f32 %v617, %v944
      %v1130 = vmul.f32 %v618, %v954
      %v1131 = vmul.f32 %v619, %v964
      %v1132 = vmul.f32 %v620, %v974
      %v1133 = vmul.f32 %v621, %v984
      %v1134 = vmul.f32 %v622, %v994
      %v1135 = vmul.f32 %v623, %v1004
      %v1136 = vmul.f32 %v624, %v1014
      %v1137 = vmul.f32 %v625, %v1024
      %v1138 = vmul.f32 %v626, %v1034
      %v1139 = vmul.f32 %v627, %v1044
      %v1140 = vmul.f32 %v628, %v1054
      %v1141 = vmul.f32 %v629, %v1064
      %v1142 = vmul.f32 %v630, %v1074
      %v1143 = vmul.f32 %v631, %v1084
      %v1144 = vmul.f32 %v632, %v1094
      %v1145 = vmul.f32 %v633, %v1104
      %v1146 = vmul.f32 %v634, %v1114
      %v1147 = vperm.slane %v257, 1
      %v1148 = vmul.f32 %v1115, %v1147
      %v1149 = vmul.f32 %v1116, %v1147
      %v1150 = vmul.f32 %v1117, %v1147
      %v1151 = vmul.f32 %v1118, %v1147
      %v1152 = vmul.f32 %v1119, %v1147
      %v1153 = vmul.f32 %v1120, %v1147
      %v1154 = vmul.f32 %v1121, %v1147
      %v1155 = vmul.f32 %v1122, %v1147
      %v1156 = vmul.f32 %v1123, %v1147
      %v1157 = vmul.f32 %v1124, %v1147
      %v1158 = vmul.f32 %v1125, %v1147
      %v1159 = vmul.f32 %v1126, %v1147
      %v1160 = vmul.f32 %v1127, %v1147
      %v1161 = vmul.f32 %v1128, %v1147
      %v1162 = vmul.f32 %v1129, %v1147
      %v1163 = vmul.f32 %v1130, %v1147
      %v1164 = vmul.f32 %v1131, %v1147
      %v1165 = vmul.f32 %v1132, %v1147
      %v1166 = vmul.f32 %v1133, %v1147
      %v1167 = vmul.f32 %v1134, %v1147
      %v1168 = vmul.f32 %v1135, %v1147
      %v1169 = vmul.f32 %v1136, %v1147
      %v1170 = vmul.f32 %v1137, %v1147
      %v1171 = vmul.f32 %v1138, %v1147
      %v1172 = vmul.f32 %v1139, %v1147
      %v1173 = vmul.f32 %v1140, %v1147
      %v1174 = vmul.f32 %v1141, %v1147
      %v1175 = vmul.f32 %v1142, %v1147
      %v1176 = vmul.f32 %v1143, %v1147
      %v1177 = vmul.f32 %v1144, %v1147
      %v1178 = vmul.f32 %v1145, %v1147
      %v1179 = vmul.f32 %v1146, %v1147
      %v1180 = vperm.slane %v257, 2
      %v1181 = vadd.f32 %v1148, %v1180
      %v1182 = vadd.f32 %v1149, %v1180
      %v1183 = vadd.f32 %v1150, %v1180
      %v1184 = vadd.f32 %v1151, %v1180
      %v1185 = vadd.f32 %v1152, %v1180
      %v1186 = vadd.f32 %v1153, %v1180
      %v1187 = vadd.f32 %v1154, %v1180
      %v1188 = vadd.f32 %v1155, %v1180
      %v1189 = vadd.f32 %v1156, %v1180
      %v1190 = vadd.f32 %v1157, %v1180
      %v1191 = vadd.f32 %v1158, %v1180
      %v1192 = vadd.f32 %v1159, %v1180
      %v1193 = vadd.f32 %v1160, %v1180
      %v1194 = vadd.f32 %v1161, %v1180
      %v1195 = vadd.f32 %v1162, %v1180
      %v1196 = vadd.f32 %v1163, %v1180
      %v1197 = vadd.f32 %v1164, %v1180
      %v1198 = vadd.f32 %v1165, %v1180
      %v1199 = vadd.f32 %v1166, %v1180
      %v1200 = vadd.f32 %v1167, %v1180
      %v1201 = vadd.f32 %v1168, %v1180
      %v1202 = vadd.f32 %v1169, %v1180
      %v1203 = vadd.f32 %v1170, %v1180
      %v1204 = vadd.f32 %v1171, %v1180
      %v1205 = vadd.f32 %v1172, %v1180
      %v1206 = vadd.f32 %v1173, %v1180
      %v1207 = vadd.f32 %v1174, %v1180
      %v1208 = vadd.f32 %v1175, %v1180
      %v1209 = vadd.f32 %v1176, %v1180
      %v1210 = vadd.f32 %v1177, %v1180
      %v1211 = vadd.f32 %v1178, %v1180
      %v1212 = vadd.f32 %v1179, %v1180
      %v1213 = vmax.f32 %v1181, 0.0
      %v1214 = vmax.f32 %v1182, 0.0
      %v1215 = vmax.f32 %v1183, 0.0
      %v1216 = vmax.f32 %v1184, 0.0
      %v1217 = vmax.f32 %v1185, 0.0
      %v1218 = vmax.f32 %v1186, 0.0
      %v1219 = vmax.f32 %v1187, 0.0
      %v1220 = vmax.f32 %v1188, 0.0
      %v1221 = vmax.f32 %v1189, 0.0
      %v1222 = vmax.f32 %v1190, 0.0
      %v1223 = vmax.f32 %v1191, 0.0
      %v1224 = vmax.f32 %v1192, 0.0
      %v1225 = vmax.f32 %v1193, 0.0
      %v1226 = vmax.f32 %v1194, 0.0
      %v1227 = vmax.f32 %v1195, 0.0
      %v1228 = vmax.f32 %v1196, 0.0
      %v1229 = vmax.f32 %v1197, 0.0
      %v1230 = vmax.f32 %v1198, 0.0
      %v1231 = vmax.f32 %v1199, 0.0
      %v1232 = vmax.f32 %v1200, 0.0
      %v1233 = vmax.f32 %v1201, 0.0
      %v1234 = vmax.f32 %v1202, 0.0
      %v1235 = vmax.f32 %v1203, 0.0
      %v1236 = vmax.f32 %v1204, 0.0
      %v1237 = vmax.f32 %v1205, 0.0
      %v1238 = vmax.f32 %v1206, 0.0
      %v1239 = vmax.f32 %v1207, 0.0
      %v1240 = vmax.f32 %v1208, 0.0
      %v1241 = vmax.f32 %v1209, 0.0
      %v1242 = vmax.f32 %v1210, 0.0
      %v1243 = vmax.f32 %v1211, 0.0
      %v1244 = vmax.f32 %v1212, 0.0
      %v1245 = vld [vmem:[%s2] sm:$0xff]
      %v1246 = vld [vmem:[%s2 + $0x8] sm:$0xff]
      %v1247 = vld [vmem:[%s2 + $0x10] sm:$0xff]
      %v1248 = vld [vmem:[%s2 + $0x18] sm:$0xff]
      %v1249 = vld [vmem:[%s2 + $0x20] sm:$0xff]
      %v1250 = vld [vmem:[%s2 + $0x28] sm:$0xff]
      %v1251 = vld [vmem:[%s2 + $0x30] sm:$0xff]
      %v1252 = vld [vmem:[%s2 + $0x38] sm:$0xff]
      %v1253 = vld [vmem:[%s2 + $0x40] sm:$0xff]
      %v1254 = vld [vmem:[%s2 + $0x48] sm:$0xff]
      %v1255 = vld [vmem:[%s2 + $0x50] sm:$0xff]
      %v1256 = vld [vmem:[%s2 + $0x58] sm:$0xff]
      %v1257 = vld [vmem:[%s2 + $0x60] sm:$0xff]
      %v1258 = vld [vmem:[%s2 + $0x68] sm:$0xff]
      %v1259 = vld [vmem:[%s2 + $0x70] sm:$0xff]
      %v1260 = vld [vmem:[%s2 + $0x78] sm:$0xff]
      %v1261 = vperm.slane %v257, 3
      %1262 = vmatpush.msra.mxu0 %v1260
      %1263 = vmatpush.msra.mxu0 %v1259
      %1264 = vmatpush.msra.mxu0 %v1258
      %1265 = vmatpush.msra.mxu0 %v1257
      %1266 = vmatpush.msra.mxu0 %v1256
      %1267 = vmatpush.msra.mxu0 %v1255
      %1268 = vmatpush.msra.mxu0 %v1254
      %1269 = vmatpush.msra.mxu0 %v1253
      %1270 = vmatpush.msra.mxu0 %v1252
      %1271 = vmatpush.msra.mxu0 %v1251
      %1272 = vmatpush.msra.mxu0 %v1250
      %1273 = vmatpush.msra.mxu0 %v1249
      %1274 = vmatpush.msra.mxu0 %v1248
      %1275 = vmatpush.msra.mxu0 %v1247
      %1276 = vmatpush.msra.mxu0 %v1246
      %1277 = vmatpush.msra.mxu0 %v1245
      %1278 = vmatmul.f32.gmra.mxu0 %v1213
      %v1279 = vpop.f32.mrf.mxu0
      %v1280 = vadd.f32 %v1261, %v1279
      %1281 = vmatmul.f32.gmra.mxu0 %v1214
      %v1282 = vpop.f32.mrf.mxu0
      %v1283 = vadd.f32 %v1261, %v1282
      %1284 = vmatmul.f32.gmra.mxu0 %v1215
      %v1285 = vpop.f32.mrf.mxu0
      %v1286 = vadd.f32 %v1261, %v1285
      %1287 = vmatmul.f32.gmra.mxu0 %v1216
      %v1288 = vpop.f32.mrf.mxu0
      %v1289 = vadd.f32 %v1261, %v1288
      %1290 = vmatmul.f32.gmra.mxu0 %v1217
      %v1291 = vpop.f32.mrf.mxu0
      %v1292 = vadd.f32 %v1261, %v1291
      %1293 = vmatmul.f32.gmra.mxu0 %v1218
      %v1294 = vpop.f32.mrf.mxu0
      %v1295 = vadd.f32 %v1261, %v1294
      %1296 = vmatmul.f32.gmra.mxu0 %v1219
      %v1297 = vpop.f32.mrf.mxu0
      %v1298 = vadd.f32 %v1261, %v1297
      %1299 = vmatmul.f32.gmra.mxu0 %v1220
      %v1300 = vpop.f32.mrf.mxu0
      %v1301 = vadd.f32 %v1261, %v1300
      %1302 = vmatmul.f32.gmra.mxu0 %v1221
      %v1303 = vpop.f32.mrf.mxu0
      %v1304 = vadd.f32 %v1261, %v1303
      %1305 = vmatmul.f32.gmra.mxu0 %v1222
      %v1306 = vpop.f32.mrf.mxu0
      %v1307 = vadd.f32 %v1261, %v1306
      %1308 = vmatmul.f32.gmra.mxu0 %v1223
      %v1309 = vpop.f32.mrf.mxu0
      %v1310 = vadd.f32 %v1261, %v1309
      %1311 = vmatmul.f32.gmra.mxu0 %v1224
      %v1312 = vpop.f32.mrf.mxu0
      %v1313 = vadd.f32 %v1261, %v1312
      %1314 = vmatmul.f32.gmra.mxu0 %v1225
      %v1315 = vpop.f32.mrf.mxu0
      %v1316 = vadd.f32 %v1261, %v1315
      %1317 = vmatmul.f32.gmra.mxu0 %v1226
      %v1318 = vpop.f32.mrf.mxu0
      %v1319 = vadd.f32 %v1261, %v1318
      %1320 = vmatmul.f32.gmra.mxu0 %v1227
      %v1321 = vpop.f32.mrf.mxu0
      %v1322 = vadd.f32 %v1261, %v1321
      %1323 = vmatmul.f32.gmra.mxu0 %v1228
      %v1324 = vpop.f32.mrf.mxu0
      %v1325 = vadd.f32 %v1261, %v1324
      %1326 = vmatmul.f32.gmra.mxu0 %v1229
      %v1327 = vpop.f32.mrf.mxu0
      %v1328 = vadd.f32 %v1261, %v1327
      %1329 = vmatmul.f32.gmra.mxu0 %v1230
      %v1330 = vpop.f32.mrf.mxu0
      %v1331 = vadd.f32 %v1261, %v1330
      %1332 = vmatmul.f32.gmra.mxu0 %v1231
      %v1333 = vpop.f32.mrf.mxu0
      %v1334 = vadd.f32 %v1261, %v1333
      %1335 = vmatmul.f32.gmra.mxu0 %v1232
      %v1336 = vpop.f32.mrf.mxu0
      %v1337 = vadd.f32 %v1261, %v1336
      %1338 = vmatmul.f32.gmra.mxu0 %v1233
      %v1339 = vpop.f32.mrf.mxu0
      %v1340 = vadd.f32 %v1261, %v1339
      %1341 = vmatmul.f32.gmra.mxu0 %v1234
      %v1342 = vpop.f32.mrf.mxu0
      %v1343 = vadd.f32 %v1261, %v1342
      %1344 = vmatmul.f32.gmra.mxu0 %v1235
      %v1345 = vpop.f32.mrf.mxu0
      %v1346 = vadd.f32 %v1261, %v1345
      %1347 = vmatmul.f32.gmra.mxu0 %v1236
      %v1348 = vpop.f32.mrf.mxu0
      %v1349 = vadd.f32 %v1261, %v1348
      %1350 = vmatmul.f32.gmra.mxu0 %v1237
      %v1351 = vpop.f32.mrf.mxu0
      %v1352 = vadd.f32 %v1261, %v1351
      %1353 = vmatmul.f32.gmra.mxu0 %v1238
      %v1354 = vpop.f32.mrf.mxu0
      %v1355 = vadd.f32 %v1261, %v1354
      %1356 = vmatmul.f32.gmra.mxu0 %v1239
      %v1357 = vpop.f32.mrf.mxu0
      %v1358 = vadd.f32 %v1261, %v1357
      %1359 = vmatmul.f32.gmra.mxu0 %v1240
      %v1360 = vpop.f32.mrf.mxu0
      %v1361 = vadd.f32 %v1261, %v1360
      %1362 = vmatmul.f32.gmra.mxu0 %v1241
      %v1363 = vpop.f32.mrf.mxu0
      %v1364 = vadd.f32 %v1261, %v1363
      %1365 = vmatmul.f32.gmra.mxu0 %v1242
      %v1366 = vpop.f32.mrf.mxu0
      %v1367 = vadd.f32 %v1261, %v1366
      %1368 = vmatmul.f32.gmra.mxu0 %v1243
      %v1369 = vpop.f32.mrf.mxu0
      %v1370 = vadd.f32 %v1261, %v1369
      %1371 = vmatmul.f32.gmra.mxu0 %v1244
      %v1372 = vpop.f32.mrf.mxu0
      %v1373 = vadd.f32 %v1261, %v1372
      %1374 = vdwg.mxu0
      %1375 = vadd.xlane.f32.xlu0 %v1280
      %v1376 = vpop.xlane.xlu0 %1375
      %1377 = vadd.xlane.f32.xlu0 %v1283
      %v1378 = vpop.xlane.xlu0 %1377
      %1379 = vadd.xlane.f32.xlu0 %v1286
      %v1380 = vpop.xlane.xlu0 %1379
      %1381 = vadd.xlane.f32.xlu0 %v1289
      %v1382 = vpop.xlane.xlu0 %1381
      %1383 = vadd.xlane.f32.xlu0 %v1292
      %v1384 = vpop.xlane.xlu0 %1383
      %1385 = vadd.xlane.f32.xlu0 %v1295
      %v1386 = vpop.xlane.xlu0 %1385
      %1387 = vadd.xlane.f32.xlu0 %v1298
      %v1388 = vpop.xlane.xlu0 %1387
      %1389 = vadd.xlane.f32.xlu0 %v1301
      %v1390 = vpop.xlane.xlu0 %1389
      %1391 = vadd.xlane.f32.xlu0 %v1304
      %v1392 = vpop.xlane.xlu0 %1391
      %1393 = vadd.xlane.f32.xlu0 %v1307
      %v1394 = vpop.xlane.xlu0 %1393
      %1395 = vadd.xlane.f32.xlu0 %v1310
      %v1396 = vpop.xlane.xlu0 %1395
      %1397 = vadd.xlane.f32.xlu0 %v1313
      %v1398 = vpop.xlane.xlu0 %1397
      %1399 = vadd.xlane.f32.xlu0 %v1316
      %v1400 = vpop.xlane.xlu0 %1399
      %1401 = vadd.xlane.f32.xlu0 %v1319
      %v1402 = vpop.xlane.xlu0 %1401
      %1403 = vadd.xlane.f32.xlu0 %v1322
      %v1404 = vpop.xlane.xlu0 %1403
      %1405 = vadd.xlane.f32.xlu0 %v1325
      %v1406 = vpop.xlane.xlu0 %1405
      %1407 = vadd.xlane.f32.xlu0 %v1328
      %v1408 = vpop.xlane.xlu0 %1407
      %1409 = vadd.xlane.f32.xlu0 %v1331
      %v1410 = vpop.xlane.xlu0 %1409
      %1411 = vadd.xlane.f32.xlu0 %v1334
      %v1412 = vpop.xlane.xlu0 %1411
      %1413 = vadd.xlane.f32.xlu0 %v1337
      %v1414 = vpop.xlane.xlu0 %1413
      %1415 = vadd.xlane.f32.xlu0 %v1340
      %v1416 = vpop.xlane.xlu0 %1415
      %1417 = vadd.xlane.f32.xlu0 %v1343
      %v1418 = vpop.xlane.xlu0 %1417
      %1419 = vadd.xlane.f32.xlu0 %v1346
      %v1420 = vpop.xlane.xlu0 %1419
      %1421 = vadd.xlane.f32.xlu0 %v1349
      %v1422 = vpop.xlane.xlu0 %1421
      %1423 = vadd.xlane.f32.xlu0 %v1352
      %v1424 = vpop.xlane.xlu0 %1423
      %1425 = vadd.xlane.f32.xlu0 %v1355
      %v1426 = vpop.xlane.xlu0 %1425
      %1427 = vadd.xlane.f32.xlu0 %v1358
      %v1428 = vpop.xlane.xlu0 %1427
      %1429 = vadd.xlane.f32.xlu0 %v1361
      %v1430 = vpop.xlane.xlu0 %1429
      %1431 = vadd.xlane.f32.xlu0 %v1364
      %v1432 = vpop.xlane.xlu0 %1431
      %1433 = vadd.xlane.f32.xlu0 %v1367
      %v1434 = vpop.xlane.xlu0 %1433
      %1435 = vadd.xlane.f32.xlu0 %v1370
      %v1436 = vpop.xlane.xlu0 %1435
      %1437 = vadd.xlane.f32.xlu0 %v1373
      %v1438 = vpop.xlane.xlu0 %1437
      %v1439 = vmul.f32 %v1376, 0.03125
      %v1440 = vmul.f32 %v1378, 0.03125
      %v1441 = vmul.f32 %v1380, 0.03125
      %v1442 = vmul.f32 %v1382, 0.03125
      %v1443 = vmul.f32 %v1384, 0.03125
      %v1444 = vmul.f32 %v1386, 0.03125
      %v1445 = vmul.f32 %v1388, 0.03125
      %v1446 = vmul.f32 %v1390, 0.03125
      %v1447 = vmul.f32 %v1392, 0.03125
      %v1448 = vmul.f32 %v1394, 0.03125
      %v1449 = vmul.f32 %v1396, 0.03125
      %v1450 = vmul.f32 %v1398, 0.03125
      %v1451 = vmul.f32 %v1400, 0.03125
      %v1452 = vmul.f32 %v1402, 0.03125
      %v1453 = vmul.f32 %v1404, 0.03125
      %v1454 = vmul.f32 %v1406, 0.03125
      %v1455 = vmul.f32 %v1408, 0.03125
      %v1456 = vmul.f32 %v1410, 0.03125
      %v1457 = vmul.f32 %v1412, 0.03125
      %v1458 = vmul.f32 %v1414, 0.03125
      %v1459 = vmul.f32 %v1416, 0.03125
      %v1460 = vmul.f32 %v1418, 0.03125
      %v1461 = vmul.f32 %v1420, 0.03125
      %v1462 = vmul.f32 %v1422, 0.03125
      %v1463 = vmul.f32 %v1424, 0.03125
      %v1464 = vmul.f32 %v1426, 0.03125
      %v1465 = vmul.f32 %v1428, 0.03125
      %v1466 = vmul.f32 %v1430, 0.03125
      %v1467 = vmul.f32 %v1432, 0.03125
      %v1468 = vmul.f32 %v1434, 0.03125
      %v1469 = vmul.f32 %v1436, 0.03125
      %v1470 = vmul.f32 %v1438, 0.03125
      %v1471 = vsub.f32 %v1280, %v1439
      %v1472 = vsub.f32 %v1283, %v1440
      %v1473 = vsub.f32 %v1286, %v1441
      %v1474 = vsub.f32 %v1289, %v1442
      %v1475 = vsub.f32 %v1292, %v1443
      %v1476 = vsub.f32 %v1295, %v1444
      %v1477 = vsub.f32 %v1298, %v1445
      %v1478 = vsub.f32 %v1301, %v1446
      %v1479 = vsub.f32 %v1304, %v1447
      %v1480 = vsub.f32 %v1307, %v1448
      %v1481 = vsub.f32 %v1310, %v1449
      %v1482 = vsub.f32 %v1313, %v1450
      %v1483 = vsub.f32 %v1316, %v1451
      %v1484 = vsub.f32 %v1319, %v1452
      %v1485 = vsub.f32 %v1322, %v1453
      %v1486 = vsub.f32 %v1325, %v1454
      %v1487 = vsub.f32 %v1328, %v1455
      %v1488 = vsub.f32 %v1331, %v1456
      %v1489 = vsub.f32 %v1334, %v1457
      %v1490 = vsub.f32 %v1337, %v1458
      %v1491 = vsub.f32 %v1340, %v1459
      %v1492 = vsub.f32 %v1343, %v1460
      %v1493 = vsub.f32 %v1346, %v1461
      %v1494 = vsub.f32 %v1349, %v1462
      %v1495 = vsub.f32 %v1352, %v1463
      %v1496 = vsub.f32 %v1355, %v1464
      %v1497 = vsub.f32 %v1358, %v1465
      %v1498 = vsub.f32 %v1361, %v1466
      %v1499 = vsub.f32 %v1364, %v1467
      %v1500 = vsub.f32 %v1367, %v1468
      %v1501 = vsub.f32 %v1370, %v1469
      %v1502 = vsub.f32 %v1373, %v1470
      %v1503 = vlaneseq
      %v1504 = vand.u32 %v1503, 127
      %vm1505 = vcmp.lt.s32.totalorder %v1504, 32
      %v1506 = vsel %vm1505, %v1471, 0.0
      %v1507 = vsel %vm1505, %v1472, 0.0
      %v1508 = vsel %vm1505, %v1473, 0.0
      %v1509 = vsel %vm1505, %v1474, 0.0
      %v1510 = vsel %vm1505, %v1475, 0.0
      %v1511 = vsel %vm1505, %v1476, 0.0
      %v1512 = vsel %vm1505, %v1477, 0.0
      %v1513 = vsel %vm1505, %v1478, 0.0
      %v1514 = vsel %vm1505, %v1479, 0.0
      %v1515 = vsel %vm1505, %v1480, 0.0
      %v1516 = vsel %vm1505, %v1481, 0.0
      %v1517 = vsel %vm1505, %v1482, 0.0
      %v1518 = vsel %vm1505, %v1483, 0.0
      %v1519 = vsel %vm1505, %v1484, 0.0
      %v1520 = vsel %vm1505, %v1485, 0.0
      %v1521 = vsel %vm1505, %v1486, 0.0
      %v1522 = vsel %vm1505, %v1487, 0.0
      %v1523 = vsel %vm1505, %v1488, 0.0
      %v1524 = vsel %vm1505, %v1489, 0.0
      %v1525 = vsel %vm1505, %v1490, 0.0
      %v1526 = vsel %vm1505, %v1491, 0.0
      %v1527 = vsel %vm1505, %v1492, 0.0
      %v1528 = vsel %vm1505, %v1493, 0.0
      %v1529 = vsel %vm1505, %v1494, 0.0
      %v1530 = vsel %vm1505, %v1495, 0.0
      %v1531 = vsel %vm1505, %v1496, 0.0
      %v1532 = vsel %vm1505, %v1497, 0.0
      %v1533 = vsel %vm1505, %v1498, 0.0
      %v1534 = vsel %vm1505, %v1499, 0.0
      %v1535 = vsel %vm1505, %v1500, 0.0
      %v1536 = vsel %vm1505, %v1501, 0.0
      %v1537 = vsel %vm1505, %v1502, 0.0
      %v1538 = vmul.f32 %v1506, %v1506
      %v1539 = vmul.f32 %v1507, %v1507
      %v1540 = vmul.f32 %v1508, %v1508
      %v1541 = vmul.f32 %v1509, %v1509
      %v1542 = vmul.f32 %v1510, %v1510
      %v1543 = vmul.f32 %v1511, %v1511
      %v1544 = vmul.f32 %v1512, %v1512
      %v1545 = vmul.f32 %v1513, %v1513
      %v1546 = vmul.f32 %v1514, %v1514
      %v1547 = vmul.f32 %v1515, %v1515
      %v1548 = vmul.f32 %v1516, %v1516
      %v1549 = vmul.f32 %v1517, %v1517
      %v1550 = vmul.f32 %v1518, %v1518
      %v1551 = vmul.f32 %v1519, %v1519
      %v1552 = vmul.f32 %v1520, %v1520
      %v1553 = vmul.f32 %v1521, %v1521
      %v1554 = vmul.f32 %v1522, %v1522
      %v1555 = vmul.f32 %v1523, %v1523
      %v1556 = vmul.f32 %v1524, %v1524
      %v1557 = vmul.f32 %v1525, %v1525
      %v1558 = vmul.f32 %v1526, %v1526
      %v1559 = vmul.f32 %v1527, %v1527
      %v1560 = vmul.f32 %v1528, %v1528
      %v1561 = vmul.f32 %v1529, %v1529
      %v1562 = vmul.f32 %v1530, %v1530
      %v1563 = vmul.f32 %v1531, %v1531
      %v1564 = vmul.f32 %v1532, %v1532
      %v1565 = vmul.f32 %v1533, %v1533
      %v1566 = vmul.f32 %v1534, %v1534
      %v1567 = vmul.f32 %v1535, %v1535
      %v1568 = vmul.f32 %v1536, %v1536
      %v1569 = vmul.f32 %v1537, %v1537
      %1570 = vadd.xlane.f32.xlu0 %v1538
      %v1571 = vpop.xlane.xlu0 %1570
      %1572 = vadd.xlane.f32.xlu0 %v1539
      %v1573 = vpop.xlane.xlu0 %1572
      %1574 = vadd.xlane.f32.xlu0 %v1540
      %v1575 = vpop.xlane.xlu0 %1574
      %1576 = vadd.xlane.f32.xlu0 %v1541
      %v1577 = vpop.xlane.xlu0 %1576
      %1578 = vadd.xlane.f32.xlu0 %v1542
      %v1579 = vpop.xlane.xlu0 %1578
      %1580 = vadd.xlane.f32.xlu0 %v1543
      %v1581 = vpop.xlane.xlu0 %1580
      %1582 = vadd.xlane.f32.xlu0 %v1544
      %v1583 = vpop.xlane.xlu0 %1582
      %1584 = vadd.xlane.f32.xlu0 %v1545
      %v1585 = vpop.xlane.xlu0 %1584
      %1586 = vadd.xlane.f32.xlu0 %v1546
      %v1587 = vpop.xlane.xlu0 %1586
      %1588 = vadd.xlane.f32.xlu0 %v1547
      %v1589 = vpop.xlane.xlu0 %1588
      %1590 = vadd.xlane.f32.xlu0 %v1548
      %v1591 = vpop.xlane.xlu0 %1590
      %1592 = vadd.xlane.f32.xlu0 %v1549
      %v1593 = vpop.xlane.xlu0 %1592
      %1594 = vadd.xlane.f32.xlu0 %v1550
      %v1595 = vpop.xlane.xlu0 %1594
      %1596 = vadd.xlane.f32.xlu0 %v1551
      %v1597 = vpop.xlane.xlu0 %1596
      %1598 = vadd.xlane.f32.xlu0 %v1552
      %v1599 = vpop.xlane.xlu0 %1598
      %1600 = vadd.xlane.f32.xlu0 %v1553
      %v1601 = vpop.xlane.xlu0 %1600
      %1602 = vadd.xlane.f32.xlu0 %v1554
      %v1603 = vpop.xlane.xlu0 %1602
      %1604 = vadd.xlane.f32.xlu0 %v1555
      %v1605 = vpop.xlane.xlu0 %1604
      %1606 = vadd.xlane.f32.xlu0 %v1556
      %v1607 = vpop.xlane.xlu0 %1606
      %1608 = vadd.xlane.f32.xlu0 %v1557
      %v1609 = vpop.xlane.xlu0 %1608
      %1610 = vadd.xlane.f32.xlu0 %v1558
      %v1611 = vpop.xlane.xlu0 %1610
      %1612 = vadd.xlane.f32.xlu0 %v1559
      %v1613 = vpop.xlane.xlu0 %1612
      %1614 = vadd.xlane.f32.xlu0 %v1560
      %v1615 = vpop.xlane.xlu0 %1614
      %1616 = vadd.xlane.f32.xlu0 %v1561
      %v1617 = vpop.xlane.xlu0 %1616
      %1618 = vadd.xlane.f32.xlu0 %v1562
      %v1619 = vpop.xlane.xlu0 %1618
      %1620 = vadd.xlane.f32.xlu0 %v1563
      %v1621 = vpop.xlane.xlu0 %1620
      %1622 = vadd.xlane.f32.xlu0 %v1564
      %v1623 = vpop.xlane.xlu0 %1622
      %1624 = vadd.xlane.f32.xlu0 %v1565
      %v1625 = vpop.xlane.xlu0 %1624
      %1626 = vadd.xlane.f32.xlu0 %v1566
      %v1627 = vpop.xlane.xlu0 %1626
      %1628 = vadd.xlane.f32.xlu0 %v1567
      %v1629 = vpop.xlane.xlu0 %1628
      %1630 = vadd.xlane.f32.xlu0 %v1568
      %v1631 = vpop.xlane.xlu0 %1630
      %1632 = vadd.xlane.f32.xlu0 %v1569
      %v1633 = vpop.xlane.xlu0 %1632
      %v1634 = vmul.f32 %v1571, 0.03125
      %v1635 = vmul.f32 %v1573, 0.03125
      %v1636 = vmul.f32 %v1575, 0.03125
      %v1637 = vmul.f32 %v1577, 0.03125
      %v1638 = vmul.f32 %v1579, 0.03125
      %v1639 = vmul.f32 %v1581, 0.03125
      %v1640 = vmul.f32 %v1583, 0.03125
      %v1641 = vmul.f32 %v1585, 0.03125
      %v1642 = vmul.f32 %v1587, 0.03125
      %v1643 = vmul.f32 %v1589, 0.03125
      %v1644 = vmul.f32 %v1591, 0.03125
      %v1645 = vmul.f32 %v1593, 0.03125
      %v1646 = vmul.f32 %v1595, 0.03125
      %v1647 = vmul.f32 %v1597, 0.03125
      %v1648 = vmul.f32 %v1599, 0.03125
      %v1649 = vmul.f32 %v1601, 0.03125
      %v1650 = vmul.f32 %v1603, 0.03125
      %v1651 = vmul.f32 %v1605, 0.03125
      %v1652 = vmul.f32 %v1607, 0.03125
      %v1653 = vmul.f32 %v1609, 0.03125
      %v1654 = vmul.f32 %v1611, 0.03125
      %v1655 = vmul.f32 %v1613, 0.03125
      %v1656 = vmul.f32 %v1615, 0.03125
      %v1657 = vmul.f32 %v1617, 0.03125
      %v1658 = vmul.f32 %v1619, 0.03125
      %v1659 = vmul.f32 %v1621, 0.03125
      %v1660 = vmul.f32 %v1623, 0.03125
      %v1661 = vmul.f32 %v1625, 0.03125
      %v1662 = vmul.f32 %v1627, 0.03125
      %v1663 = vmul.f32 %v1629, 0.03125
      %v1664 = vmul.f32 %v1631, 0.03125
      %v1665 = vmul.f32 %v1633, 0.03125
      %v1666 = vadd.f32 %v1634, 1e-05
      %v1667 = vadd.f32 %v1635, 1e-05
      %v1668 = vadd.f32 %v1636, 1e-05
      %v1669 = vadd.f32 %v1637, 1e-05
      %v1670 = vadd.f32 %v1638, 1e-05
      %v1671 = vadd.f32 %v1639, 1e-05
      %v1672 = vadd.f32 %v1640, 1e-05
      %v1673 = vadd.f32 %v1641, 1e-05
      %v1674 = vadd.f32 %v1642, 1e-05
      %v1675 = vadd.f32 %v1643, 1e-05
      %v1676 = vadd.f32 %v1644, 1e-05
      %v1677 = vadd.f32 %v1645, 1e-05
      %v1678 = vadd.f32 %v1646, 1e-05
      %v1679 = vadd.f32 %v1647, 1e-05
      %v1680 = vadd.f32 %v1648, 1e-05
      %v1681 = vadd.f32 %v1649, 1e-05
      %v1682 = vadd.f32 %v1650, 1e-05
      %v1683 = vadd.f32 %v1651, 1e-05
      %v1684 = vadd.f32 %v1652, 1e-05
      %v1685 = vadd.f32 %v1653, 1e-05
      %v1686 = vadd.f32 %v1654, 1e-05
      %v1687 = vadd.f32 %v1655, 1e-05
      %v1688 = vadd.f32 %v1656, 1e-05
      %v1689 = vadd.f32 %v1657, 1e-05
      %v1690 = vadd.f32 %v1658, 1e-05
      %v1691 = vadd.f32 %v1659, 1e-05
      %v1692 = vadd.f32 %v1660, 1e-05
      %v1693 = vadd.f32 %v1661, 1e-05
      %v1694 = vadd.f32 %v1662, 1e-05
      %v1695 = vadd.f32 %v1663, 1e-05
      %v1696 = vadd.f32 %v1664, 1e-05
      %v1697 = vadd.f32 %v1665, 1e-05
      %v1698 = vrsqrt.pop %v1666
      %v1699 = vmul.f32 %v1698, %v1666
      %v1700 = vmul.f32 %v1699, %v1698
      %v1701 = vmul.f32 0.5, %v1700
      %v1702 = vsub.f32 1.5, %v1701
      %v1703 = vmul.f32 %v1698, %v1702
      %vm1704 = vweird.f32 %v1666
      %vm1705 = vweird.f32 %v1698
      %vm1706 = vmor %vm1704, %vm1705
      %v1707 = vsel %vm1706, %v1698, %v1703
      %v1708 = vrsqrt.pop %v1667
      %v1709 = vmul.f32 %v1708, %v1667
      %v1710 = vmul.f32 %v1709, %v1708
      %v1711 = vmul.f32 0.5, %v1710
      %v1712 = vsub.f32 1.5, %v1711
      %v1713 = vmul.f32 %v1708, %v1712
      %vm1714 = vweird.f32 %v1667
      %vm1715 = vweird.f32 %v1708
      %vm1716 = vmor %vm1714, %vm1715
      %v1717 = vsel %vm1716, %v1708, %v1713
      %v1718 = vrsqrt.pop %v1668
      %v1719 = vmul.f32 %v1718, %v1668
      %v1720 = vmul.f32 %v1719, %v1718
      %v1721 = vmul.f32 0.5, %v1720
      %v1722 = vsub.f32 1.5, %v1721
      %v1723 = vmul.f32 %v1718, %v1722
      %vm1724 = vweird.f32 %v1668
      %vm1725 = vweird.f32 %v1718
      %vm1726 = vmor %vm1724, %vm1725
      %v1727 = vsel %vm1726, %v1718, %v1723
      %v1728 = vrsqrt.pop %v1669
      %v1729 = vmul.f32 %v1728, %v1669
      %v1730 = vmul.f32 %v1729, %v1728
      %v1731 = vmul.f32 0.5, %v1730
      %v1732 = vsub.f32 1.5, %v1731
      %v1733 = vmul.f32 %v1728, %v1732
      %vm1734 = vweird.f32 %v1669
      %vm1735 = vweird.f32 %v1728
      %vm1736 = vmor %vm1734, %vm1735
      %v1737 = vsel %vm1736, %v1728, %v1733
      %v1738 = vrsqrt.pop %v1670
      %v1739 = vmul.f32 %v1738, %v1670
      %v1740 = vmul.f32 %v1739, %v1738
      %v1741 = vmul.f32 0.5, %v1740
      %v1742 = vsub.f32 1.5, %v1741
      %v1743 = vmul.f32 %v1738, %v1742
      %vm1744 = vweird.f32 %v1670
      %vm1745 = vweird.f32 %v1738
      %vm1746 = vmor %vm1744, %vm1745
      %v1747 = vsel %vm1746, %v1738, %v1743
      %v1748 = vrsqrt.pop %v1671
      %v1749 = vmul.f32 %v1748, %v1671
      %v1750 = vmul.f32 %v1749, %v1748
      %v1751 = vmul.f32 0.5, %v1750
      %v1752 = vsub.f32 1.5, %v1751
      %v1753 = vmul.f32 %v1748, %v1752
      %vm1754 = vweird.f32 %v1671
      %vm1755 = vweird.f32 %v1748
      %vm1756 = vmor %vm1754, %vm1755
      %v1757 = vsel %vm1756, %v1748, %v1753
      %v1758 = vrsqrt.pop %v1672
      %v1759 = vmul.f32 %v1758, %v1672
      %v1760 = vmul.f32 %v1759, %v1758
      %v1761 = vmul.f32 0.5, %v1760
      %v1762 = vsub.f32 1.5, %v1761
      %v1763 = vmul.f32 %v1758, %v1762
      %vm1764 = vweird.f32 %v1672
      %vm1765 = vweird.f32 %v1758
      %vm1766 = vmor %vm1764, %vm1765
      %v1767 = vsel %vm1766, %v1758, %v1763
      %v1768 = vrsqrt.pop %v1673
      %v1769 = vmul.f32 %v1768, %v1673
      %v1770 = vmul.f32 %v1769, %v1768
      %v1771 = vmul.f32 0.5, %v1770
      %v1772 = vsub.f32 1.5, %v1771
      %v1773 = vmul.f32 %v1768, %v1772
      %vm1774 = vweird.f32 %v1673
      %vm1775 = vweird.f32 %v1768
      %vm1776 = vmor %vm1774, %vm1775
      %v1777 = vsel %vm1776, %v1768, %v1773
      %v1778 = vrsqrt.pop %v1674
      %v1779 = vmul.f32 %v1778, %v1674
      %v1780 = vmul.f32 %v1779, %v1778
      %v1781 = vmul.f32 0.5, %v1780
      %v1782 = vsub.f32 1.5, %v1781
      %v1783 = vmul.f32 %v1778, %v1782
      %vm1784 = vweird.f32 %v1674
      %vm1785 = vweird.f32 %v1778
      %vm1786 = vmor %vm1784, %vm1785
      %v1787 = vsel %vm1786, %v1778, %v1783
      %v1788 = vrsqrt.pop %v1675
      %v1789 = vmul.f32 %v1788, %v1675
      %v1790 = vmul.f32 %v1789, %v1788
      %v1791 = vmul.f32 0.5, %v1790
      %v1792 = vsub.f32 1.5, %v1791
      %v1793 = vmul.f32 %v1788, %v1792
      %vm1794 = vweird.f32 %v1675
      %vm1795 = vweird.f32 %v1788
      %vm1796 = vmor %vm1794, %vm1795
      %v1797 = vsel %vm1796, %v1788, %v1793
      %v1798 = vrsqrt.pop %v1676
      %v1799 = vmul.f32 %v1798, %v1676
      %v1800 = vmul.f32 %v1799, %v1798
      %v1801 = vmul.f32 0.5, %v1800
      %v1802 = vsub.f32 1.5, %v1801
      %v1803 = vmul.f32 %v1798, %v1802
      %vm1804 = vweird.f32 %v1676
      %vm1805 = vweird.f32 %v1798
      %vm1806 = vmor %vm1804, %vm1805
      %v1807 = vsel %vm1806, %v1798, %v1803
      %v1808 = vrsqrt.pop %v1677
      %v1809 = vmul.f32 %v1808, %v1677
      %v1810 = vmul.f32 %v1809, %v1808
      %v1811 = vmul.f32 0.5, %v1810
      %v1812 = vsub.f32 1.5, %v1811
      %v1813 = vmul.f32 %v1808, %v1812
      %vm1814 = vweird.f32 %v1677
      %vm1815 = vweird.f32 %v1808
      %vm1816 = vmor %vm1814, %vm1815
      %v1817 = vsel %vm1816, %v1808, %v1813
      %v1818 = vrsqrt.pop %v1678
      %v1819 = vmul.f32 %v1818, %v1678
      %v1820 = vmul.f32 %v1819, %v1818
      %v1821 = vmul.f32 0.5, %v1820
      %v1822 = vsub.f32 1.5, %v1821
      %v1823 = vmul.f32 %v1818, %v1822
      %vm1824 = vweird.f32 %v1678
      %vm1825 = vweird.f32 %v1818
      %vm1826 = vmor %vm1824, %vm1825
      %v1827 = vsel %vm1826, %v1818, %v1823
      %v1828 = vrsqrt.pop %v1679
      %v1829 = vmul.f32 %v1828, %v1679
      %v1830 = vmul.f32 %v1829, %v1828
      %v1831 = vmul.f32 0.5, %v1830
      %v1832 = vsub.f32 1.5, %v1831
      %v1833 = vmul.f32 %v1828, %v1832
      %vm1834 = vweird.f32 %v1679
      %vm1835 = vweird.f32 %v1828
      %vm1836 = vmor %vm1834, %vm1835
      %v1837 = vsel %vm1836, %v1828, %v1833
      %v1838 = vrsqrt.pop %v1680
      %v1839 = vmul.f32 %v1838, %v1680
      %v1840 = vmul.f32 %v1839, %v1838
      %v1841 = vmul.f32 0.5, %v1840
      %v1842 = vsub.f32 1.5, %v1841
      %v1843 = vmul.f32 %v1838, %v1842
      %vm1844 = vweird.f32 %v1680
      %vm1845 = vweird.f32 %v1838
      %vm1846 = vmor %vm1844, %vm1845
      %v1847 = vsel %vm1846, %v1838, %v1843
      %v1848 = vrsqrt.pop %v1681
      %v1849 = vmul.f32 %v1848, %v1681
      %v1850 = vmul.f32 %v1849, %v1848
      %v1851 = vmul.f32 0.5, %v1850
      %v1852 = vsub.f32 1.5, %v1851
      %v1853 = vmul.f32 %v1848, %v1852
      %vm1854 = vweird.f32 %v1681
      %vm1855 = vweird.f32 %v1848
      %vm1856 = vmor %vm1854, %vm1855
      %v1857 = vsel %vm1856, %v1848, %v1853
      %v1858 = vrsqrt.pop %v1682
      %v1859 = vmul.f32 %v1858, %v1682
      %v1860 = vmul.f32 %v1859, %v1858
      %v1861 = vmul.f32 0.5, %v1860
      %v1862 = vsub.f32 1.5, %v1861
      %v1863 = vmul.f32 %v1858, %v1862
      %vm1864 = vweird.f32 %v1682
      %vm1865 = vweird.f32 %v1858
      %vm1866 = vmor %vm1864, %vm1865
      %v1867 = vsel %vm1866, %v1858, %v1863
      %v1868 = vrsqrt.pop %v1683
      %v1869 = vmul.f32 %v1868, %v1683
      %v1870 = vmul.f32 %v1869, %v1868
      %v1871 = vmul.f32 0.5, %v1870
      %v1872 = vsub.f32 1.5, %v1871
      %v1873 = vmul.f32 %v1868, %v1872
      %vm1874 = vweird.f32 %v1683
      %vm1875 = vweird.f32 %v1868
      %vm1876 = vmor %vm1874, %vm1875
      %v1877 = vsel %vm1876, %v1868, %v1873
      %v1878 = vrsqrt.pop %v1684
      %v1879 = vmul.f32 %v1878, %v1684
      %v1880 = vmul.f32 %v1879, %v1878
      %v1881 = vmul.f32 0.5, %v1880
      %v1882 = vsub.f32 1.5, %v1881
      %v1883 = vmul.f32 %v1878, %v1882
      %vm1884 = vweird.f32 %v1684
      %vm1885 = vweird.f32 %v1878
      %vm1886 = vmor %vm1884, %vm1885
      %v1887 = vsel %vm1886, %v1878, %v1883
      %v1888 = vrsqrt.pop %v1685
      %v1889 = vmul.f32 %v1888, %v1685
      %v1890 = vmul.f32 %v1889, %v1888
      %v1891 = vmul.f32 0.5, %v1890
      %v1892 = vsub.f32 1.5, %v1891
      %v1893 = vmul.f32 %v1888, %v1892
      %vm1894 = vweird.f32 %v1685
      %vm1895 = vweird.f32 %v1888
      %vm1896 = vmor %vm1894, %vm1895
      %v1897 = vsel %vm1896, %v1888, %v1893
      %v1898 = vrsqrt.pop %v1686
      %v1899 = vmul.f32 %v1898, %v1686
      %v1900 = vmul.f32 %v1899, %v1898
      %v1901 = vmul.f32 0.5, %v1900
      %v1902 = vsub.f32 1.5, %v1901
      %v1903 = vmul.f32 %v1898, %v1902
      %vm1904 = vweird.f32 %v1686
      %vm1905 = vweird.f32 %v1898
      %vm1906 = vmor %vm1904, %vm1905
      %v1907 = vsel %vm1906, %v1898, %v1903
      %v1908 = vrsqrt.pop %v1687
      %v1909 = vmul.f32 %v1908, %v1687
      %v1910 = vmul.f32 %v1909, %v1908
      %v1911 = vmul.f32 0.5, %v1910
      %v1912 = vsub.f32 1.5, %v1911
      %v1913 = vmul.f32 %v1908, %v1912
      %vm1914 = vweird.f32 %v1687
      %vm1915 = vweird.f32 %v1908
      %vm1916 = vmor %vm1914, %vm1915
      %v1917 = vsel %vm1916, %v1908, %v1913
      %v1918 = vrsqrt.pop %v1688
      %v1919 = vmul.f32 %v1918, %v1688
      %v1920 = vmul.f32 %v1919, %v1918
      %v1921 = vmul.f32 0.5, %v1920
      %v1922 = vsub.f32 1.5, %v1921
      %v1923 = vmul.f32 %v1918, %v1922
      %vm1924 = vweird.f32 %v1688
      %vm1925 = vweird.f32 %v1918
      %vm1926 = vmor %vm1924, %vm1925
      %v1927 = vsel %vm1926, %v1918, %v1923
      %v1928 = vrsqrt.pop %v1689
      %v1929 = vmul.f32 %v1928, %v1689
      %v1930 = vmul.f32 %v1929, %v1928
      %v1931 = vmul.f32 0.5, %v1930
      %v1932 = vsub.f32 1.5, %v1931
      %v1933 = vmul.f32 %v1928, %v1932
      %vm1934 = vweird.f32 %v1689
      %vm1935 = vweird.f32 %v1928
      %vm1936 = vmor %vm1934, %vm1935
      %v1937 = vsel %vm1936, %v1928, %v1933
      %v1938 = vrsqrt.pop %v1690
      %v1939 = vmul.f32 %v1938, %v1690
      %v1940 = vmul.f32 %v1939, %v1938
      %v1941 = vmul.f32 0.5, %v1940
      %v1942 = vsub.f32 1.5, %v1941
      %v1943 = vmul.f32 %v1938, %v1942
      %vm1944 = vweird.f32 %v1690
      %vm1945 = vweird.f32 %v1938
      %vm1946 = vmor %vm1944, %vm1945
      %v1947 = vsel %vm1946, %v1938, %v1943
      %v1948 = vrsqrt.pop %v1691
      %v1949 = vmul.f32 %v1948, %v1691
      %v1950 = vmul.f32 %v1949, %v1948
      %v1951 = vmul.f32 0.5, %v1950
      %v1952 = vsub.f32 1.5, %v1951
      %v1953 = vmul.f32 %v1948, %v1952
      %vm1954 = vweird.f32 %v1691
      %vm1955 = vweird.f32 %v1948
      %vm1956 = vmor %vm1954, %vm1955
      %v1957 = vsel %vm1956, %v1948, %v1953
      %v1958 = vrsqrt.pop %v1692
      %v1959 = vmul.f32 %v1958, %v1692
      %v1960 = vmul.f32 %v1959, %v1958
      %v1961 = vmul.f32 0.5, %v1960
      %v1962 = vsub.f32 1.5, %v1961
      %v1963 = vmul.f32 %v1958, %v1962
      %vm1964 = vweird.f32 %v1692
      %vm1965 = vweird.f32 %v1958
      %vm1966 = vmor %vm1964, %vm1965
      %v1967 = vsel %vm1966, %v1958, %v1963
      %v1968 = vrsqrt.pop %v1693
      %v1969 = vmul.f32 %v1968, %v1693
      %v1970 = vmul.f32 %v1969, %v1968
      %v1971 = vmul.f32 0.5, %v1970
      %v1972 = vsub.f32 1.5, %v1971
      %v1973 = vmul.f32 %v1968, %v1972
      %vm1974 = vweird.f32 %v1693
      %vm1975 = vweird.f32 %v1968
      %vm1976 = vmor %vm1974, %vm1975
      %v1977 = vsel %vm1976, %v1968, %v1973
      %v1978 = vrsqrt.pop %v1694
      %v1979 = vmul.f32 %v1978, %v1694
      %v1980 = vmul.f32 %v1979, %v1978
      %v1981 = vmul.f32 0.5, %v1980
      %v1982 = vsub.f32 1.5, %v1981
      %v1983 = vmul.f32 %v1978, %v1982
      %vm1984 = vweird.f32 %v1694
      %vm1985 = vweird.f32 %v1978
      %vm1986 = vmor %vm1984, %vm1985
      %v1987 = vsel %vm1986, %v1978, %v1983
      %v1988 = vrsqrt.pop %v1695
      %v1989 = vmul.f32 %v1988, %v1695
      %v1990 = vmul.f32 %v1989, %v1988
      %v1991 = vmul.f32 0.5, %v1990
      %v1992 = vsub.f32 1.5, %v1991
      %v1993 = vmul.f32 %v1988, %v1992
      %vm1994 = vweird.f32 %v1695
      %vm1995 = vweird.f32 %v1988
      %vm1996 = vmor %vm1994, %vm1995
      %v1997 = vsel %vm1996, %v1988, %v1993
      %v1998 = vrsqrt.pop %v1696
      %v1999 = vmul.f32 %v1998, %v1696
      %v2000 = vmul.f32 %v1999, %v1998
      %v2001 = vmul.f32 0.5, %v2000
      %v2002 = vsub.f32 1.5, %v2001
      %v2003 = vmul.f32 %v1998, %v2002
      %vm2004 = vweird.f32 %v1696
      %vm2005 = vweird.f32 %v1998
      %vm2006 = vmor %vm2004, %vm2005
      %v2007 = vsel %vm2006, %v1998, %v2003
      %v2008 = vrsqrt.pop %v1697
      %v2009 = vmul.f32 %v2008, %v1697
      %v2010 = vmul.f32 %v2009, %v2008
      %v2011 = vmul.f32 0.5, %v2010
      %v2012 = vsub.f32 1.5, %v2011
      %v2013 = vmul.f32 %v2008, %v2012
      %vm2014 = vweird.f32 %v1697
      %vm2015 = vweird.f32 %v2008
      %vm2016 = vmor %vm2014, %vm2015
      %v2017 = vsel %vm2016, %v2008, %v2013
      %v2018 = vmul.f32 %v1506, %v1707
      %v2019 = vmul.f32 %v1507, %v1717
      %v2020 = vmul.f32 %v1508, %v1727
      %v2021 = vmul.f32 %v1509, %v1737
      %v2022 = vmul.f32 %v1510, %v1747
      %v2023 = vmul.f32 %v1511, %v1757
      %v2024 = vmul.f32 %v1512, %v1767
      %v2025 = vmul.f32 %v1513, %v1777
      %v2026 = vmul.f32 %v1514, %v1787
      %v2027 = vmul.f32 %v1515, %v1797
      %v2028 = vmul.f32 %v1516, %v1807
      %v2029 = vmul.f32 %v1517, %v1817
      %v2030 = vmul.f32 %v1518, %v1827
      %v2031 = vmul.f32 %v1519, %v1837
      %v2032 = vmul.f32 %v1520, %v1847
      %v2033 = vmul.f32 %v1521, %v1857
      %v2034 = vmul.f32 %v1522, %v1867
      %v2035 = vmul.f32 %v1523, %v1877
      %v2036 = vmul.f32 %v1524, %v1887
      %v2037 = vmul.f32 %v1525, %v1897
      %v2038 = vmul.f32 %v1526, %v1907
      %v2039 = vmul.f32 %v1527, %v1917
      %v2040 = vmul.f32 %v1528, %v1927
      %v2041 = vmul.f32 %v1529, %v1937
      %v2042 = vmul.f32 %v1530, %v1947
      %v2043 = vmul.f32 %v1531, %v1957
      %v2044 = vmul.f32 %v1532, %v1967
      %v2045 = vmul.f32 %v1533, %v1977
      %v2046 = vmul.f32 %v1534, %v1987
      %v2047 = vmul.f32 %v1535, %v1997
      %v2048 = vmul.f32 %v1536, %v2007
      %v2049 = vmul.f32 %v1537, %v2017
      %v2050 = vperm.slane %v257, 4
      %v2051 = vmul.f32 %v2018, %v2050
      %v2052 = vmul.f32 %v2019, %v2050
      %v2053 = vmul.f32 %v2020, %v2050
      %v2054 = vmul.f32 %v2021, %v2050
      %v2055 = vmul.f32 %v2022, %v2050
      %v2056 = vmul.f32 %v2023, %v2050
      %v2057 = vmul.f32 %v2024, %v2050
      %v2058 = vmul.f32 %v2025, %v2050
      %v2059 = vmul.f32 %v2026, %v2050
      %v2060 = vmul.f32 %v2027, %v2050
      %v2061 = vmul.f32 %v2028, %v2050
      %v2062 = vmul.f32 %v2029, %v2050
      %v2063 = vmul.f32 %v2030, %v2050
      %v2064 = vmul.f32 %v2031, %v2050
      %v2065 = vmul.f32 %v2032, %v2050
      %v2066 = vmul.f32 %v2033, %v2050
      %v2067 = vmul.f32 %v2034, %v2050
      %v2068 = vmul.f32 %v2035, %v2050
      %v2069 = vmul.f32 %v2036, %v2050
      %v2070 = vmul.f32 %v2037, %v2050
      %v2071 = vmul.f32 %v2038, %v2050
      %v2072 = vmul.f32 %v2039, %v2050
      %v2073 = vmul.f32 %v2040, %v2050
      %v2074 = vmul.f32 %v2041, %v2050
      %v2075 = vmul.f32 %v2042, %v2050
      %v2076 = vmul.f32 %v2043, %v2050
      %v2077 = vmul.f32 %v2044, %v2050
      %v2078 = vmul.f32 %v2045, %v2050
      %v2079 = vmul.f32 %v2046, %v2050
      %v2080 = vmul.f32 %v2047, %v2050
      %v2081 = vmul.f32 %v2048, %v2050
      %v2082 = vmul.f32 %v2049, %v2050
      %v2083 = vperm.slane %v257, 5
      %v2084 = vadd.f32 %v2051, %v2083
      %v2085 = vadd.f32 %v2052, %v2083
      %v2086 = vadd.f32 %v2053, %v2083
      %v2087 = vadd.f32 %v2054, %v2083
      %v2088 = vadd.f32 %v2055, %v2083
      %v2089 = vadd.f32 %v2056, %v2083
      %v2090 = vadd.f32 %v2057, %v2083
      %v2091 = vadd.f32 %v2058, %v2083
      %v2092 = vadd.f32 %v2059, %v2083
      %v2093 = vadd.f32 %v2060, %v2083
      %v2094 = vadd.f32 %v2061, %v2083
      %v2095 = vadd.f32 %v2062, %v2083
      %v2096 = vadd.f32 %v2063, %v2083
      %v2097 = vadd.f32 %v2064, %v2083
      %v2098 = vadd.f32 %v2065, %v2083
      %v2099 = vadd.f32 %v2066, %v2083
      %v2100 = vadd.f32 %v2067, %v2083
      %v2101 = vadd.f32 %v2068, %v2083
      %v2102 = vadd.f32 %v2069, %v2083
      %v2103 = vadd.f32 %v2070, %v2083
      %v2104 = vadd.f32 %v2071, %v2083
      %v2105 = vadd.f32 %v2072, %v2083
      %v2106 = vadd.f32 %v2073, %v2083
      %v2107 = vadd.f32 %v2074, %v2083
      %v2108 = vadd.f32 %v2075, %v2083
      %v2109 = vadd.f32 %v2076, %v2083
      %v2110 = vadd.f32 %v2077, %v2083
      %v2111 = vadd.f32 %v2078, %v2083
      %v2112 = vadd.f32 %v2079, %v2083
      %v2113 = vadd.f32 %v2080, %v2083
      %v2114 = vadd.f32 %v2081, %v2083
      %v2115 = vadd.f32 %v2082, %v2083
      %v2116 = vmax.f32 %v2084, 0.0
      %v2117 = vmax.f32 %v2085, 0.0
      %v2118 = vmax.f32 %v2086, 0.0
      %v2119 = vmax.f32 %v2087, 0.0
      %v2120 = vmax.f32 %v2088, 0.0
      %v2121 = vmax.f32 %v2089, 0.0
      %v2122 = vmax.f32 %v2090, 0.0
      %v2123 = vmax.f32 %v2091, 0.0
      %v2124 = vmax.f32 %v2092, 0.0
      %v2125 = vmax.f32 %v2093, 0.0
      %v2126 = vmax.f32 %v2094, 0.0
      %v2127 = vmax.f32 %v2095, 0.0
      %v2128 = vmax.f32 %v2096, 0.0
      %v2129 = vmax.f32 %v2097, 0.0
      %v2130 = vmax.f32 %v2098, 0.0
      %v2131 = vmax.f32 %v2099, 0.0
      %v2132 = vmax.f32 %v2100, 0.0
      %v2133 = vmax.f32 %v2101, 0.0
      %v2134 = vmax.f32 %v2102, 0.0
      %v2135 = vmax.f32 %v2103, 0.0
      %v2136 = vmax.f32 %v2104, 0.0
      %v2137 = vmax.f32 %v2105, 0.0
      %v2138 = vmax.f32 %v2106, 0.0
      %v2139 = vmax.f32 %v2107, 0.0
      %v2140 = vmax.f32 %v2108, 0.0
      %v2141 = vmax.f32 %v2109, 0.0
      %v2142 = vmax.f32 %v2110, 0.0
      %v2143 = vmax.f32 %v2111, 0.0
      %v2144 = vmax.f32 %v2112, 0.0
      %v2145 = vmax.f32 %v2113, 0.0
      %v2146 = vmax.f32 %v2114, 0.0
      %v2147 = vmax.f32 %v2115, 0.0
      %v2148 = vld [vmem:[%s3] sm:$0xff]
      %v2149 = vld [vmem:[%s3 + $0x8] sm:$0xff]
      %v2150 = vld [vmem:[%s3 + $0x10] sm:$0xff]
      %v2151 = vld [vmem:[%s3 + $0x18] sm:$0xff]
      %v2152 = vld [vmem:[%s3 + $0x20] sm:$0xff]
      %v2153 = vld [vmem:[%s3 + $0x28] sm:$0xff]
      %v2154 = vld [vmem:[%s3 + $0x30] sm:$0xff]
      %v2155 = vld [vmem:[%s3 + $0x38] sm:$0xff]
      %v2156 = vld [vmem:[%s3 + $0x40] sm:$0xff]
      %v2157 = vld [vmem:[%s3 + $0x48] sm:$0xff]
      %v2158 = vld [vmem:[%s3 + $0x50] sm:$0xff]
      %v2159 = vld [vmem:[%s3 + $0x58] sm:$0xff]
      %v2160 = vld [vmem:[%s3 + $0x60] sm:$0xff]
      %v2161 = vld [vmem:[%s3 + $0x68] sm:$0xff]
      %v2162 = vld [vmem:[%s3 + $0x70] sm:$0xff]
      %v2163 = vld [vmem:[%s3 + $0x78] sm:$0xff]
      %v2164 = vperm.slane %v257, 6
      %2165 = vmatpush.msra.mxu0 %v2163
      %2166 = vmatpush.msra.mxu0 %v2162
      %2167 = vmatpush.msra.mxu0 %v2161
      %2168 = vmatpush.msra.mxu0 %v2160
      %2169 = vmatpush.msra.mxu0 %v2159
      %2170 = vmatpush.msra.mxu0 %v2158
      %2171 = vmatpush.msra.mxu0 %v2157
      %2172 = vmatpush.msra.mxu0 %v2156
      %2173 = vmatpush.msra.mxu0 %v2155
      %2174 = vmatpush.msra.mxu0 %v2154
      %2175 = vmatpush.msra.mxu0 %v2153
      %2176 = vmatpush.msra.mxu0 %v2152
      %2177 = vmatpush.msra.mxu0 %v2151
      %2178 = vmatpush.msra.mxu0 %v2150
      %2179 = vmatpush.msra.mxu0 %v2149
      %2180 = vmatpush.msra.mxu0 %v2148
      %2181 = vmatmul.f32.gmra.mxu0 %v2116
      %v2182 = vpop.f32.mrf.mxu0
      %v2183 = vadd.f32 %v2164, %v2182
      %2184 = vmatmul.f32.gmra.mxu0 %v2117
      %v2185 = vpop.f32.mrf.mxu0
      %v2186 = vadd.f32 %v2164, %v2185
      %2187 = vmatmul.f32.gmra.mxu0 %v2118
      %v2188 = vpop.f32.mrf.mxu0
      %v2189 = vadd.f32 %v2164, %v2188
      %2190 = vmatmul.f32.gmra.mxu0 %v2119
      %v2191 = vpop.f32.mrf.mxu0
      %v2192 = vadd.f32 %v2164, %v2191
      %2193 = vmatmul.f32.gmra.mxu0 %v2120
      %v2194 = vpop.f32.mrf.mxu0
      %v2195 = vadd.f32 %v2164, %v2194
      %2196 = vmatmul.f32.gmra.mxu0 %v2121
      %v2197 = vpop.f32.mrf.mxu0
      %v2198 = vadd.f32 %v2164, %v2197
      %2199 = vmatmul.f32.gmra.mxu0 %v2122
      %v2200 = vpop.f32.mrf.mxu0
      %v2201 = vadd.f32 %v2164, %v2200
      %2202 = vmatmul.f32.gmra.mxu0 %v2123
      %v2203 = vpop.f32.mrf.mxu0
      %v2204 = vadd.f32 %v2164, %v2203
      %2205 = vmatmul.f32.gmra.mxu0 %v2124
      %v2206 = vpop.f32.mrf.mxu0
      %v2207 = vadd.f32 %v2164, %v2206
      %2208 = vmatmul.f32.gmra.mxu0 %v2125
      %v2209 = vpop.f32.mrf.mxu0
      %v2210 = vadd.f32 %v2164, %v2209
      %2211 = vmatmul.f32.gmra.mxu0 %v2126
      %v2212 = vpop.f32.mrf.mxu0
      %v2213 = vadd.f32 %v2164, %v2212
      %2214 = vmatmul.f32.gmra.mxu0 %v2127
      %v2215 = vpop.f32.mrf.mxu0
      %v2216 = vadd.f32 %v2164, %v2215
      %2217 = vmatmul.f32.gmra.mxu0 %v2128
      %v2218 = vpop.f32.mrf.mxu0
      %v2219 = vadd.f32 %v2164, %v2218
      %2220 = vmatmul.f32.gmra.mxu0 %v2129
      %v2221 = vpop.f32.mrf.mxu0
      %v2222 = vadd.f32 %v2164, %v2221
      %2223 = vmatmul.f32.gmra.mxu0 %v2130
      %v2224 = vpop.f32.mrf.mxu0
      %v2225 = vadd.f32 %v2164, %v2224
      %2226 = vmatmul.f32.gmra.mxu0 %v2131
      %v2227 = vpop.f32.mrf.mxu0
      %v2228 = vadd.f32 %v2164, %v2227
      %2229 = vmatmul.f32.gmra.mxu0 %v2132
      %v2230 = vpop.f32.mrf.mxu0
      %v2231 = vadd.f32 %v2164, %v2230
      %2232 = vmatmul.f32.gmra.mxu0 %v2133
      %v2233 = vpop.f32.mrf.mxu0
      %v2234 = vadd.f32 %v2164, %v2233
      %2235 = vmatmul.f32.gmra.mxu0 %v2134
      %v2236 = vpop.f32.mrf.mxu0
      %v2237 = vadd.f32 %v2164, %v2236
      %2238 = vmatmul.f32.gmra.mxu0 %v2135
      %v2239 = vpop.f32.mrf.mxu0
      %v2240 = vadd.f32 %v2164, %v2239
      %2241 = vmatmul.f32.gmra.mxu0 %v2136
      %v2242 = vpop.f32.mrf.mxu0
      %v2243 = vadd.f32 %v2164, %v2242
      %2244 = vmatmul.f32.gmra.mxu0 %v2137
      %v2245 = vpop.f32.mrf.mxu0
      %v2246 = vadd.f32 %v2164, %v2245
      %2247 = vmatmul.f32.gmra.mxu0 %v2138
      %v2248 = vpop.f32.mrf.mxu0
      %v2249 = vadd.f32 %v2164, %v2248
      %2250 = vmatmul.f32.gmra.mxu0 %v2139
      %v2251 = vpop.f32.mrf.mxu0
      %v2252 = vadd.f32 %v2164, %v2251
      %2253 = vmatmul.f32.gmra.mxu0 %v2140
      %v2254 = vpop.f32.mrf.mxu0
      %v2255 = vadd.f32 %v2164, %v2254
      %2256 = vmatmul.f32.gmra.mxu0 %v2141
      %v2257 = vpop.f32.mrf.mxu0
      %v2258 = vadd.f32 %v2164, %v2257
      %2259 = vmatmul.f32.gmra.mxu0 %v2142
      %v2260 = vpop.f32.mrf.mxu0
      %v2261 = vadd.f32 %v2164, %v2260
      %2262 = vmatmul.f32.gmra.mxu0 %v2143
      %v2263 = vpop.f32.mrf.mxu0
      %v2264 = vadd.f32 %v2164, %v2263
      %2265 = vmatmul.f32.gmra.mxu0 %v2144
      %v2266 = vpop.f32.mrf.mxu0
      %v2267 = vadd.f32 %v2164, %v2266
      %2268 = vmatmul.f32.gmra.mxu0 %v2145
      %v2269 = vpop.f32.mrf.mxu0
      %v2270 = vadd.f32 %v2164, %v2269
      %2271 = vmatmul.f32.gmra.mxu0 %v2146
      %v2272 = vpop.f32.mrf.mxu0
      %v2273 = vadd.f32 %v2164, %v2272
      %2274 = vmatmul.f32.gmra.mxu0 %v2147
      %v2275 = vpop.f32.mrf.mxu0
      %v2276 = vadd.f32 %v2164, %v2275
      %2277 = vdwg.mxu0
      %2278 = vadd.xlane.f32.xlu0 %v2183
      %v2279 = vpop.xlane.xlu0 %2278
      %2280 = vadd.xlane.f32.xlu0 %v2186
      %v2281 = vpop.xlane.xlu0 %2280
      %2282 = vadd.xlane.f32.xlu0 %v2189
      %v2283 = vpop.xlane.xlu0 %2282
      %2284 = vadd.xlane.f32.xlu0 %v2192
      %v2285 = vpop.xlane.xlu0 %2284
      %2286 = vadd.xlane.f32.xlu0 %v2195
      %v2287 = vpop.xlane.xlu0 %2286
      %2288 = vadd.xlane.f32.xlu0 %v2198
      %v2289 = vpop.xlane.xlu0 %2288
      %2290 = vadd.xlane.f32.xlu0 %v2201
      %v2291 = vpop.xlane.xlu0 %2290
      %2292 = vadd.xlane.f32.xlu0 %v2204
      %v2293 = vpop.xlane.xlu0 %2292
      %2294 = vadd.xlane.f32.xlu0 %v2207
      %v2295 = vpop.xlane.xlu0 %2294
      %2296 = vadd.xlane.f32.xlu0 %v2210
      %v2297 = vpop.xlane.xlu0 %2296
      %2298 = vadd.xlane.f32.xlu0 %v2213
      %v2299 = vpop.xlane.xlu0 %2298
      %2300 = vadd.xlane.f32.xlu0 %v2216
      %v2301 = vpop.xlane.xlu0 %2300
      %2302 = vadd.xlane.f32.xlu0 %v2219
      %v2303 = vpop.xlane.xlu0 %2302
      %2304 = vadd.xlane.f32.xlu0 %v2222
      %v2305 = vpop.xlane.xlu0 %2304
      %2306 = vadd.xlane.f32.xlu0 %v2225
      %v2307 = vpop.xlane.xlu0 %2306
      %2308 = vadd.xlane.f32.xlu0 %v2228
      %v2309 = vpop.xlane.xlu0 %2308
      %2310 = vadd.xlane.f32.xlu0 %v2231
      %v2311 = vpop.xlane.xlu0 %2310
      %2312 = vadd.xlane.f32.xlu0 %v2234
      %v2313 = vpop.xlane.xlu0 %2312
      %2314 = vadd.xlane.f32.xlu0 %v2237
      %v2315 = vpop.xlane.xlu0 %2314
      %2316 = vadd.xlane.f32.xlu0 %v2240
      %v2317 = vpop.xlane.xlu0 %2316
      %2318 = vadd.xlane.f32.xlu0 %v2243
      %v2319 = vpop.xlane.xlu0 %2318
      %2320 = vadd.xlane.f32.xlu0 %v2246
      %v2321 = vpop.xlane.xlu0 %2320
      %2322 = vadd.xlane.f32.xlu0 %v2249
      %v2323 = vpop.xlane.xlu0 %2322
      %2324 = vadd.xlane.f32.xlu0 %v2252
      %v2325 = vpop.xlane.xlu0 %2324
      %2326 = vadd.xlane.f32.xlu0 %v2255
      %v2327 = vpop.xlane.xlu0 %2326
      %2328 = vadd.xlane.f32.xlu0 %v2258
      %v2329 = vpop.xlane.xlu0 %2328
      %2330 = vadd.xlane.f32.xlu0 %v2261
      %v2331 = vpop.xlane.xlu0 %2330
      %2332 = vadd.xlane.f32.xlu0 %v2264
      %v2333 = vpop.xlane.xlu0 %2332
      %2334 = vadd.xlane.f32.xlu0 %v2267
      %v2335 = vpop.xlane.xlu0 %2334
      %2336 = vadd.xlane.f32.xlu0 %v2270
      %v2337 = vpop.xlane.xlu0 %2336
      %2338 = vadd.xlane.f32.xlu0 %v2273
      %v2339 = vpop.xlane.xlu0 %2338
      %2340 = vadd.xlane.f32.xlu0 %v2276
      %v2341 = vpop.xlane.xlu0 %2340
      %v2342 = vmul.f32 %v2279, 0.125
      %v2343 = vmul.f32 %v2281, 0.125
      %v2344 = vmul.f32 %v2283, 0.125
      %v2345 = vmul.f32 %v2285, 0.125
      %v2346 = vmul.f32 %v2287, 0.125
      %v2347 = vmul.f32 %v2289, 0.125
      %v2348 = vmul.f32 %v2291, 0.125
      %v2349 = vmul.f32 %v2293, 0.125
      %v2350 = vmul.f32 %v2295, 0.125
      %v2351 = vmul.f32 %v2297, 0.125
      %v2352 = vmul.f32 %v2299, 0.125
      %v2353 = vmul.f32 %v2301, 0.125
      %v2354 = vmul.f32 %v2303, 0.125
      %v2355 = vmul.f32 %v2305, 0.125
      %v2356 = vmul.f32 %v2307, 0.125
      %v2357 = vmul.f32 %v2309, 0.125
      %v2358 = vmul.f32 %v2311, 0.125
      %v2359 = vmul.f32 %v2313, 0.125
      %v2360 = vmul.f32 %v2315, 0.125
      %v2361 = vmul.f32 %v2317, 0.125
      %v2362 = vmul.f32 %v2319, 0.125
      %v2363 = vmul.f32 %v2321, 0.125
      %v2364 = vmul.f32 %v2323, 0.125
      %v2365 = vmul.f32 %v2325, 0.125
      %v2366 = vmul.f32 %v2327, 0.125
      %v2367 = vmul.f32 %v2329, 0.125
      %v2368 = vmul.f32 %v2331, 0.125
      %v2369 = vmul.f32 %v2333, 0.125
      %v2370 = vmul.f32 %v2335, 0.125
      %v2371 = vmul.f32 %v2337, 0.125
      %v2372 = vmul.f32 %v2339, 0.125
      %v2373 = vmul.f32 %v2341, 0.125
      %v2374 = vsub.f32 %v2183, %v2342
      %v2375 = vsub.f32 %v2186, %v2343
      %v2376 = vsub.f32 %v2189, %v2344
      %v2377 = vsub.f32 %v2192, %v2345
      %v2378 = vsub.f32 %v2195, %v2346
      %v2379 = vsub.f32 %v2198, %v2347
      %v2380 = vsub.f32 %v2201, %v2348
      %v2381 = vsub.f32 %v2204, %v2349
      %v2382 = vsub.f32 %v2207, %v2350
      %v2383 = vsub.f32 %v2210, %v2351
      %v2384 = vsub.f32 %v2213, %v2352
      %v2385 = vsub.f32 %v2216, %v2353
      %v2386 = vsub.f32 %v2219, %v2354
      %v2387 = vsub.f32 %v2222, %v2355
      %v2388 = vsub.f32 %v2225, %v2356
      %v2389 = vsub.f32 %v2228, %v2357
      %v2390 = vsub.f32 %v2231, %v2358
      %v2391 = vsub.f32 %v2234, %v2359
      %v2392 = vsub.f32 %v2237, %v2360
      %v2393 = vsub.f32 %v2240, %v2361
      %v2394 = vsub.f32 %v2243, %v2362
      %v2395 = vsub.f32 %v2246, %v2363
      %v2396 = vsub.f32 %v2249, %v2364
      %v2397 = vsub.f32 %v2252, %v2365
      %v2398 = vsub.f32 %v2255, %v2366
      %v2399 = vsub.f32 %v2258, %v2367
      %v2400 = vsub.f32 %v2261, %v2368
      %v2401 = vsub.f32 %v2264, %v2369
      %v2402 = vsub.f32 %v2267, %v2370
      %v2403 = vsub.f32 %v2270, %v2371
      %v2404 = vsub.f32 %v2273, %v2372
      %v2405 = vsub.f32 %v2276, %v2373
      %vm2406 = vcmp.lt.s32.totalorder %v1504, 8
      %v2407 = vsel %vm2406, %v2374, 0.0
      %v2408 = vsel %vm2406, %v2375, 0.0
      %v2409 = vsel %vm2406, %v2376, 0.0
      %v2410 = vsel %vm2406, %v2377, 0.0
      %v2411 = vsel %vm2406, %v2378, 0.0
      %v2412 = vsel %vm2406, %v2379, 0.0
      %v2413 = vsel %vm2406, %v2380, 0.0
      %v2414 = vsel %vm2406, %v2381, 0.0
      %v2415 = vsel %vm2406, %v2382, 0.0
      %v2416 = vsel %vm2406, %v2383, 0.0
      %v2417 = vsel %vm2406, %v2384, 0.0
      %v2418 = vsel %vm2406, %v2385, 0.0
      %v2419 = vsel %vm2406, %v2386, 0.0
      %v2420 = vsel %vm2406, %v2387, 0.0
      %v2421 = vsel %vm2406, %v2388, 0.0
      %v2422 = vsel %vm2406, %v2389, 0.0
      %v2423 = vsel %vm2406, %v2390, 0.0
      %v2424 = vsel %vm2406, %v2391, 0.0
      %v2425 = vsel %vm2406, %v2392, 0.0
      %v2426 = vsel %vm2406, %v2393, 0.0
      %v2427 = vsel %vm2406, %v2394, 0.0
      %v2428 = vsel %vm2406, %v2395, 0.0
      %v2429 = vsel %vm2406, %v2396, 0.0
      %v2430 = vsel %vm2406, %v2397, 0.0
      %v2431 = vsel %vm2406, %v2398, 0.0
      %v2432 = vsel %vm2406, %v2399, 0.0
      %v2433 = vsel %vm2406, %v2400, 0.0
      %v2434 = vsel %vm2406, %v2401, 0.0
      %v2435 = vsel %vm2406, %v2402, 0.0
      %v2436 = vsel %vm2406, %v2403, 0.0
      %v2437 = vsel %vm2406, %v2404, 0.0
      %v2438 = vsel %vm2406, %v2405, 0.0
      %v2439 = vmul.f32 %v2407, %v2407
      %v2440 = vmul.f32 %v2408, %v2408
      %v2441 = vmul.f32 %v2409, %v2409
      %v2442 = vmul.f32 %v2410, %v2410
      %v2443 = vmul.f32 %v2411, %v2411
      %v2444 = vmul.f32 %v2412, %v2412
      %v2445 = vmul.f32 %v2413, %v2413
      %v2446 = vmul.f32 %v2414, %v2414
      %v2447 = vmul.f32 %v2415, %v2415
      %v2448 = vmul.f32 %v2416, %v2416
      %v2449 = vmul.f32 %v2417, %v2417
      %v2450 = vmul.f32 %v2418, %v2418
      %v2451 = vmul.f32 %v2419, %v2419
      %v2452 = vmul.f32 %v2420, %v2420
      %v2453 = vmul.f32 %v2421, %v2421
      %v2454 = vmul.f32 %v2422, %v2422
      %v2455 = vmul.f32 %v2423, %v2423
      %v2456 = vmul.f32 %v2424, %v2424
      %v2457 = vmul.f32 %v2425, %v2425
      %v2458 = vmul.f32 %v2426, %v2426
      %v2459 = vmul.f32 %v2427, %v2427
      %v2460 = vmul.f32 %v2428, %v2428
      %v2461 = vmul.f32 %v2429, %v2429
      %v2462 = vmul.f32 %v2430, %v2430
      %v2463 = vmul.f32 %v2431, %v2431
      %v2464 = vmul.f32 %v2432, %v2432
      %v2465 = vmul.f32 %v2433, %v2433
      %v2466 = vmul.f32 %v2434, %v2434
      %v2467 = vmul.f32 %v2435, %v2435
      %v2468 = vmul.f32 %v2436, %v2436
      %v2469 = vmul.f32 %v2437, %v2437
      %v2470 = vmul.f32 %v2438, %v2438
      %2471 = vadd.xlane.f32.xlu0 %v2439
      %v2472 = vpop.xlane.xlu0 %2471
      %2473 = vadd.xlane.f32.xlu0 %v2440
      %v2474 = vpop.xlane.xlu0 %2473
      %2475 = vadd.xlane.f32.xlu0 %v2441
      %v2476 = vpop.xlane.xlu0 %2475
      %2477 = vadd.xlane.f32.xlu0 %v2442
      %v2478 = vpop.xlane.xlu0 %2477
      %2479 = vadd.xlane.f32.xlu0 %v2443
      %v2480 = vpop.xlane.xlu0 %2479
      %2481 = vadd.xlane.f32.xlu0 %v2444
      %v2482 = vpop.xlane.xlu0 %2481
      %2483 = vadd.xlane.f32.xlu0 %v2445
      %v2484 = vpop.xlane.xlu0 %2483
      %2485 = vadd.xlane.f32.xlu0 %v2446
      %v2486 = vpop.xlane.xlu0 %2485
      %2487 = vadd.xlane.f32.xlu0 %v2447
      %v2488 = vpop.xlane.xlu0 %2487
      %2489 = vadd.xlane.f32.xlu0 %v2448
      %v2490 = vpop.xlane.xlu0 %2489
      %2491 = vadd.xlane.f32.xlu0 %v2449
      %v2492 = vpop.xlane.xlu0 %2491
      %2493 = vadd.xlane.f32.xlu0 %v2450
      %v2494 = vpop.xlane.xlu0 %2493
      %2495 = vadd.xlane.f32.xlu0 %v2451
      %v2496 = vpop.xlane.xlu0 %2495
      %2497 = vadd.xlane.f32.xlu0 %v2452
      %v2498 = vpop.xlane.xlu0 %2497
      %2499 = vadd.xlane.f32.xlu0 %v2453
      %v2500 = vpop.xlane.xlu0 %2499
      %2501 = vadd.xlane.f32.xlu0 %v2454
      %v2502 = vpop.xlane.xlu0 %2501
      %2503 = vadd.xlane.f32.xlu0 %v2455
      %v2504 = vpop.xlane.xlu0 %2503
      %2505 = vadd.xlane.f32.xlu0 %v2456
      %v2506 = vpop.xlane.xlu0 %2505
      %2507 = vadd.xlane.f32.xlu0 %v2457
      %v2508 = vpop.xlane.xlu0 %2507
      %2509 = vadd.xlane.f32.xlu0 %v2458
      %v2510 = vpop.xlane.xlu0 %2509
      %2511 = vadd.xlane.f32.xlu0 %v2459
      %v2512 = vpop.xlane.xlu0 %2511
      %2513 = vadd.xlane.f32.xlu0 %v2460
      %v2514 = vpop.xlane.xlu0 %2513
      %2515 = vadd.xlane.f32.xlu0 %v2461
      %v2516 = vpop.xlane.xlu0 %2515
      %2517 = vadd.xlane.f32.xlu0 %v2462
      %v2518 = vpop.xlane.xlu0 %2517
      %2519 = vadd.xlane.f32.xlu0 %v2463
      %v2520 = vpop.xlane.xlu0 %2519
      %2521 = vadd.xlane.f32.xlu0 %v2464
      %v2522 = vpop.xlane.xlu0 %2521
      %2523 = vadd.xlane.f32.xlu0 %v2465
      %v2524 = vpop.xlane.xlu0 %2523
      %2525 = vadd.xlane.f32.xlu0 %v2466
      %v2526 = vpop.xlane.xlu0 %2525
      %2527 = vadd.xlane.f32.xlu0 %v2467
      %v2528 = vpop.xlane.xlu0 %2527
      %2529 = vadd.xlane.f32.xlu0 %v2468
      %v2530 = vpop.xlane.xlu0 %2529
      %2531 = vadd.xlane.f32.xlu0 %v2469
      %v2532 = vpop.xlane.xlu0 %2531
      %2533 = vadd.xlane.f32.xlu0 %v2470
      %v2534 = vpop.xlane.xlu0 %2533
      %v2535 = vmul.f32 %v2472, 0.125
      %v2536 = vmul.f32 %v2474, 0.125
      %v2537 = vmul.f32 %v2476, 0.125
      %v2538 = vmul.f32 %v2478, 0.125
      %v2539 = vmul.f32 %v2480, 0.125
      %v2540 = vmul.f32 %v2482, 0.125
      %v2541 = vmul.f32 %v2484, 0.125
      %v2542 = vmul.f32 %v2486, 0.125
      %v2543 = vmul.f32 %v2488, 0.125
      %v2544 = vmul.f32 %v2490, 0.125
      %v2545 = vmul.f32 %v2492, 0.125
      %v2546 = vmul.f32 %v2494, 0.125
      %v2547 = vmul.f32 %v2496, 0.125
      %v2548 = vmul.f32 %v2498, 0.125
      %v2549 = vmul.f32 %v2500, 0.125
      %v2550 = vmul.f32 %v2502, 0.125
      %v2551 = vmul.f32 %v2504, 0.125
      %v2552 = vmul.f32 %v2506, 0.125
      %v2553 = vmul.f32 %v2508, 0.125
      %v2554 = vmul.f32 %v2510, 0.125
      %v2555 = vmul.f32 %v2512, 0.125
      %v2556 = vmul.f32 %v2514, 0.125
      %v2557 = vmul.f32 %v2516, 0.125
      %v2558 = vmul.f32 %v2518, 0.125
      %v2559 = vmul.f32 %v2520, 0.125
      %v2560 = vmul.f32 %v2522, 0.125
      %v2561 = vmul.f32 %v2524, 0.125
      %v2562 = vmul.f32 %v2526, 0.125
      %v2563 = vmul.f32 %v2528, 0.125
      %v2564 = vmul.f32 %v2530, 0.125
      %v2565 = vmul.f32 %v2532, 0.125
      %v2566 = vmul.f32 %v2534, 0.125
      %v2567 = vadd.f32 %v2535, 1e-05
      %v2568 = vadd.f32 %v2536, 1e-05
      %v2569 = vadd.f32 %v2537, 1e-05
      %v2570 = vadd.f32 %v2538, 1e-05
      %v2571 = vadd.f32 %v2539, 1e-05
      %v2572 = vadd.f32 %v2540, 1e-05
      %v2573 = vadd.f32 %v2541, 1e-05
      %v2574 = vadd.f32 %v2542, 1e-05
      %v2575 = vadd.f32 %v2543, 1e-05
      %v2576 = vadd.f32 %v2544, 1e-05
      %v2577 = vadd.f32 %v2545, 1e-05
      %v2578 = vadd.f32 %v2546, 1e-05
      %v2579 = vadd.f32 %v2547, 1e-05
      %v2580 = vadd.f32 %v2548, 1e-05
      %v2581 = vadd.f32 %v2549, 1e-05
      %v2582 = vadd.f32 %v2550, 1e-05
      %v2583 = vadd.f32 %v2551, 1e-05
      %v2584 = vadd.f32 %v2552, 1e-05
      %v2585 = vadd.f32 %v2553, 1e-05
      %v2586 = vadd.f32 %v2554, 1e-05
      %v2587 = vadd.f32 %v2555, 1e-05
      %v2588 = vadd.f32 %v2556, 1e-05
      %v2589 = vadd.f32 %v2557, 1e-05
      %v2590 = vadd.f32 %v2558, 1e-05
      %v2591 = vadd.f32 %v2559, 1e-05
      %v2592 = vadd.f32 %v2560, 1e-05
      %v2593 = vadd.f32 %v2561, 1e-05
      %v2594 = vadd.f32 %v2562, 1e-05
      %v2595 = vadd.f32 %v2563, 1e-05
      %v2596 = vadd.f32 %v2564, 1e-05
      %v2597 = vadd.f32 %v2565, 1e-05
      %v2598 = vadd.f32 %v2566, 1e-05
      %v2599 = vrsqrt.pop %v2567
      %v2600 = vmul.f32 %v2599, %v2567
      %v2601 = vmul.f32 %v2600, %v2599
      %v2602 = vmul.f32 0.5, %v2601
      %v2603 = vsub.f32 1.5, %v2602
      %v2604 = vmul.f32 %v2599, %v2603
      %vm2605 = vweird.f32 %v2567
      %vm2606 = vweird.f32 %v2599
      %vm2607 = vmor %vm2605, %vm2606
      %v2608 = vsel %vm2607, %v2599, %v2604
      %v2609 = vrsqrt.pop %v2568
      %v2610 = vmul.f32 %v2609, %v2568
      %v2611 = vmul.f32 %v2610, %v2609
      %v2612 = vmul.f32 0.5, %v2611
      %v2613 = vsub.f32 1.5, %v2612
      %v2614 = vmul.f32 %v2609, %v2613
      %vm2615 = vweird.f32 %v2568
      %vm2616 = vweird.f32 %v2609
      %vm2617 = vmor %vm2615, %vm2616
      %v2618 = vsel %vm2617, %v2609, %v2614
      %v2619 = vrsqrt.pop %v2569
      %v2620 = vmul.f32 %v2619, %v2569
      %v2621 = vmul.f32 %v2620, %v2619
      %v2622 = vmul.f32 0.5, %v2621
      %v2623 = vsub.f32 1.5, %v2622
      %v2624 = vmul.f32 %v2619, %v2623
      %vm2625 = vweird.f32 %v2569
      %vm2626 = vweird.f32 %v2619
      %vm2627 = vmor %vm2625, %vm2626
      %v2628 = vsel %vm2627, %v2619, %v2624
      %v2629 = vrsqrt.pop %v2570
      %v2630 = vmul.f32 %v2629, %v2570
      %v2631 = vmul.f32 %v2630, %v2629
      %v2632 = vmul.f32 0.5, %v2631
      %v2633 = vsub.f32 1.5, %v2632
      %v2634 = vmul.f32 %v2629, %v2633
      %vm2635 = vweird.f32 %v2570
      %vm2636 = vweird.f32 %v2629
      %vm2637 = vmor %vm2635, %vm2636
      %v2638 = vsel %vm2637, %v2629, %v2634
      %v2639 = vrsqrt.pop %v2571
      %v2640 = vmul.f32 %v2639, %v2571
      %v2641 = vmul.f32 %v2640, %v2639
      %v2642 = vmul.f32 0.5, %v2641
      %v2643 = vsub.f32 1.5, %v2642
      %v2644 = vmul.f32 %v2639, %v2643
      %vm2645 = vweird.f32 %v2571
      %vm2646 = vweird.f32 %v2639
      %vm2647 = vmor %vm2645, %vm2646
      %v2648 = vsel %vm2647, %v2639, %v2644
      %v2649 = vrsqrt.pop %v2572
      %v2650 = vmul.f32 %v2649, %v2572
      %v2651 = vmul.f32 %v2650, %v2649
      %v2652 = vmul.f32 0.5, %v2651
      %v2653 = vsub.f32 1.5, %v2652
      %v2654 = vmul.f32 %v2649, %v2653
      %vm2655 = vweird.f32 %v2572
      %vm2656 = vweird.f32 %v2649
      %vm2657 = vmor %vm2655, %vm2656
      %v2658 = vsel %vm2657, %v2649, %v2654
      %v2659 = vrsqrt.pop %v2573
      %v2660 = vmul.f32 %v2659, %v2573
      %v2661 = vmul.f32 %v2660, %v2659
      %v2662 = vmul.f32 0.5, %v2661
      %v2663 = vsub.f32 1.5, %v2662
      %v2664 = vmul.f32 %v2659, %v2663
      %vm2665 = vweird.f32 %v2573
      %vm2666 = vweird.f32 %v2659
      %vm2667 = vmor %vm2665, %vm2666
      %v2668 = vsel %vm2667, %v2659, %v2664
      %v2669 = vrsqrt.pop %v2574
      %v2670 = vmul.f32 %v2669, %v2574
      %v2671 = vmul.f32 %v2670, %v2669
      %v2672 = vmul.f32 0.5, %v2671
      %v2673 = vsub.f32 1.5, %v2672
      %v2674 = vmul.f32 %v2669, %v2673
      %vm2675 = vweird.f32 %v2574
      %vm2676 = vweird.f32 %v2669
      %vm2677 = vmor %vm2675, %vm2676
      %v2678 = vsel %vm2677, %v2669, %v2674
      %v2679 = vrsqrt.pop %v2575
      %v2680 = vmul.f32 %v2679, %v2575
      %v2681 = vmul.f32 %v2680, %v2679
      %v2682 = vmul.f32 0.5, %v2681
      %v2683 = vsub.f32 1.5, %v2682
      %v2684 = vmul.f32 %v2679, %v2683
      %vm2685 = vweird.f32 %v2575
      %vm2686 = vweird.f32 %v2679
      %vm2687 = vmor %vm2685, %vm2686
      %v2688 = vsel %vm2687, %v2679, %v2684
      %v2689 = vrsqrt.pop %v2576
      %v2690 = vmul.f32 %v2689, %v2576
      %v2691 = vmul.f32 %v2690, %v2689
      %v2692 = vmul.f32 0.5, %v2691
      %v2693 = vsub.f32 1.5, %v2692
      %v2694 = vmul.f32 %v2689, %v2693
      %vm2695 = vweird.f32 %v2576
      %vm2696 = vweird.f32 %v2689
      %vm2697 = vmor %vm2695, %vm2696
      %v2698 = vsel %vm2697, %v2689, %v2694
      %v2699 = vrsqrt.pop %v2577
      %v2700 = vmul.f32 %v2699, %v2577
      %v2701 = vmul.f32 %v2700, %v2699
      %v2702 = vmul.f32 0.5, %v2701
      %v2703 = vsub.f32 1.5, %v2702
      %v2704 = vmul.f32 %v2699, %v2703
      %vm2705 = vweird.f32 %v2577
      %vm2706 = vweird.f32 %v2699
      %vm2707 = vmor %vm2705, %vm2706
      %v2708 = vsel %vm2707, %v2699, %v2704
      %v2709 = vrsqrt.pop %v2578
      %v2710 = vmul.f32 %v2709, %v2578
      %v2711 = vmul.f32 %v2710, %v2709
      %v2712 = vmul.f32 0.5, %v2711
      %v2713 = vsub.f32 1.5, %v2712
      %v2714 = vmul.f32 %v2709, %v2713
      %vm2715 = vweird.f32 %v2578
      %vm2716 = vweird.f32 %v2709
      %vm2717 = vmor %vm2715, %vm2716
      %v2718 = vsel %vm2717, %v2709, %v2714
      %v2719 = vrsqrt.pop %v2579
      %v2720 = vmul.f32 %v2719, %v2579
      %v2721 = vmul.f32 %v2720, %v2719
      %v2722 = vmul.f32 0.5, %v2721
      %v2723 = vsub.f32 1.5, %v2722
      %v2724 = vmul.f32 %v2719, %v2723
      %vm2725 = vweird.f32 %v2579
      %vm2726 = vweird.f32 %v2719
      %vm2727 = vmor %vm2725, %vm2726
      %v2728 = vsel %vm2727, %v2719, %v2724
      %v2729 = vrsqrt.pop %v2580
      %v2730 = vmul.f32 %v2729, %v2580
      %v2731 = vmul.f32 %v2730, %v2729
      %v2732 = vmul.f32 0.5, %v2731
      %v2733 = vsub.f32 1.5, %v2732
      %v2734 = vmul.f32 %v2729, %v2733
      %vm2735 = vweird.f32 %v2580
      %vm2736 = vweird.f32 %v2729
      %vm2737 = vmor %vm2735, %vm2736
      %v2738 = vsel %vm2737, %v2729, %v2734
      %v2739 = vrsqrt.pop %v2581
      %v2740 = vmul.f32 %v2739, %v2581
      %v2741 = vmul.f32 %v2740, %v2739
      %v2742 = vmul.f32 0.5, %v2741
      %v2743 = vsub.f32 1.5, %v2742
      %v2744 = vmul.f32 %v2739, %v2743
      %vm2745 = vweird.f32 %v2581
      %vm2746 = vweird.f32 %v2739
      %vm2747 = vmor %vm2745, %vm2746
      %v2748 = vsel %vm2747, %v2739, %v2744
      %v2749 = vrsqrt.pop %v2582
      %v2750 = vmul.f32 %v2749, %v2582
      %v2751 = vmul.f32 %v2750, %v2749
      %v2752 = vmul.f32 0.5, %v2751
      %v2753 = vsub.f32 1.5, %v2752
      %v2754 = vmul.f32 %v2749, %v2753
      %vm2755 = vweird.f32 %v2582
      %vm2756 = vweird.f32 %v2749
      %vm2757 = vmor %vm2755, %vm2756
      %v2758 = vsel %vm2757, %v2749, %v2754
      %v2759 = vrsqrt.pop %v2583
      %v2760 = vmul.f32 %v2759, %v2583
      %v2761 = vmul.f32 %v2760, %v2759
      %v2762 = vmul.f32 0.5, %v2761
      %v2763 = vsub.f32 1.5, %v2762
      %v2764 = vmul.f32 %v2759, %v2763
      %vm2765 = vweird.f32 %v2583
      %vm2766 = vweird.f32 %v2759
      %vm2767 = vmor %vm2765, %vm2766
      %v2768 = vsel %vm2767, %v2759, %v2764
      %v2769 = vrsqrt.pop %v2584
      %v2770 = vmul.f32 %v2769, %v2584
      %v2771 = vmul.f32 %v2770, %v2769
      %v2772 = vmul.f32 0.5, %v2771
      %v2773 = vsub.f32 1.5, %v2772
      %v2774 = vmul.f32 %v2769, %v2773
      %vm2775 = vweird.f32 %v2584
      %vm2776 = vweird.f32 %v2769
      %vm2777 = vmor %vm2775, %vm2776
      %v2778 = vsel %vm2777, %v2769, %v2774
      %v2779 = vrsqrt.pop %v2585
      %v2780 = vmul.f32 %v2779, %v2585
      %v2781 = vmul.f32 %v2780, %v2779
      %v2782 = vmul.f32 0.5, %v2781
      %v2783 = vsub.f32 1.5, %v2782
      %v2784 = vmul.f32 %v2779, %v2783
      %vm2785 = vweird.f32 %v2585
      %vm2786 = vweird.f32 %v2779
      %vm2787 = vmor %vm2785, %vm2786
      %v2788 = vsel %vm2787, %v2779, %v2784
      %v2789 = vrsqrt.pop %v2586
      %v2790 = vmul.f32 %v2789, %v2586
      %v2791 = vmul.f32 %v2790, %v2789
      %v2792 = vmul.f32 0.5, %v2791
      %v2793 = vsub.f32 1.5, %v2792
      %v2794 = vmul.f32 %v2789, %v2793
      %vm2795 = vweird.f32 %v2586
      %vm2796 = vweird.f32 %v2789
      %vm2797 = vmor %vm2795, %vm2796
      %v2798 = vsel %vm2797, %v2789, %v2794
      %v2799 = vrsqrt.pop %v2587
      %v2800 = vmul.f32 %v2799, %v2587
      %v2801 = vmul.f32 %v2800, %v2799
      %v2802 = vmul.f32 0.5, %v2801
      %v2803 = vsub.f32 1.5, %v2802
      %v2804 = vmul.f32 %v2799, %v2803
      %vm2805 = vweird.f32 %v2587
      %vm2806 = vweird.f32 %v2799
      %vm2807 = vmor %vm2805, %vm2806
      %v2808 = vsel %vm2807, %v2799, %v2804
      %v2809 = vrsqrt.pop %v2588
      %v2810 = vmul.f32 %v2809, %v2588
      %v2811 = vmul.f32 %v2810, %v2809
      %v2812 = vmul.f32 0.5, %v2811
      %v2813 = vsub.f32 1.5, %v2812
      %v2814 = vmul.f32 %v2809, %v2813
      %vm2815 = vweird.f32 %v2588
      %vm2816 = vweird.f32 %v2809
      %vm2817 = vmor %vm2815, %vm2816
      %v2818 = vsel %vm2817, %v2809, %v2814
      %v2819 = vrsqrt.pop %v2589
      %v2820 = vmul.f32 %v2819, %v2589
      %v2821 = vmul.f32 %v2820, %v2819
      %v2822 = vmul.f32 0.5, %v2821
      %v2823 = vsub.f32 1.5, %v2822
      %v2824 = vmul.f32 %v2819, %v2823
      %vm2825 = vweird.f32 %v2589
      %vm2826 = vweird.f32 %v2819
      %vm2827 = vmor %vm2825, %vm2826
      %v2828 = vsel %vm2827, %v2819, %v2824
      %v2829 = vrsqrt.pop %v2590
      %v2830 = vmul.f32 %v2829, %v2590
      %v2831 = vmul.f32 %v2830, %v2829
      %v2832 = vmul.f32 0.5, %v2831
      %v2833 = vsub.f32 1.5, %v2832
      %v2834 = vmul.f32 %v2829, %v2833
      %vm2835 = vweird.f32 %v2590
      %vm2836 = vweird.f32 %v2829
      %vm2837 = vmor %vm2835, %vm2836
      %v2838 = vsel %vm2837, %v2829, %v2834
      %v2839 = vrsqrt.pop %v2591
      %v2840 = vmul.f32 %v2839, %v2591
      %v2841 = vmul.f32 %v2840, %v2839
      %v2842 = vmul.f32 0.5, %v2841
      %v2843 = vsub.f32 1.5, %v2842
      %v2844 = vmul.f32 %v2839, %v2843
      %vm2845 = vweird.f32 %v2591
      %vm2846 = vweird.f32 %v2839
      %vm2847 = vmor %vm2845, %vm2846
      %v2848 = vsel %vm2847, %v2839, %v2844
      %v2849 = vrsqrt.pop %v2592
      %v2850 = vmul.f32 %v2849, %v2592
      %v2851 = vmul.f32 %v2850, %v2849
      %v2852 = vmul.f32 0.5, %v2851
      %v2853 = vsub.f32 1.5, %v2852
      %v2854 = vmul.f32 %v2849, %v2853
      %vm2855 = vweird.f32 %v2592
      %vm2856 = vweird.f32 %v2849
      %vm2857 = vmor %vm2855, %vm2856
      %v2858 = vsel %vm2857, %v2849, %v2854
      %v2859 = vrsqrt.pop %v2593
      %v2860 = vmul.f32 %v2859, %v2593
      %v2861 = vmul.f32 %v2860, %v2859
      %v2862 = vmul.f32 0.5, %v2861
      %v2863 = vsub.f32 1.5, %v2862
      %v2864 = vmul.f32 %v2859, %v2863
      %vm2865 = vweird.f32 %v2593
      %vm2866 = vweird.f32 %v2859
      %vm2867 = vmor %vm2865, %vm2866
      %v2868 = vsel %vm2867, %v2859, %v2864
      %v2869 = vrsqrt.pop %v2594
      %v2870 = vmul.f32 %v2869, %v2594
      %v2871 = vmul.f32 %v2870, %v2869
      %v2872 = vmul.f32 0.5, %v2871
      %v2873 = vsub.f32 1.5, %v2872
      %v2874 = vmul.f32 %v2869, %v2873
      %vm2875 = vweird.f32 %v2594
      %vm2876 = vweird.f32 %v2869
      %vm2877 = vmor %vm2875, %vm2876
      %v2878 = vsel %vm2877, %v2869, %v2874
      %v2879 = vrsqrt.pop %v2595
      %v2880 = vmul.f32 %v2879, %v2595
      %v2881 = vmul.f32 %v2880, %v2879
      %v2882 = vmul.f32 0.5, %v2881
      %v2883 = vsub.f32 1.5, %v2882
      %v2884 = vmul.f32 %v2879, %v2883
      %vm2885 = vweird.f32 %v2595
      %vm2886 = vweird.f32 %v2879
      %vm2887 = vmor %vm2885, %vm2886
      %v2888 = vsel %vm2887, %v2879, %v2884
      %v2889 = vrsqrt.pop %v2596
      %v2890 = vmul.f32 %v2889, %v2596
      %v2891 = vmul.f32 %v2890, %v2889
      %v2892 = vmul.f32 0.5, %v2891
      %v2893 = vsub.f32 1.5, %v2892
      %v2894 = vmul.f32 %v2889, %v2893
      %vm2895 = vweird.f32 %v2596
      %vm2896 = vweird.f32 %v2889
      %vm2897 = vmor %vm2895, %vm2896
      %v2898 = vsel %vm2897, %v2889, %v2894
      %v2899 = vrsqrt.pop %v2597
      %v2900 = vmul.f32 %v2899, %v2597
      %v2901 = vmul.f32 %v2900, %v2899
      %v2902 = vmul.f32 0.5, %v2901
      %v2903 = vsub.f32 1.5, %v2902
      %v2904 = vmul.f32 %v2899, %v2903
      %vm2905 = vweird.f32 %v2597
      %vm2906 = vweird.f32 %v2899
      %vm2907 = vmor %vm2905, %vm2906
      %v2908 = vsel %vm2907, %v2899, %v2904
      %v2909 = vrsqrt.pop %v2598
      %v2910 = vmul.f32 %v2909, %v2598
      %v2911 = vmul.f32 %v2910, %v2909
      %v2912 = vmul.f32 0.5, %v2911
      %v2913 = vsub.f32 1.5, %v2912
      %v2914 = vmul.f32 %v2909, %v2913
      %vm2915 = vweird.f32 %v2598
      %vm2916 = vweird.f32 %v2909
      %vm2917 = vmor %vm2915, %vm2916
      %v2918 = vsel %vm2917, %v2909, %v2914
      %v2919 = vmul.f32 %v2407, %v2608
      %v2920 = vmul.f32 %v2408, %v2618
      %v2921 = vmul.f32 %v2409, %v2628
      %v2922 = vmul.f32 %v2410, %v2638
      %v2923 = vmul.f32 %v2411, %v2648
      %v2924 = vmul.f32 %v2412, %v2658
      %v2925 = vmul.f32 %v2413, %v2668
      %v2926 = vmul.f32 %v2414, %v2678
      %v2927 = vmul.f32 %v2415, %v2688
      %v2928 = vmul.f32 %v2416, %v2698
      %v2929 = vmul.f32 %v2417, %v2708
      %v2930 = vmul.f32 %v2418, %v2718
      %v2931 = vmul.f32 %v2419, %v2728
      %v2932 = vmul.f32 %v2420, %v2738
      %v2933 = vmul.f32 %v2421, %v2748
      %v2934 = vmul.f32 %v2422, %v2758
      %v2935 = vmul.f32 %v2423, %v2768
      %v2936 = vmul.f32 %v2424, %v2778
      %v2937 = vmul.f32 %v2425, %v2788
      %v2938 = vmul.f32 %v2426, %v2798
      %v2939 = vmul.f32 %v2427, %v2808
      %v2940 = vmul.f32 %v2428, %v2818
      %v2941 = vmul.f32 %v2429, %v2828
      %v2942 = vmul.f32 %v2430, %v2838
      %v2943 = vmul.f32 %v2431, %v2848
      %v2944 = vmul.f32 %v2432, %v2858
      %v2945 = vmul.f32 %v2433, %v2868
      %v2946 = vmul.f32 %v2434, %v2878
      %v2947 = vmul.f32 %v2435, %v2888
      %v2948 = vmul.f32 %v2436, %v2898
      %v2949 = vmul.f32 %v2437, %v2908
      %v2950 = vmul.f32 %v2438, %v2918
      %v2951 = vperm.slane %v257, 7
      %v2952 = vmul.f32 %v2919, %v2951
      %v2953 = vmul.f32 %v2920, %v2951
      %v2954 = vmul.f32 %v2921, %v2951
      %v2955 = vmul.f32 %v2922, %v2951
      %v2956 = vmul.f32 %v2923, %v2951
      %v2957 = vmul.f32 %v2924, %v2951
      %v2958 = vmul.f32 %v2925, %v2951
      %v2959 = vmul.f32 %v2926, %v2951
      %v2960 = vmul.f32 %v2927, %v2951
      %v2961 = vmul.f32 %v2928, %v2951
      %v2962 = vmul.f32 %v2929, %v2951
      %v2963 = vmul.f32 %v2930, %v2951
      %v2964 = vmul.f32 %v2931, %v2951
      %v2965 = vmul.f32 %v2932, %v2951
      %v2966 = vmul.f32 %v2933, %v2951
      %v2967 = vmul.f32 %v2934, %v2951
      %v2968 = vmul.f32 %v2935, %v2951
      %v2969 = vmul.f32 %v2936, %v2951
      %v2970 = vmul.f32 %v2937, %v2951
      %v2971 = vmul.f32 %v2938, %v2951
      %v2972 = vmul.f32 %v2939, %v2951
      %v2973 = vmul.f32 %v2940, %v2951
      %v2974 = vmul.f32 %v2941, %v2951
      %v2975 = vmul.f32 %v2942, %v2951
      %v2976 = vmul.f32 %v2943, %v2951
      %v2977 = vmul.f32 %v2944, %v2951
      %v2978 = vmul.f32 %v2945, %v2951
      %v2979 = vmul.f32 %v2946, %v2951
      %v2980 = vmul.f32 %v2947, %v2951
      %v2981 = vmul.f32 %v2948, %v2951
      %v2982 = vmul.f32 %v2949, %v2951
      %v2983 = vmul.f32 %v2950, %v2951
      %v2984 = vperm.slane %v258, 0
      %v2985 = vadd.f32 %v2952, %v2984
      %v2986 = vadd.f32 %v2953, %v2984
      %v2987 = vadd.f32 %v2954, %v2984
      %v2988 = vadd.f32 %v2955, %v2984
      %v2989 = vadd.f32 %v2956, %v2984
      %v2990 = vadd.f32 %v2957, %v2984
      %v2991 = vadd.f32 %v2958, %v2984
      %v2992 = vadd.f32 %v2959, %v2984
      %v2993 = vadd.f32 %v2960, %v2984
      %v2994 = vadd.f32 %v2961, %v2984
      %v2995 = vadd.f32 %v2962, %v2984
      %v2996 = vadd.f32 %v2963, %v2984
      %v2997 = vadd.f32 %v2964, %v2984
      %v2998 = vadd.f32 %v2965, %v2984
      %v2999 = vadd.f32 %v2966, %v2984
      %v3000 = vadd.f32 %v2967, %v2984
      %v3001 = vadd.f32 %v2968, %v2984
      %v3002 = vadd.f32 %v2969, %v2984
      %v3003 = vadd.f32 %v2970, %v2984
      %v3004 = vadd.f32 %v2971, %v2984
      %v3005 = vadd.f32 %v2972, %v2984
      %v3006 = vadd.f32 %v2973, %v2984
      %v3007 = vadd.f32 %v2974, %v2984
      %v3008 = vadd.f32 %v2975, %v2984
      %v3009 = vadd.f32 %v2976, %v2984
      %v3010 = vadd.f32 %v2977, %v2984
      %v3011 = vadd.f32 %v2978, %v2984
      %v3012 = vadd.f32 %v2979, %v2984
      %v3013 = vadd.f32 %v2980, %v2984
      %v3014 = vadd.f32 %v2981, %v2984
      %v3015 = vadd.f32 %v2982, %v2984
      %v3016 = vadd.f32 %v2983, %v2984
      %v3017 = vmax.f32 %v2985, 0.0
      %v3018 = vmax.f32 %v2986, 0.0
      %v3019 = vmax.f32 %v2987, 0.0
      %v3020 = vmax.f32 %v2988, 0.0
      %v3021 = vmax.f32 %v2989, 0.0
      %v3022 = vmax.f32 %v2990, 0.0
      %v3023 = vmax.f32 %v2991, 0.0
      %v3024 = vmax.f32 %v2992, 0.0
      %v3025 = vmax.f32 %v2993, 0.0
      %v3026 = vmax.f32 %v2994, 0.0
      %v3027 = vmax.f32 %v2995, 0.0
      %v3028 = vmax.f32 %v2996, 0.0
      %v3029 = vmax.f32 %v2997, 0.0
      %v3030 = vmax.f32 %v2998, 0.0
      %v3031 = vmax.f32 %v2999, 0.0
      %v3032 = vmax.f32 %v3000, 0.0
      %v3033 = vmax.f32 %v3001, 0.0
      %v3034 = vmax.f32 %v3002, 0.0
      %v3035 = vmax.f32 %v3003, 0.0
      %v3036 = vmax.f32 %v3004, 0.0
      %v3037 = vmax.f32 %v3005, 0.0
      %v3038 = vmax.f32 %v3006, 0.0
      %v3039 = vmax.f32 %v3007, 0.0
      %v3040 = vmax.f32 %v3008, 0.0
      %v3041 = vmax.f32 %v3009, 0.0
      %v3042 = vmax.f32 %v3010, 0.0
      %v3043 = vmax.f32 %v3011, 0.0
      %v3044 = vmax.f32 %v3012, 0.0
      %v3045 = vmax.f32 %v3013, 0.0
      %v3046 = vmax.f32 %v3014, 0.0
      %v3047 = vmax.f32 %v3015, 0.0
      %v3048 = vmax.f32 %v3016, 0.0
      %v3049 = vld [vmem:[%s4] sm:$0xff]
      %v3050 = vld [vmem:[%s4 + $0x8] sm:$0xff]
      %v3051 = vld [vmem:[%s4 + $0x10] sm:$0xff]
      %v3052 = vld [vmem:[%s4 + $0x18] sm:$0xff]
      %v3053 = vld [vmem:[%s4 + $0x20] sm:$0xff]
      %v3054 = vld [vmem:[%s4 + $0x28] sm:$0xff]
      %v3055 = vld [vmem:[%s4 + $0x30] sm:$0xff]
      %v3056 = vld [vmem:[%s4 + $0x38] sm:$0xff]
      %v3057 = vld [vmem:[%s4 + $0x40] sm:$0xff]
      %v3058 = vld [vmem:[%s4 + $0x48] sm:$0xff]
      %v3059 = vld [vmem:[%s4 + $0x50] sm:$0xff]
      %v3060 = vld [vmem:[%s4 + $0x58] sm:$0xff]
      %v3061 = vld [vmem:[%s4 + $0x60] sm:$0xff]
      %v3062 = vld [vmem:[%s4 + $0x68] sm:$0xff]
      %v3063 = vld [vmem:[%s4 + $0x70] sm:$0xff]
      %v3064 = vld [vmem:[%s4 + $0x78] sm:$0xff]
      %v3065 = vld [vmem:[%s4 + $0x80] sm:$0xff]
      %v3066 = vld [vmem:[%s4 + $0x88] sm:$0xff]
      %v3067 = vld [vmem:[%s4 + $0x90] sm:$0xff]
      %v3068 = vld [vmem:[%s4 + $0x98] sm:$0xff]
      %v3069 = vld [vmem:[%s4 + $0xa0] sm:$0xff]
      %v3070 = vld [vmem:[%s4 + $0xa8] sm:$0xff]
      %v3071 = vld [vmem:[%s4 + $0xb0] sm:$0xff]
      %v3072 = vld [vmem:[%s4 + $0xb8] sm:$0xff]
      %v3073 = vld [vmem:[%s4 + $0xc0] sm:$0xff]
      %v3074 = vld [vmem:[%s4 + $0xc8] sm:$0xff]
      %v3075 = vld [vmem:[%s4 + $0xd0] sm:$0xff]
      %v3076 = vld [vmem:[%s4 + $0xd8] sm:$0xff]
      %v3077 = vld [vmem:[%s4 + $0xe0] sm:$0xff]
      %v3078 = vld [vmem:[%s4 + $0xe8] sm:$0xff]
      %v3079 = vld [vmem:[%s4 + $0xf0] sm:$0xff]
      %v3080 = vld [vmem:[%s4 + $0xf8] sm:$0xff]
      %v3081 = vld [vmem:[%s4 + $0x100] sm:$0xff]
      %v3082 = vld [vmem:[%s4 + $0x108] sm:$0xff]
      %v3083 = vld [vmem:[%s4 + $0x110] sm:$0xff]
      %v3084 = vld [vmem:[%s4 + $0x118] sm:$0xff]
      %v3085 = vld [vmem:[%s4 + $0x120] sm:$0xff]
      %v3086 = vld [vmem:[%s4 + $0x128] sm:$0xff]
      %v3087 = vld [vmem:[%s4 + $0x130] sm:$0xff]
      %v3088 = vld [vmem:[%s4 + $0x138] sm:$0xff]
      %v3089 = vld [vmem:[%s4 + $0x140] sm:$0xff]
      %v3090 = vld [vmem:[%s4 + $0x148] sm:$0xff]
      %v3091 = vld [vmem:[%s4 + $0x150] sm:$0xff]
      %v3092 = vld [vmem:[%s4 + $0x158] sm:$0xff]
      %v3093 = vld [vmem:[%s4 + $0x160] sm:$0xff]
      %v3094 = vld [vmem:[%s4 + $0x168] sm:$0xff]
      %v3095 = vld [vmem:[%s4 + $0x170] sm:$0xff]
      %v3096 = vld [vmem:[%s4 + $0x178] sm:$0xff]
      %v3097 = vld [vmem:[%s4 + $0x180] sm:$0xff]
      %v3098 = vld [vmem:[%s4 + $0x188] sm:$0xff]
      %v3099 = vld [vmem:[%s4 + $0x190] sm:$0xff]
      %v3100 = vld [vmem:[%s4 + $0x198] sm:$0xff]
      %v3101 = vld [vmem:[%s4 + $0x1a0] sm:$0xff]
      %v3102 = vld [vmem:[%s4 + $0x1a8] sm:$0xff]
      %v3103 = vld [vmem:[%s4 + $0x1b0] sm:$0xff]
      %v3104 = vld [vmem:[%s4 + $0x1b8] sm:$0xff]
      %v3105 = vld [vmem:[%s4 + $0x1c0] sm:$0xff]
      %v3106 = vld [vmem:[%s4 + $0x1c8] sm:$0xff]
      %v3107 = vld [vmem:[%s4 + $0x1d0] sm:$0xff]
      %v3108 = vld [vmem:[%s4 + $0x1d8] sm:$0xff]
      %v3109 = vld [vmem:[%s4 + $0x1e0] sm:$0xff]
      %v3110 = vld [vmem:[%s4 + $0x1e8] sm:$0xff]
      %v3111 = vld [vmem:[%s4 + $0x1f0] sm:$0xff]
      %v3112 = vld [vmem:[%s4 + $0x1f8] sm:$0xff]
      %v3113 = vld [vmem:[%s4 + $0x200] sm:$0xff]
      %v3114 = vld [vmem:[%s4 + $0x208] sm:$0xff]
      %v3115 = vld [vmem:[%s4 + $0x210] sm:$0xff]
      %v3116 = vld [vmem:[%s4 + $0x218] sm:$0xff]
      %v3117 = vld [vmem:[%s4 + $0x220] sm:$0xff]
      %v3118 = vld [vmem:[%s4 + $0x228] sm:$0xff]
      %v3119 = vld [vmem:[%s4 + $0x230] sm:$0xff]
      %v3120 = vld [vmem:[%s4 + $0x238] sm:$0xff]
      %v3121 = vld [vmem:[%s4 + $0x240] sm:$0xff]
      %v3122 = vld [vmem:[%s4 + $0x248] sm:$0xff]
      %v3123 = vld [vmem:[%s4 + $0x250] sm:$0xff]
      %v3124 = vld [vmem:[%s4 + $0x258] sm:$0xff]
      %v3125 = vld [vmem:[%s4 + $0x260] sm:$0xff]
      %v3126 = vld [vmem:[%s4 + $0x268] sm:$0xff]
      %v3127 = vld [vmem:[%s4 + $0x270] sm:$0xff]
      %v3128 = vld [vmem:[%s4 + $0x278] sm:$0xff]
      %v3129 = vld [vmem:[%s4 + $0x280] sm:$0xff]
      %v3130 = vld [vmem:[%s4 + $0x288] sm:$0xff]
      %v3131 = vld [vmem:[%s4 + $0x290] sm:$0xff]
      %v3132 = vld [vmem:[%s4 + $0x298] sm:$0xff]
      %v3133 = vld [vmem:[%s4 + $0x2a0] sm:$0xff]
      %v3134 = vld [vmem:[%s4 + $0x2a8] sm:$0xff]
      %v3135 = vld [vmem:[%s4 + $0x2b0] sm:$0xff]
      %v3136 = vld [vmem:[%s4 + $0x2b8] sm:$0xff]
      %v3137 = vld [vmem:[%s4 + $0x2c0] sm:$0xff]
      %v3138 = vld [vmem:[%s4 + $0x2c8] sm:$0xff]
      %v3139 = vld [vmem:[%s4 + $0x2d0] sm:$0xff]
      %v3140 = vld [vmem:[%s4 + $0x2d8] sm:$0xff]
      %v3141 = vld [vmem:[%s4 + $0x2e0] sm:$0xff]
      %v3142 = vld [vmem:[%s4 + $0x2e8] sm:$0xff]
      %v3143 = vld [vmem:[%s4 + $0x2f0] sm:$0xff]
      %v3144 = vld [vmem:[%s4 + $0x2f8] sm:$0xff]
      %v3145 = vperm.slane %v258, 1
      %v3146 = vperm.slane %v259, 1
      %3147 = vmatpush.msra.mxu0 %v3079
      %3148 = vmatpush.msra.mxu0 %v3077
      %3149 = vmatpush.msra.mxu0 %v3075
      %3150 = vmatpush.msra.mxu0 %v3073
      %3151 = vmatpush.msra.mxu0 %v3071
      %3152 = vmatpush.msra.mxu0 %v3069
      %3153 = vmatpush.msra.mxu0 %v3067
      %3154 = vmatpush.msra.mxu0 %v3065
      %3155 = vmatpush.msra.mxu0 %v3063
      %3156 = vmatpush.msra.mxu0 %v3061
      %3157 = vmatpush.msra.mxu0 %v3059
      %3158 = vmatpush.msra.mxu0 %v3057
      %3159 = vmatpush.msra.mxu0 %v3055
      %3160 = vmatpush.msra.mxu0 %v3053
      %3161 = vmatpush.msra.mxu0 %v3051
      %3162 = vmatpush.msra.mxu0 %v3049
      %3163 = vmatmul.f32.gmra.mxu0 %v1213
      %v3164 = vpop.f32.mrf.mxu0
      %v3165 = vadd.f32 %v3145, %v3164
      %3166 = vmatmul.f32.gmra.mxu0 %v1214
      %v3167 = vpop.f32.mrf.mxu0
      %v3168 = vadd.f32 %v3145, %v3167
      %3169 = vmatmul.f32.gmra.mxu0 %v1215
      %v3170 = vpop.f32.mrf.mxu0
      %v3171 = vadd.f32 %v3145, %v3170
      %3172 = vmatmul.f32.gmra.mxu0 %v1216
      %v3173 = vpop.f32.mrf.mxu0
      %v3174 = vadd.f32 %v3145, %v3173
      %3175 = vmatmul.f32.gmra.mxu0 %v1217
      %v3176 = vpop.f32.mrf.mxu0
      %v3177 = vadd.f32 %v3145, %v3176
      %3178 = vmatmul.f32.gmra.mxu0 %v1218
      %v3179 = vpop.f32.mrf.mxu0
      %v3180 = vadd.f32 %v3145, %v3179
      %3181 = vmatmul.f32.gmra.mxu0 %v1219
      %v3182 = vpop.f32.mrf.mxu0
      %v3183 = vadd.f32 %v3145, %v3182
      %3184 = vmatmul.f32.gmra.mxu0 %v1220
      %v3185 = vpop.f32.mrf.mxu0
      %v3186 = vadd.f32 %v3145, %v3185
      %3187 = vmatmul.f32.gmra.mxu0 %v1221
      %v3188 = vpop.f32.mrf.mxu0
      %v3189 = vadd.f32 %v3145, %v3188
      %3190 = vmatmul.f32.gmra.mxu0 %v1222
      %v3191 = vpop.f32.mrf.mxu0
      %v3192 = vadd.f32 %v3145, %v3191
      %3193 = vmatmul.f32.gmra.mxu0 %v1223
      %v3194 = vpop.f32.mrf.mxu0
      %v3195 = vadd.f32 %v3145, %v3194
      %3196 = vmatmul.f32.gmra.mxu0 %v1224
      %v3197 = vpop.f32.mrf.mxu0
      %v3198 = vadd.f32 %v3145, %v3197
      %3199 = vmatmul.f32.gmra.mxu0 %v1225
      %v3200 = vpop.f32.mrf.mxu0
      %v3201 = vadd.f32 %v3145, %v3200
      %3202 = vmatmul.f32.gmra.mxu0 %v1226
      %v3203 = vpop.f32.mrf.mxu0
      %v3204 = vadd.f32 %v3145, %v3203
      %3205 = vmatmul.f32.gmra.mxu0 %v1227
      %v3206 = vpop.f32.mrf.mxu0
      %v3207 = vadd.f32 %v3145, %v3206
      %3208 = vmatmul.f32.gmra.mxu0 %v1228
      %v3209 = vpop.f32.mrf.mxu0
      %v3210 = vadd.f32 %v3145, %v3209
      %3211 = vmatmul.f32.gmra.mxu0 %v1229
      %v3212 = vpop.f32.mrf.mxu0
      %v3213 = vadd.f32 %v3145, %v3212
      %3214 = vmatmul.f32.gmra.mxu0 %v1230
      %v3215 = vpop.f32.mrf.mxu0
      %v3216 = vadd.f32 %v3145, %v3215
      %3217 = vmatmul.f32.gmra.mxu0 %v1231
      %v3218 = vpop.f32.mrf.mxu0
      %v3219 = vadd.f32 %v3145, %v3218
      %3220 = vmatmul.f32.gmra.mxu0 %v1232
      %v3221 = vpop.f32.mrf.mxu0
      %v3222 = vadd.f32 %v3145, %v3221
      %3223 = vmatmul.f32.gmra.mxu0 %v1233
      %v3224 = vpop.f32.mrf.mxu0
      %v3225 = vadd.f32 %v3145, %v3224
      %3226 = vmatmul.f32.gmra.mxu0 %v1234
      %v3227 = vpop.f32.mrf.mxu0
      %v3228 = vadd.f32 %v3145, %v3227
      %3229 = vmatmul.f32.gmra.mxu0 %v1235
      %v3230 = vpop.f32.mrf.mxu0
      %v3231 = vadd.f32 %v3145, %v3230
      %3232 = vmatmul.f32.gmra.mxu0 %v1236
      %v3233 = vpop.f32.mrf.mxu0
      %v3234 = vadd.f32 %v3145, %v3233
      %3235 = vmatmul.f32.gmra.mxu0 %v1237
      %v3236 = vpop.f32.mrf.mxu0
      %v3237 = vadd.f32 %v3145, %v3236
      %3238 = vmatmul.f32.gmra.mxu0 %v1238
      %v3239 = vpop.f32.mrf.mxu0
      %v3240 = vadd.f32 %v3145, %v3239
      %3241 = vmatmul.f32.gmra.mxu0 %v1239
      %v3242 = vpop.f32.mrf.mxu0
      %v3243 = vadd.f32 %v3145, %v3242
      %3244 = vmatmul.f32.gmra.mxu0 %v1240
      %v3245 = vpop.f32.mrf.mxu0
      %v3246 = vadd.f32 %v3145, %v3245
      %3247 = vmatmul.f32.gmra.mxu0 %v1241
      %v3248 = vpop.f32.mrf.mxu0
      %v3249 = vadd.f32 %v3145, %v3248
      %3250 = vmatmul.f32.gmra.mxu0 %v1242
      %v3251 = vpop.f32.mrf.mxu0
      %v3252 = vadd.f32 %v3145, %v3251
      %3253 = vmatmul.f32.gmra.mxu0 %v1243
      %v3254 = vpop.f32.mrf.mxu0
      %v3255 = vadd.f32 %v3145, %v3254
      %3256 = vmatmul.f32.gmra.mxu0 %v1244
      %v3257 = vpop.f32.mrf.mxu0
      %v3258 = vadd.f32 %v3145, %v3257
      %3259 = vdwg.mxu0
      %3260 = vmatpush.msra.mxu0 %v3111
      %3261 = vmatpush.msra.mxu0 %v3109
      %3262 = vmatpush.msra.mxu0 %v3107
      %3263 = vmatpush.msra.mxu0 %v3105
      %3264 = vmatpush.msra.mxu0 %v3103
      %3265 = vmatpush.msra.mxu0 %v3101
      %3266 = vmatpush.msra.mxu0 %v3099
      %3267 = vmatpush.msra.mxu0 %v3097
      %3268 = vmatpush.msra.mxu0 %v3095
      %3269 = vmatpush.msra.mxu0 %v3093
      %3270 = vmatpush.msra.mxu0 %v3091
      %3271 = vmatpush.msra.mxu0 %v3089
      %3272 = vmatpush.msra.mxu0 %v3087
      %3273 = vmatpush.msra.mxu0 %v3085
      %3274 = vmatpush.msra.mxu0 %v3083
      %3275 = vmatpush.msra.mxu0 %v3081
      %3276 = vmatmul.f32.gmra.mxu0 %v2116
      %v3277 = vpop.f32.mrf.mxu0
      %v3278 = vadd.f32 %v3165, %v3277
      %3279 = vmatmul.f32.gmra.mxu0 %v2117
      %v3280 = vpop.f32.mrf.mxu0
      %v3281 = vadd.f32 %v3168, %v3280
      %3282 = vmatmul.f32.gmra.mxu0 %v2118
      %v3283 = vpop.f32.mrf.mxu0
      %v3284 = vadd.f32 %v3171, %v3283
      %3285 = vmatmul.f32.gmra.mxu0 %v2119
      %v3286 = vpop.f32.mrf.mxu0
      %v3287 = vadd.f32 %v3174, %v3286
      %3288 = vmatmul.f32.gmra.mxu0 %v2120
      %v3289 = vpop.f32.mrf.mxu0
      %v3290 = vadd.f32 %v3177, %v3289
      %3291 = vmatmul.f32.gmra.mxu0 %v2121
      %v3292 = vpop.f32.mrf.mxu0
      %v3293 = vadd.f32 %v3180, %v3292
      %3294 = vmatmul.f32.gmra.mxu0 %v2122
      %v3295 = vpop.f32.mrf.mxu0
      %v3296 = vadd.f32 %v3183, %v3295
      %3297 = vmatmul.f32.gmra.mxu0 %v2123
      %v3298 = vpop.f32.mrf.mxu0
      %v3299 = vadd.f32 %v3186, %v3298
      %3300 = vmatmul.f32.gmra.mxu0 %v2124
      %v3301 = vpop.f32.mrf.mxu0
      %v3302 = vadd.f32 %v3189, %v3301
      %3303 = vmatmul.f32.gmra.mxu0 %v2125
      %v3304 = vpop.f32.mrf.mxu0
      %v3305 = vadd.f32 %v3192, %v3304
      %3306 = vmatmul.f32.gmra.mxu0 %v2126
      %v3307 = vpop.f32.mrf.mxu0
      %v3308 = vadd.f32 %v3195, %v3307
      %3309 = vmatmul.f32.gmra.mxu0 %v2127
      %v3310 = vpop.f32.mrf.mxu0
      %v3311 = vadd.f32 %v3198, %v3310
      %3312 = vmatmul.f32.gmra.mxu0 %v2128
      %v3313 = vpop.f32.mrf.mxu0
      %v3314 = vadd.f32 %v3201, %v3313
      %3315 = vmatmul.f32.gmra.mxu0 %v2129
      %v3316 = vpop.f32.mrf.mxu0
      %v3317 = vadd.f32 %v3204, %v3316
      %3318 = vmatmul.f32.gmra.mxu0 %v2130
      %v3319 = vpop.f32.mrf.mxu0
      %v3320 = vadd.f32 %v3207, %v3319
      %3321 = vmatmul.f32.gmra.mxu0 %v2131
      %v3322 = vpop.f32.mrf.mxu0
      %v3323 = vadd.f32 %v3210, %v3322
      %3324 = vmatmul.f32.gmra.mxu0 %v2132
      %v3325 = vpop.f32.mrf.mxu0
      %v3326 = vadd.f32 %v3213, %v3325
      %3327 = vmatmul.f32.gmra.mxu0 %v2133
      %v3328 = vpop.f32.mrf.mxu0
      %v3329 = vadd.f32 %v3216, %v3328
      %3330 = vmatmul.f32.gmra.mxu0 %v2134
      %v3331 = vpop.f32.mrf.mxu0
      %v3332 = vadd.f32 %v3219, %v3331
      %3333 = vmatmul.f32.gmra.mxu0 %v2135
      %v3334 = vpop.f32.mrf.mxu0
      %v3335 = vadd.f32 %v3222, %v3334
      %3336 = vmatmul.f32.gmra.mxu0 %v2136
      %v3337 = vpop.f32.mrf.mxu0
      %v3338 = vadd.f32 %v3225, %v3337
      %3339 = vmatmul.f32.gmra.mxu0 %v2137
      %v3340 = vpop.f32.mrf.mxu0
      %v3341 = vadd.f32 %v3228, %v3340
      %3342 = vmatmul.f32.gmra.mxu0 %v2138
      %v3343 = vpop.f32.mrf.mxu0
      %v3344 = vadd.f32 %v3231, %v3343
      %3345 = vmatmul.f32.gmra.mxu0 %v2139
      %v3346 = vpop.f32.mrf.mxu0
      %v3347 = vadd.f32 %v3234, %v3346
      %3348 = vmatmul.f32.gmra.mxu0 %v2140
      %v3349 = vpop.f32.mrf.mxu0
      %v3350 = vadd.f32 %v3237, %v3349
      %3351 = vmatmul.f32.gmra.mxu0 %v2141
      %v3352 = vpop.f32.mrf.mxu0
      %v3353 = vadd.f32 %v3240, %v3352
      %3354 = vmatmul.f32.gmra.mxu0 %v2142
      %v3355 = vpop.f32.mrf.mxu0
      %v3356 = vadd.f32 %v3243, %v3355
      %3357 = vmatmul.f32.gmra.mxu0 %v2143
      %v3358 = vpop.f32.mrf.mxu0
      %v3359 = vadd.f32 %v3246, %v3358
      %3360 = vmatmul.f32.gmra.mxu0 %v2144
      %v3361 = vpop.f32.mrf.mxu0
      %v3362 = vadd.f32 %v3249, %v3361
      %3363 = vmatmul.f32.gmra.mxu0 %v2145
      %v3364 = vpop.f32.mrf.mxu0
      %v3365 = vadd.f32 %v3252, %v3364
      %3366 = vmatmul.f32.gmra.mxu0 %v2146
      %v3367 = vpop.f32.mrf.mxu0
      %v3368 = vadd.f32 %v3255, %v3367
      %3369 = vmatmul.f32.gmra.mxu0 %v2147
      %v3370 = vpop.f32.mrf.mxu0
      %v3371 = vadd.f32 %v3258, %v3370
      %3372 = vdwg.mxu0
      %3373 = vmatpush.msra.mxu0 %v3143
      %3374 = vmatpush.msra.mxu0 %v3141
      %3375 = vmatpush.msra.mxu0 %v3139
      %3376 = vmatpush.msra.mxu0 %v3137
      %3377 = vmatpush.msra.mxu0 %v3135
      %3378 = vmatpush.msra.mxu0 %v3133
      %3379 = vmatpush.msra.mxu0 %v3131
      %3380 = vmatpush.msra.mxu0 %v3129
      %3381 = vmatpush.msra.mxu0 %v3127
      %3382 = vmatpush.msra.mxu0 %v3125
      %3383 = vmatpush.msra.mxu0 %v3123
      %3384 = vmatpush.msra.mxu0 %v3121
      %3385 = vmatpush.msra.mxu0 %v3119
      %3386 = vmatpush.msra.mxu0 %v3117
      %3387 = vmatpush.msra.mxu0 %v3115
      %3388 = vmatpush.msra.mxu0 %v3113
      %3389 = vmatmul.f32.gmra.mxu0 %v3017
      %v3390 = vpop.f32.mrf.mxu0
      %v3391 = vadd.f32 %v3278, %v3390
      %3392 = vmatmul.f32.gmra.mxu0 %v3018
      %v3393 = vpop.f32.mrf.mxu0
      %v3394 = vadd.f32 %v3281, %v3393
      %3395 = vmatmul.f32.gmra.mxu0 %v3019
      %v3396 = vpop.f32.mrf.mxu0
      %v3397 = vadd.f32 %v3284, %v3396
      %3398 = vmatmul.f32.gmra.mxu0 %v3020
      %v3399 = vpop.f32.mrf.mxu0
      %v3400 = vadd.f32 %v3287, %v3399
      %3401 = vmatmul.f32.gmra.mxu0 %v3021
      %v3402 = vpop.f32.mrf.mxu0
      %v3403 = vadd.f32 %v3290, %v3402
      %3404 = vmatmul.f32.gmra.mxu0 %v3022
      %v3405 = vpop.f32.mrf.mxu0
      %v3406 = vadd.f32 %v3293, %v3405
      %3407 = vmatmul.f32.gmra.mxu0 %v3023
      %v3408 = vpop.f32.mrf.mxu0
      %v3409 = vadd.f32 %v3296, %v3408
      %3410 = vmatmul.f32.gmra.mxu0 %v3024
      %v3411 = vpop.f32.mrf.mxu0
      %v3412 = vadd.f32 %v3299, %v3411
      %3413 = vmatmul.f32.gmra.mxu0 %v3025
      %v3414 = vpop.f32.mrf.mxu0
      %v3415 = vadd.f32 %v3302, %v3414
      %3416 = vmatmul.f32.gmra.mxu0 %v3026
      %v3417 = vpop.f32.mrf.mxu0
      %v3418 = vadd.f32 %v3305, %v3417
      %3419 = vmatmul.f32.gmra.mxu0 %v3027
      %v3420 = vpop.f32.mrf.mxu0
      %v3421 = vadd.f32 %v3308, %v3420
      %3422 = vmatmul.f32.gmra.mxu0 %v3028
      %v3423 = vpop.f32.mrf.mxu0
      %v3424 = vadd.f32 %v3311, %v3423
      %3425 = vmatmul.f32.gmra.mxu0 %v3029
      %v3426 = vpop.f32.mrf.mxu0
      %v3427 = vadd.f32 %v3314, %v3426
      %3428 = vmatmul.f32.gmra.mxu0 %v3030
      %v3429 = vpop.f32.mrf.mxu0
      %v3430 = vadd.f32 %v3317, %v3429
      %3431 = vmatmul.f32.gmra.mxu0 %v3031
      %v3432 = vpop.f32.mrf.mxu0
      %v3433 = vadd.f32 %v3320, %v3432
      %3434 = vmatmul.f32.gmra.mxu0 %v3032
      %v3435 = vpop.f32.mrf.mxu0
      %v3436 = vadd.f32 %v3323, %v3435
      %3437 = vmatmul.f32.gmra.mxu0 %v3033
      %v3438 = vpop.f32.mrf.mxu0
      %v3439 = vadd.f32 %v3326, %v3438
      %3440 = vmatmul.f32.gmra.mxu0 %v3034
      %v3441 = vpop.f32.mrf.mxu0
      %v3442 = vadd.f32 %v3329, %v3441
      %3443 = vmatmul.f32.gmra.mxu0 %v3035
      %v3444 = vpop.f32.mrf.mxu0
      %v3445 = vadd.f32 %v3332, %v3444
      %3446 = vmatmul.f32.gmra.mxu0 %v3036
      %v3447 = vpop.f32.mrf.mxu0
      %v3448 = vadd.f32 %v3335, %v3447
      %3449 = vmatmul.f32.gmra.mxu0 %v3037
      %v3450 = vpop.f32.mrf.mxu0
      %v3451 = vadd.f32 %v3338, %v3450
      %3452 = vmatmul.f32.gmra.mxu0 %v3038
      %v3453 = vpop.f32.mrf.mxu0
      %v3454 = vadd.f32 %v3341, %v3453
      %3455 = vmatmul.f32.gmra.mxu0 %v3039
      %v3456 = vpop.f32.mrf.mxu0
      %v3457 = vadd.f32 %v3344, %v3456
      %3458 = vmatmul.f32.gmra.mxu0 %v3040
      %v3459 = vpop.f32.mrf.mxu0
      %v3460 = vadd.f32 %v3347, %v3459
      %3461 = vmatmul.f32.gmra.mxu0 %v3041
      %v3462 = vpop.f32.mrf.mxu0
      %v3463 = vadd.f32 %v3350, %v3462
      %3464 = vmatmul.f32.gmra.mxu0 %v3042
      %v3465 = vpop.f32.mrf.mxu0
      %v3466 = vadd.f32 %v3353, %v3465
      %3467 = vmatmul.f32.gmra.mxu0 %v3043
      %v3468 = vpop.f32.mrf.mxu0
      %v3469 = vadd.f32 %v3356, %v3468
      %3470 = vmatmul.f32.gmra.mxu0 %v3044
      %v3471 = vpop.f32.mrf.mxu0
      %v3472 = vadd.f32 %v3359, %v3471
      %3473 = vmatmul.f32.gmra.mxu0 %v3045
      %v3474 = vpop.f32.mrf.mxu0
      %v3475 = vadd.f32 %v3362, %v3474
      %3476 = vmatmul.f32.gmra.mxu0 %v3046
      %v3477 = vpop.f32.mrf.mxu0
      %v3478 = vadd.f32 %v3365, %v3477
      %3479 = vmatmul.f32.gmra.mxu0 %v3047
      %v3480 = vpop.f32.mrf.mxu0
      %v3481 = vadd.f32 %v3368, %v3480
      %3482 = vmatmul.f32.gmra.mxu0 %v3048
      %v3483 = vpop.f32.mrf.mxu0
      %v3484 = vadd.f32 %v3371, %v3483
      %3485 = vdwg.mxu0
      %3486 = vmatpush.msra.mxu0 %v3080
      %3487 = vmatpush.msra.mxu0 %v3078
      %3488 = vmatpush.msra.mxu0 %v3076
      %3489 = vmatpush.msra.mxu0 %v3074
      %3490 = vmatpush.msra.mxu0 %v3072
      %3491 = vmatpush.msra.mxu0 %v3070
      %3492 = vmatpush.msra.mxu0 %v3068
      %3493 = vmatpush.msra.mxu0 %v3066
      %3494 = vmatpush.msra.mxu0 %v3064
      %3495 = vmatpush.msra.mxu0 %v3062
      %3496 = vmatpush.msra.mxu0 %v3060
      %3497 = vmatpush.msra.mxu0 %v3058
      %3498 = vmatpush.msra.mxu0 %v3056
      %3499 = vmatpush.msra.mxu0 %v3054
      %3500 = vmatpush.msra.mxu0 %v3052
      %3501 = vmatpush.msra.mxu0 %v3050
      %3502 = vmatmul.f32.gmra.mxu0 %v1213
      %v3503 = vpop.f32.mrf.mxu0
      %v3504 = vadd.f32 %v3146, %v3503
      %3505 = vmatmul.f32.gmra.mxu0 %v1214
      %v3506 = vpop.f32.mrf.mxu0
      %v3507 = vadd.f32 %v3146, %v3506
      %3508 = vmatmul.f32.gmra.mxu0 %v1215
      %v3509 = vpop.f32.mrf.mxu0
      %v3510 = vadd.f32 %v3146, %v3509
      %3511 = vmatmul.f32.gmra.mxu0 %v1216
      %v3512 = vpop.f32.mrf.mxu0
      %v3513 = vadd.f32 %v3146, %v3512
      %3514 = vmatmul.f32.gmra.mxu0 %v1217
      %v3515 = vpop.f32.mrf.mxu0
      %v3516 = vadd.f32 %v3146, %v3515
      %3517 = vmatmul.f32.gmra.mxu0 %v1218
      %v3518 = vpop.f32.mrf.mxu0
      %v3519 = vadd.f32 %v3146, %v3518
      %3520 = vmatmul.f32.gmra.mxu0 %v1219
      %v3521 = vpop.f32.mrf.mxu0
      %v3522 = vadd.f32 %v3146, %v3521
      %3523 = vmatmul.f32.gmra.mxu0 %v1220
      %v3524 = vpop.f32.mrf.mxu0
      %v3525 = vadd.f32 %v3146, %v3524
      %3526 = vmatmul.f32.gmra.mxu0 %v1221
      %v3527 = vpop.f32.mrf.mxu0
      %v3528 = vadd.f32 %v3146, %v3527
      %3529 = vmatmul.f32.gmra.mxu0 %v1222
      %v3530 = vpop.f32.mrf.mxu0
      %v3531 = vadd.f32 %v3146, %v3530
      %3532 = vmatmul.f32.gmra.mxu0 %v1223
      %v3533 = vpop.f32.mrf.mxu0
      %v3534 = vadd.f32 %v3146, %v3533
      %3535 = vmatmul.f32.gmra.mxu0 %v1224
      %v3536 = vpop.f32.mrf.mxu0
      %v3537 = vadd.f32 %v3146, %v3536
      %3538 = vmatmul.f32.gmra.mxu0 %v1225
      %v3539 = vpop.f32.mrf.mxu0
      %v3540 = vadd.f32 %v3146, %v3539
      %3541 = vmatmul.f32.gmra.mxu0 %v1226
      %v3542 = vpop.f32.mrf.mxu0
      %v3543 = vadd.f32 %v3146, %v3542
      %3544 = vmatmul.f32.gmra.mxu0 %v1227
      %v3545 = vpop.f32.mrf.mxu0
      %v3546 = vadd.f32 %v3146, %v3545
      %3547 = vmatmul.f32.gmra.mxu0 %v1228
      %v3548 = vpop.f32.mrf.mxu0
      %v3549 = vadd.f32 %v3146, %v3548
      %3550 = vmatmul.f32.gmra.mxu0 %v1229
      %v3551 = vpop.f32.mrf.mxu0
      %v3552 = vadd.f32 %v3146, %v3551
      %3553 = vmatmul.f32.gmra.mxu0 %v1230
      %v3554 = vpop.f32.mrf.mxu0
      %v3555 = vadd.f32 %v3146, %v3554
      %3556 = vmatmul.f32.gmra.mxu0 %v1231
      %v3557 = vpop.f32.mrf.mxu0
      %v3558 = vadd.f32 %v3146, %v3557
      %3559 = vmatmul.f32.gmra.mxu0 %v1232
      %v3560 = vpop.f32.mrf.mxu0
      %v3561 = vadd.f32 %v3146, %v3560
      %3562 = vmatmul.f32.gmra.mxu0 %v1233
      %v3563 = vpop.f32.mrf.mxu0
      %v3564 = vadd.f32 %v3146, %v3563
      %3565 = vmatmul.f32.gmra.mxu0 %v1234
      %v3566 = vpop.f32.mrf.mxu0
      %v3567 = vadd.f32 %v3146, %v3566
      %3568 = vmatmul.f32.gmra.mxu0 %v1235
      %v3569 = vpop.f32.mrf.mxu0
      %v3570 = vadd.f32 %v3146, %v3569
      %3571 = vmatmul.f32.gmra.mxu0 %v1236
      %v3572 = vpop.f32.mrf.mxu0
      %v3573 = vadd.f32 %v3146, %v3572
      %3574 = vmatmul.f32.gmra.mxu0 %v1237
      %v3575 = vpop.f32.mrf.mxu0
      %v3576 = vadd.f32 %v3146, %v3575
      %3577 = vmatmul.f32.gmra.mxu0 %v1238
      %v3578 = vpop.f32.mrf.mxu0
      %v3579 = vadd.f32 %v3146, %v3578
      %3580 = vmatmul.f32.gmra.mxu0 %v1239
      %v3581 = vpop.f32.mrf.mxu0
      %v3582 = vadd.f32 %v3146, %v3581
      %3583 = vmatmul.f32.gmra.mxu0 %v1240
      %v3584 = vpop.f32.mrf.mxu0
      %v3585 = vadd.f32 %v3146, %v3584
      %3586 = vmatmul.f32.gmra.mxu0 %v1241
      %v3587 = vpop.f32.mrf.mxu0
      %v3588 = vadd.f32 %v3146, %v3587
      %3589 = vmatmul.f32.gmra.mxu0 %v1242
      %v3590 = vpop.f32.mrf.mxu0
      %v3591 = vadd.f32 %v3146, %v3590
      %3592 = vmatmul.f32.gmra.mxu0 %v1243
      %v3593 = vpop.f32.mrf.mxu0
      %v3594 = vadd.f32 %v3146, %v3593
      %3595 = vmatmul.f32.gmra.mxu0 %v1244
      %v3596 = vpop.f32.mrf.mxu0
      %v3597 = vadd.f32 %v3146, %v3596
      %3598 = vdwg.mxu0
      %3599 = vmatpush.msra.mxu0 %v3112
      %3600 = vmatpush.msra.mxu0 %v3110
      %3601 = vmatpush.msra.mxu0 %v3108
      %3602 = vmatpush.msra.mxu0 %v3106
      %3603 = vmatpush.msra.mxu0 %v3104
      %3604 = vmatpush.msra.mxu0 %v3102
      %3605 = vmatpush.msra.mxu0 %v3100
      %3606 = vmatpush.msra.mxu0 %v3098
      %3607 = vmatpush.msra.mxu0 %v3096
      %3608 = vmatpush.msra.mxu0 %v3094
      %3609 = vmatpush.msra.mxu0 %v3092
      %3610 = vmatpush.msra.mxu0 %v3090
      %3611 = vmatpush.msra.mxu0 %v3088
      %3612 = vmatpush.msra.mxu0 %v3086
      %3613 = vmatpush.msra.mxu0 %v3084
      %3614 = vmatpush.msra.mxu0 %v3082
      %3615 = vmatmul.f32.gmra.mxu0 %v2116
      %v3616 = vpop.f32.mrf.mxu0
      %v3617 = vadd.f32 %v3504, %v3616
      %3618 = vmatmul.f32.gmra.mxu0 %v2117
      %v3619 = vpop.f32.mrf.mxu0
      %v3620 = vadd.f32 %v3507, %v3619
      %3621 = vmatmul.f32.gmra.mxu0 %v2118
      %v3622 = vpop.f32.mrf.mxu0
      %v3623 = vadd.f32 %v3510, %v3622
      %3624 = vmatmul.f32.gmra.mxu0 %v2119
      %v3625 = vpop.f32.mrf.mxu0
      %v3626 = vadd.f32 %v3513, %v3625
      %3627 = vmatmul.f32.gmra.mxu0 %v2120
      %v3628 = vpop.f32.mrf.mxu0
      %v3629 = vadd.f32 %v3516, %v3628
      %3630 = vmatmul.f32.gmra.mxu0 %v2121
      %v3631 = vpop.f32.mrf.mxu0
      %v3632 = vadd.f32 %v3519, %v3631
      %3633 = vmatmul.f32.gmra.mxu0 %v2122
      %v3634 = vpop.f32.mrf.mxu0
      %v3635 = vadd.f32 %v3522, %v3634
      %3636 = vmatmul.f32.gmra.mxu0 %v2123
      %v3637 = vpop.f32.mrf.mxu0
      %v3638 = vadd.f32 %v3525, %v3637
      %3639 = vmatmul.f32.gmra.mxu0 %v2124
      %v3640 = vpop.f32.mrf.mxu0
      %v3641 = vadd.f32 %v3528, %v3640
      %3642 = vmatmul.f32.gmra.mxu0 %v2125
      %v3643 = vpop.f32.mrf.mxu0
      %v3644 = vadd.f32 %v3531, %v3643
      %3645 = vmatmul.f32.gmra.mxu0 %v2126
      %v3646 = vpop.f32.mrf.mxu0
      %v3647 = vadd.f32 %v3534, %v3646
      %3648 = vmatmul.f32.gmra.mxu0 %v2127
      %v3649 = vpop.f32.mrf.mxu0
      %v3650 = vadd.f32 %v3537, %v3649
      %3651 = vmatmul.f32.gmra.mxu0 %v2128
      %v3652 = vpop.f32.mrf.mxu0
      %v3653 = vadd.f32 %v3540, %v3652
      %3654 = vmatmul.f32.gmra.mxu0 %v2129
      %v3655 = vpop.f32.mrf.mxu0
      %v3656 = vadd.f32 %v3543, %v3655
      %3657 = vmatmul.f32.gmra.mxu0 %v2130
      %v3658 = vpop.f32.mrf.mxu0
      %v3659 = vadd.f32 %v3546, %v3658
      %3660 = vmatmul.f32.gmra.mxu0 %v2131
      %v3661 = vpop.f32.mrf.mxu0
      %v3662 = vadd.f32 %v3549, %v3661
      %3663 = vmatmul.f32.gmra.mxu0 %v2132
      %v3664 = vpop.f32.mrf.mxu0
      %v3665 = vadd.f32 %v3552, %v3664
      %3666 = vmatmul.f32.gmra.mxu0 %v2133
      %v3667 = vpop.f32.mrf.mxu0
      %v3668 = vadd.f32 %v3555, %v3667
      %3669 = vmatmul.f32.gmra.mxu0 %v2134
      %v3670 = vpop.f32.mrf.mxu0
      %v3671 = vadd.f32 %v3558, %v3670
      %3672 = vmatmul.f32.gmra.mxu0 %v2135
      %v3673 = vpop.f32.mrf.mxu0
      %v3674 = vadd.f32 %v3561, %v3673
      %3675 = vmatmul.f32.gmra.mxu0 %v2136
      %v3676 = vpop.f32.mrf.mxu0
      %v3677 = vadd.f32 %v3564, %v3676
      %3678 = vmatmul.f32.gmra.mxu0 %v2137
      %v3679 = vpop.f32.mrf.mxu0
      %v3680 = vadd.f32 %v3567, %v3679
      %3681 = vmatmul.f32.gmra.mxu0 %v2138
      %v3682 = vpop.f32.mrf.mxu0
      %v3683 = vadd.f32 %v3570, %v3682
      %3684 = vmatmul.f32.gmra.mxu0 %v2139
      %v3685 = vpop.f32.mrf.mxu0
      %v3686 = vadd.f32 %v3573, %v3685
      %3687 = vmatmul.f32.gmra.mxu0 %v2140
      %v3688 = vpop.f32.mrf.mxu0
      %v3689 = vadd.f32 %v3576, %v3688
      %3690 = vmatmul.f32.gmra.mxu0 %v2141
      %v3691 = vpop.f32.mrf.mxu0
      %v3692 = vadd.f32 %v3579, %v3691
      %3693 = vmatmul.f32.gmra.mxu0 %v2142
      %v3694 = vpop.f32.mrf.mxu0
      %v3695 = vadd.f32 %v3582, %v3694
      %3696 = vmatmul.f32.gmra.mxu0 %v2143
      %v3697 = vpop.f32.mrf.mxu0
      %v3698 = vadd.f32 %v3585, %v3697
      %3699 = vmatmul.f32.gmra.mxu0 %v2144
      %v3700 = vpop.f32.mrf.mxu0
      %v3701 = vadd.f32 %v3588, %v3700
      %3702 = vmatmul.f32.gmra.mxu0 %v2145
      %v3703 = vpop.f32.mrf.mxu0
      %v3704 = vadd.f32 %v3591, %v3703
      %3705 = vmatmul.f32.gmra.mxu0 %v2146
      %v3706 = vpop.f32.mrf.mxu0
      %v3707 = vadd.f32 %v3594, %v3706
      %3708 = vmatmul.f32.gmra.mxu0 %v2147
      %v3709 = vpop.f32.mrf.mxu0
      %v3710 = vadd.f32 %v3597, %v3709
      %3711 = vdwg.mxu0
      %3712 = vmatpush.msra.mxu0 %v3144
      %3713 = vmatpush.msra.mxu0 %v3142
      %3714 = vmatpush.msra.mxu0 %v3140
      %3715 = vmatpush.msra.mxu0 %v3138
      %3716 = vmatpush.msra.mxu0 %v3136
      %3717 = vmatpush.msra.mxu0 %v3134
      %3718 = vmatpush.msra.mxu0 %v3132
      %3719 = vmatpush.msra.mxu0 %v3130
      %3720 = vmatpush.msra.mxu0 %v3128
      %3721 = vmatpush.msra.mxu0 %v3126
      %3722 = vmatpush.msra.mxu0 %v3124
      %3723 = vmatpush.msra.mxu0 %v3122
      %3724 = vmatpush.msra.mxu0 %v3120
      %3725 = vmatpush.msra.mxu0 %v3118
      %3726 = vmatpush.msra.mxu0 %v3116
      %3727 = vmatpush.msra.mxu0 %v3114
      %3728 = vmatmul.f32.gmra.mxu0 %v3017
      %v3729 = vpop.f32.mrf.mxu0
      %v3730 = vadd.f32 %v3617, %v3729
      %3731 = vmatmul.f32.gmra.mxu0 %v3018
      %v3732 = vpop.f32.mrf.mxu0
      %v3733 = vadd.f32 %v3620, %v3732
      %3734 = vmatmul.f32.gmra.mxu0 %v3019
      %v3735 = vpop.f32.mrf.mxu0
      %v3736 = vadd.f32 %v3623, %v3735
      %3737 = vmatmul.f32.gmra.mxu0 %v3020
      %v3738 = vpop.f32.mrf.mxu0
      %v3739 = vadd.f32 %v3626, %v3738
      %3740 = vmatmul.f32.gmra.mxu0 %v3021
      %v3741 = vpop.f32.mrf.mxu0
      %v3742 = vadd.f32 %v3629, %v3741
      %3743 = vmatmul.f32.gmra.mxu0 %v3022
      %v3744 = vpop.f32.mrf.mxu0
      %v3745 = vadd.f32 %v3632, %v3744
      %3746 = vmatmul.f32.gmra.mxu0 %v3023
      %v3747 = vpop.f32.mrf.mxu0
      %v3748 = vadd.f32 %v3635, %v3747
      %3749 = vmatmul.f32.gmra.mxu0 %v3024
      %v3750 = vpop.f32.mrf.mxu0
      %v3751 = vadd.f32 %v3638, %v3750
      %3752 = vmatmul.f32.gmra.mxu0 %v3025
      %v3753 = vpop.f32.mrf.mxu0
      %v3754 = vadd.f32 %v3641, %v3753
      %3755 = vmatmul.f32.gmra.mxu0 %v3026
      %v3756 = vpop.f32.mrf.mxu0
      %v3757 = vadd.f32 %v3644, %v3756
      %3758 = vmatmul.f32.gmra.mxu0 %v3027
      %v3759 = vpop.f32.mrf.mxu0
      %v3760 = vadd.f32 %v3647, %v3759
      %3761 = vmatmul.f32.gmra.mxu0 %v3028
      %v3762 = vpop.f32.mrf.mxu0
      %v3763 = vadd.f32 %v3650, %v3762
      %3764 = vmatmul.f32.gmra.mxu0 %v3029
      %v3765 = vpop.f32.mrf.mxu0
      %v3766 = vadd.f32 %v3653, %v3765
      %3767 = vmatmul.f32.gmra.mxu0 %v3030
      %v3768 = vpop.f32.mrf.mxu0
      %v3769 = vadd.f32 %v3656, %v3768
      %3770 = vmatmul.f32.gmra.mxu0 %v3031
      %v3771 = vpop.f32.mrf.mxu0
      %v3772 = vadd.f32 %v3659, %v3771
      %3773 = vmatmul.f32.gmra.mxu0 %v3032
      %v3774 = vpop.f32.mrf.mxu0
      %v3775 = vadd.f32 %v3662, %v3774
      %3776 = vmatmul.f32.gmra.mxu0 %v3033
      %v3777 = vpop.f32.mrf.mxu0
      %v3778 = vadd.f32 %v3665, %v3777
      %3779 = vmatmul.f32.gmra.mxu0 %v3034
      %v3780 = vpop.f32.mrf.mxu0
      %v3781 = vadd.f32 %v3668, %v3780
      %3782 = vmatmul.f32.gmra.mxu0 %v3035
      %v3783 = vpop.f32.mrf.mxu0
      %v3784 = vadd.f32 %v3671, %v3783
      %3785 = vmatmul.f32.gmra.mxu0 %v3036
      %v3786 = vpop.f32.mrf.mxu0
      %v3787 = vadd.f32 %v3674, %v3786
      %3788 = vmatmul.f32.gmra.mxu0 %v3037
      %v3789 = vpop.f32.mrf.mxu0
      %v3790 = vadd.f32 %v3677, %v3789
      %3791 = vmatmul.f32.gmra.mxu0 %v3038
      %v3792 = vpop.f32.mrf.mxu0
      %v3793 = vadd.f32 %v3680, %v3792
      %3794 = vmatmul.f32.gmra.mxu0 %v3039
      %v3795 = vpop.f32.mrf.mxu0
      %v3796 = vadd.f32 %v3683, %v3795
      %3797 = vmatmul.f32.gmra.mxu0 %v3040
      %v3798 = vpop.f32.mrf.mxu0
      %v3799 = vadd.f32 %v3686, %v3798
      %3800 = vmatmul.f32.gmra.mxu0 %v3041
      %v3801 = vpop.f32.mrf.mxu0
      %v3802 = vadd.f32 %v3689, %v3801
      %3803 = vmatmul.f32.gmra.mxu0 %v3042
      %v3804 = vpop.f32.mrf.mxu0
      %v3805 = vadd.f32 %v3692, %v3804
      %3806 = vmatmul.f32.gmra.mxu0 %v3043
      %v3807 = vpop.f32.mrf.mxu0
      %v3808 = vadd.f32 %v3695, %v3807
      %3809 = vmatmul.f32.gmra.mxu0 %v3044
      %v3810 = vpop.f32.mrf.mxu0
      %v3811 = vadd.f32 %v3698, %v3810
      %3812 = vmatmul.f32.gmra.mxu0 %v3045
      %v3813 = vpop.f32.mrf.mxu0
      %v3814 = vadd.f32 %v3701, %v3813
      %3815 = vmatmul.f32.gmra.mxu0 %v3046
      %v3816 = vpop.f32.mrf.mxu0
      %v3817 = vadd.f32 %v3704, %v3816
      %3818 = vmatmul.f32.gmra.mxu0 %v3047
      %v3819 = vpop.f32.mrf.mxu0
      %v3820 = vadd.f32 %v3707, %v3819
      %3821 = vmatmul.f32.gmra.mxu0 %v3048
      %v3822 = vpop.f32.mrf.mxu0
      %v3823 = vadd.f32 %v3710, %v3822
      %3824 = vdwg.mxu0
      %3825 = vst [vmem:[%s255] sm:$0xff] %v3391
      %vm3826 = vcmask 97280
      %3827 = vst.msk [vmem:[%s255 + $0x8] sm:$0xff] %vm3826, %v3730
      %3828 = vst [vmem:[%s255 + $0x10] sm:$0xff] %v3394
      %3829 = vst.msk [vmem:[%s255 + $0x18] sm:$0xff] %vm3826, %v3733
      %3830 = vst [vmem:[%s255 + $0x20] sm:$0xff] %v3397
      %3831 = vst.msk [vmem:[%s255 + $0x28] sm:$0xff] %vm3826, %v3736
      %3832 = vst [vmem:[%s255 + $0x30] sm:$0xff] %v3400
      %3833 = vst.msk [vmem:[%s255 + $0x38] sm:$0xff] %vm3826, %v3739
      %3834 = vst [vmem:[%s255 + $0x40] sm:$0xff] %v3403
      %3835 = vst.msk [vmem:[%s255 + $0x48] sm:$0xff] %vm3826, %v3742
      %3836 = vst [vmem:[%s255 + $0x50] sm:$0xff] %v3406
      %3837 = vst.msk [vmem:[%s255 + $0x58] sm:$0xff] %vm3826, %v3745
      %3838 = vst [vmem:[%s255 + $0x60] sm:$0xff] %v3409
      %3839 = vst.msk [vmem:[%s255 + $0x68] sm:$0xff] %vm3826, %v3748
      %3840 = vst [vmem:[%s255 + $0x70] sm:$0xff] %v3412
      %3841 = vst.msk [vmem:[%s255 + $0x78] sm:$0xff] %vm3826, %v3751
      %3842 = vst [vmem:[%s255 + $0x80] sm:$0xff] %v3415
      %3843 = vst.msk [vmem:[%s255 + $0x88] sm:$0xff] %vm3826, %v3754
      %3844 = vst [vmem:[%s255 + $0x90] sm:$0xff] %v3418
      %3845 = vst.msk [vmem:[%s255 + $0x98] sm:$0xff] %vm3826, %v3757
      %3846 = vst [vmem:[%s255 + $0xa0] sm:$0xff] %v3421
      %3847 = vst.msk [vmem:[%s255 + $0xa8] sm:$0xff] %vm3826, %v3760
      %3848 = vst [vmem:[%s255 + $0xb0] sm:$0xff] %v3424
      %3849 = vst.msk [vmem:[%s255 + $0xb8] sm:$0xff] %vm3826, %v3763
      %3850 = vst [vmem:[%s255 + $0xc0] sm:$0xff] %v3427
      %3851 = vst.msk [vmem:[%s255 + $0xc8] sm:$0xff] %vm3826, %v3766
      %3852 = vst [vmem:[%s255 + $0xd0] sm:$0xff] %v3430
      %3853 = vst.msk [vmem:[%s255 + $0xd8] sm:$0xff] %vm3826, %v3769
      %3854 = vst [vmem:[%s255 + $0xe0] sm:$0xff] %v3433
      %3855 = vst.msk [vmem:[%s255 + $0xe8] sm:$0xff] %vm3826, %v3772
      %3856 = vst [vmem:[%s255 + $0xf0] sm:$0xff] %v3436
      %3857 = vst.msk [vmem:[%s255 + $0xf8] sm:$0xff] %vm3826, %v3775
      %3858 = vst [vmem:[%s255 + $0x100] sm:$0xff] %v3439
      %3859 = vst.msk [vmem:[%s255 + $0x108] sm:$0xff] %vm3826, %v3778
      %3860 = vst [vmem:[%s255 + $0x110] sm:$0xff] %v3442
      %3861 = vst.msk [vmem:[%s255 + $0x118] sm:$0xff] %vm3826, %v3781
      %3862 = vst [vmem:[%s255 + $0x120] sm:$0xff] %v3445
      %3863 = vst.msk [vmem:[%s255 + $0x128] sm:$0xff] %vm3826, %v3784
      %3864 = vst [vmem:[%s255 + $0x130] sm:$0xff] %v3448
      %3865 = vst.msk [vmem:[%s255 + $0x138] sm:$0xff] %vm3826, %v3787
      %3866 = vst [vmem:[%s255 + $0x140] sm:$0xff] %v3451
      %3867 = vst.msk [vmem:[%s255 + $0x148] sm:$0xff] %vm3826, %v3790
      %3868 = vst [vmem:[%s255 + $0x150] sm:$0xff] %v3454
      %3869 = vst.msk [vmem:[%s255 + $0x158] sm:$0xff] %vm3826, %v3793
      %3870 = vst [vmem:[%s255 + $0x160] sm:$0xff] %v3457
      %3871 = vst.msk [vmem:[%s255 + $0x168] sm:$0xff] %vm3826, %v3796
      %3872 = vst [vmem:[%s255 + $0x170] sm:$0xff] %v3460
      %3873 = vst.msk [vmem:[%s255 + $0x178] sm:$0xff] %vm3826, %v3799
      %3874 = vst [vmem:[%s255 + $0x180] sm:$0xff] %v3463
      %3875 = vst.msk [vmem:[%s255 + $0x188] sm:$0xff] %vm3826, %v3802
      %3876 = vst [vmem:[%s255 + $0x190] sm:$0xff] %v3466
      %3877 = vst.msk [vmem:[%s255 + $0x198] sm:$0xff] %vm3826, %v3805
      %3878 = vst [vmem:[%s255 + $0x1a0] sm:$0xff] %v3469
      %3879 = vst.msk [vmem:[%s255 + $0x1a8] sm:$0xff] %vm3826, %v3808
      %3880 = vst [vmem:[%s255 + $0x1b0] sm:$0xff] %v3472
      %3881 = vst.msk [vmem:[%s255 + $0x1b8] sm:$0xff] %vm3826, %v3811
      %3882 = vst [vmem:[%s255 + $0x1c0] sm:$0xff] %v3475
      %3883 = vst.msk [vmem:[%s255 + $0x1c8] sm:$0xff] %vm3826, %v3814
      %3884 = vst [vmem:[%s255 + $0x1d0] sm:$0xff] %v3478
      %3885 = vst.msk [vmem:[%s255 + $0x1d8] sm:$0xff] %vm3826, %v3817
      %3886 = vst [vmem:[%s255 + $0x1e0] sm:$0xff] %v3481
      %3887 = vst.msk [vmem:[%s255 + $0x1e8] sm:$0xff] %vm3826, %v3820
      %3888 = vst [vmem:[%s255 + $0x1f0] sm:$0xff] %v3484
      %3889 = vst.msk [vmem:[%s255 + $0x1f8] sm:$0xff] %vm3826, %v3823
      %s3890 = smul.u32 32, %s17
      %p3891 = scmp.lt.s32.totalorder %s3890, 63
      %s3892 = scalar_select %p3891, %s3890, 63
      %s3893 = smul.addr %s3892, 2
      %s3894 = smul.addr %s3893, 8
      %s3895 = scalar_lea.vmem %s6, %s3894
      // Predicated region
      $region45: #{tpu_custom_call.1} parent=43 // pred_check
        %p3896 = pneg %p166
      $region46: #{tpu_custom_call.1} parent=43 // pred_check_branch
        %3898 = sbr.rel (%p3896) target = $region48
      $region47: #{tpu_custom_call.1} parent=43 // pred_region
        %s3899 = smul.u32 32, %s17
      $region48: #{tpu_custom_call.1} parent=43 // pred_fallthru
        _
    $region44: #{tpu_custom_call.1} parent=5 // pred_fallthru
      _
    %p3900 = scmp.le.s32.totalorder 2, %s12
    // Predicated region
    $region49: #{tpu_custom_call.1} parent=5 // pred_check
      %p3901 = pneg %p3900
    $region50: #{tpu_custom_call.1} parent=5 // pred_check_branch
      %3903 = sbr.rel (%p3901) target = $region52
    $region51: #{tpu_custom_call.1} parent=5 // pred_region
      %s3904 = ssub.s32 %s12, 2
      // Predicated region
      $region53: #{tpu_custom_call.1} parent=51 // pred_check
        %p3905 = pneg %p172
      $region54: #{tpu_custom_call.1} parent=51 // pred_check_branch
        %3907 = sbr.rel (%p3905) target = $region56
      $region55: #{tpu_custom_call.1} parent=51 // pred_region
        %s3908 = smul.u32 32, %s18
        %p3909 = scmp.lt.s32.totalorder %s3908, 63
        %s3910 = scalar_select %p3909, %s3908, 63
        %s3911 = smul.addr %s3910, 2
        %s3912 = smul.addr %s3911, 8
        %s3913 = scalar_lea.vmem %s6, %s3912
      $region56: #{tpu_custom_call.1} parent=51 // pred_fallthru
        _
    $region52: #{tpu_custom_call.1} parent=5 // pred_fallthru
      _
  $region6: #{tpu_custom_call.1} parent=0 // loop_footer
    %s16 = sadd.s32 1, %s12
  $region7: #{tpu_custom_call.1} parent=0 // loop_footer_branch
    %11 = sbr.rel target = $region3
  $region8: #{tpu_custom_call.1} parent=0 // loop_exit
    _

</llo_original>
